<compile_context>
chip_gen: v7x
topology: tpu7x:2x2x1
jax: 0.10.0
libtpu: 0.0.40
codegen_flags: <defaults>
</compile_context>

<pallas_src>
import math

import numpy as np
import jax
import jax.numpy as jnp
from jax import lax
from jax.experimental import pallas as pl
from jax.experimental.pallas import tpu as pltpu

NEG_SLOPE = 0.01   # nn.LeakyReLU default (MONAI Act.LEAKYRELU with default args)
EPS = 1e-5         # nn.InstanceNorm2d default eps, affine=False
K = 3              # kernel_size
PAD = 1            # same_padding(3, dilation=1)


def conv_out_size(size, k, s, p):
    return (size + 2 * p - k) // s + 1


# ---------------------------------------------------------------- host-side lowering

def make_lowered_conv(w_conv, hi, wi, stride):
    """Lower Conv2d(k=3, stride, pad=1, no bias) to one dense matmul.

    w_conv: [Co, Ci, K, K] (PyTorch layout).
    Returns (W_eff [Ci*hi*wi, Co*ho*wo], ho, wo) such that flat_out = flat_in @ W_eff,
    with both flattenings in PyTorch NCHW (c, h, w) order.  Each (si, so) pair is hit by at
    most one tap, so W_eff entries are plain copies of conv weights (no extra rounding).
    """
    co, ci, k, _ = w_conv.shape
    ho = conv_out_size(hi, k, stride, PAD)
    wo = conv_out_size(wi, k, stride, PAD)
    w_eff = np.zeros((ci, hi * wi, co, ho * wo), np.float32)
    w_np = np.asarray(w_conv, np.float32)
    for ki in range(k):
        for kj in range(k):
            tap = w_np[:, :, ki, kj].T                       # [Ci, Co]
            for a in range(ho):
                ih = stride * a + ki - PAD
                if not (0 <= ih < hi):
                    continue
                for b in range(wo):
                    iw = stride * b + kj - PAD
                    if 0 <= iw < wi:                          # padding taps contribute 0
                        w_eff[:, ih * wi + iw, :, a * wo + b] += tap
    return w_eff.reshape(ci * hi * wi, co * ho * wo), ho, wo


def make_instance_norm_mats(cout, s_out):
    """Constant matrices for per-(sample, channel) InstanceNorm stats on a [B, cout*s_out] slab.

    i_mean  [cout*s_out, cout]: y @ i_mean  -> per-channel spatial mean   (scaled by 1/s_out)
    i_bcast [cout, cout*s_out]: m @ i_bcast -> broadcast a per-channel scalar over its lanes
    """
    i_mean = np.zeros((cout * s_out, cout), np.float32)
    i_bcast = np.zeros((cout, cout * s_out), np.float32)
    for c in range(cout):
        i_mean[c * s_out:(c + 1) * s_out, c] = 1.0 / s_out
        i_bcast[c, c * s_out:(c + 1) * s_out] = 1.0
    return i_mean, i_bcast


# ---------------------------------------------------------------- fused kernel

def _make_kernel(n_layers):
    def kernel(*refs):
        x_ref = refs[0]
        layer_refs = refs[1:1 + 3 * n_layers]                 # (w_eff, i_mean, i_bcast) per layer
        wl_ref, bl_ref = refs[1 + 3 * n_layers:3 + 3 * n_layers]
        o_ref = refs[3 + 3 * n_layers]

        # activation layout: [batch rows (M / sublanes), (c, h, w)-flattened features (lanes)]
        h = x_ref[0]                                          # [B_blk, Cin*S0] bf16

        for li in range(n_layers):
            w_ref, im_ref, ib_ref = layer_refs[3 * li:3 * li + 3]
            # Conv (bias dropped: cancelled exactly by InstanceNorm mean subtraction).
            y = jnp.dot(h, w_ref[...], preferred_element_type=jnp.float32)       # [B, C*S]
            # InstanceNorm2d (affine=False), two-pass stats via constant indicator matmuls.
            mu = jnp.dot(y, im_ref[...], preferred_element_type=jnp.float32)     # [B, C]
            d = y - jnp.dot(mu, ib_ref[...], preferred_element_type=jnp.float32)
            var = jnp.dot(d * d, im_ref[...], preferred_element_type=jnp.float32)
            inv = lax.rsqrt(var + EPS)                                           # EUP
            xn = d * jnp.dot(inv, ib_ref[...], preferred_element_type=jnp.float32)
            # LeakyReLU(0.01), then bf16 for the next MXU matmul.
            h = jnp.where(xn >= 0, xn, NEG_SLOPE * xn).astype(jnp.bfloat16)      # [B, C*S]

        # Head: Linear on the (c, h, w)-flattened features + ReLU + mean over latent dim.
        z = jnp.dot(h, wl_ref[...], preferred_element_type=jnp.float32) + bl_ref[...]
        z = jnp.maximum(z, 0.0)
        o_ref[0] = jnp.mean(z, axis=1, keepdims=True)                            # [B_blk, 1]

    return kernel


# ---------------------------------------------------------------- params

def init_params(key, in_channels, hw, channels, strides, latent):
    """PyTorch-layout f32 parameters (Conv2d: [Co, Ci, kh, kw]; Linear: [latent, features])."""
    params = {"convs": []}
    cin = in_channels
    h = w = hw
    for c, s in zip(channels, strides):
        key, k1, k2 = jax.random.split(key, 3)
        fan_in = K * K * cin
        wgt = jax.random.normal(k1, (c, cin, K, K), jnp.float32) / math.sqrt(fan_in)
        bia = jax.random.normal(k2, (c,), jnp.float32) * 0.01
        params["convs"].append((wgt, bia))
        cin = c
        h = conv_out_size(h, K, s, PAD)
        w = conv_out_size(w, K, s, PAD)
    linear_size = h * w * cin
    key, k1, k2 = jax.random.split(key, 3)
    params["lin_w"] = jax.random.normal(k1, (latent, linear_size), jnp.float32) / math.sqrt(linear_size)
    params["lin_b"] = jax.random.normal(k2, (latent,), jnp.float32) * 0.01
    return params


def pack_params(params, in_channels, hw, strides, latent):
    """Convert PyTorch-layout params to the fused-kernel operand layout.

    NOTE: if loading real PyTorch Discriminator weights, apply the same transforms:
      conv   [Co, Ci, kh, kw] -> dense lowered matrix [Ci*S_in, Co*S_out] (make_lowered_conv)
      linear [latent, C*H*W]  -> transposed            [C*H*W, latent]
    Conv biases are intentionally dropped (no-op before InstanceNorm2d(affine=False)).
    """
    ops = {"layers": []}
    cin = in_channels
    h = w = hw
    for (wgt, _bia), s in zip(params["convs"], strides):
        w_eff, ho, wo = make_lowered_conv(wgt, h, w, s)
        cout = wgt.shape[0]
        i_mean, i_bcast = make_instance_norm_mats(cout, ho * wo)
        ops["layers"].append(dict(
            w=jnp.asarray(w_eff, jnp.bfloat16),                 # [Ci*S_in, Co*S_out]
            im=jnp.asarray(i_mean, jnp.float32),                # [Co*S_out, Co]
            ib=jnp.asarray(i_bcast, jnp.float32),               # [Co, Co*S_out]
        ))
        cin, h, w = cout, ho, wo
    ops["wl"] = jnp.asarray(params["lin_w"].T, jnp.bfloat16)    # [C*S_last, latent]
    ops["bl"] = jnp.asarray(params["lin_b"].reshape(1, latent), jnp.float32)
    ops["latent"] = latent
    ops["in_features"] = in_channels * hw * hw
    return ops


# ---------------------------------------------------------------- forward

def discriminator_forward(x_nchw, ops, *, num_batch_blocks=None):
    b, cin, hh, ww = x_nchw.shape
    f0 = cin * hh * ww
    assert f0 == ops["in_features"]

    if num_batch_blocks is None:
        # Default: 2 "parallel" grid steps = one per v7x TensorCore (full dual-TC use).
        # On single-TC chips (v5e / v6e) pass num_batch_blocks=1 to save one grid step.
        num_batch_blocks = 2 if b >= 2 else 1
    b_blk = -(-b // num_batch_blocks)                 # cdiv
    b_pad = num_batch_blocks * b_blk

    # bf16 input, NCHW .view(B, -1) flattening (matches PyTorch), batch packed per block.
    x2d = x_nchw.reshape(b, f0).astype(jnp.bfloat16)
    if b_pad != b:
        x2d = jnp.pad(x2d, ((0, b_pad - b), (0, 0)))  # zero rows are harmless (finite, sliced off)
    x3d = x2d.reshape(num_batch_blocks, b_blk, f0)

    layers = ops["layers"]
    kernel = _make_kernel(len(layers))

    in_specs = [pl.BlockSpec((1, b_blk, f0), lambda i: (i, 0, 0))]
    operands = [x3d]
    for l in layers:
        in_specs += [
            pl.BlockSpec(l["w"].shape, lambda i: (0, 0)),
            pl.BlockSpec(l["im"].shape, lambda i: (0, 0)),
            pl.BlockSpec(l["ib"].shape, lambda i: (0, 0)),
        ]
        operands += [l["w"], l["im"], l["ib"]]
    in_specs += [
        pl.BlockSpec(ops["wl"].shape, lambda i: (0, 0)),
        pl.BlockSpec(ops["bl"].shape, lambda i: (0, 0)),
    ]
    operands += [ops["wl"], ops["bl"]]

    out = pl.pallas_call(
        kernel,
        out_shape=jax.ShapeDtypeStruct((num_batch_blocks, b_blk, 1), jnp.float32),
        grid_spec=pltpu.PrefetchScalarGridSpec(
            num_scalar_prefetch=0,
            grid=(num_batch_blocks,),
            in_specs=in_specs,
            out_specs=pl.BlockSpec((1, b_blk, 1), lambda i: (i, 0, 0)),
        ),
        compiler_params=pltpu.CompilerParams(
            dimension_semantics=("parallel",),        # shard batch blocks over v7x's 2 TCs
            vmem_limit_bytes=32 * 1024 * 1024,        # working set ~3 MiB double-buffered
        ),
    )(*operands)
    return out.reshape(b_pad)[:b]


# ---------------------------------------------------------------- pure-JAX reference

def reference_forward(x_nchw, params, strides):
    h = x_nchw.astype(jnp.float32)
    for (wgt, bia), s in zip(params["convs"], strides):
        h = lax.conv_general_dilated(
            h, wgt, window_strides=(s, s), padding=((PAD, PAD), (PAD, PAD)),
            dimension_numbers=("NCHW", "OIHW", "NCHW"))
        h = h + bia.reshape(1, -1, 1, 1)              # kept here to prove the kernel's bias-drop
        mu = jnp.mean(h, axis=(2, 3), keepdims=True)
        var = jnp.mean((h - mu) ** 2, axis=(2, 3), keepdims=True)
        h = (h - mu) * lax.rsqrt(var + EPS)
        h = jnp.where(h >= 0, h, NEG_SLOPE * h)
    flat = h.reshape(h.shape[0], -1)                  # NCHW flatten: (c, h, w)
    z = flat @ params["lin_w"].T + params["lin_b"]
    z = jnp.maximum(z, 0.0)
    return jnp.mean(z, axis=1)


if __name__ == "__main__":
    # Discriminator(spatial_dims=2, in_shape=(4,16,16), out_channels=1,
    #               latent_size=32, channels=(8,16), strides=(2,2), kernel_size=3)
    B, CIN, HW = 2, 4, 16
    CHANNELS = (8, 16)
    STRIDES = (2, 2)
    LATENT = 32

    key = jax.random.PRNGKey(0)
    key, kx, kp = jax.random.split(key, 3)
    x = jax.random.normal(kx, (B, CIN, HW, HW), jnp.float32)
    params = init_params(kp, CIN, HW, CHANNELS, STRIDES, LATENT)
    ops = pack_params(params, CIN, HW, STRIDES, LATENT)

    ref = jax.block_until_ready(reference_forward(x, params, STRIDES))

    # Default grid: 2 parallel batch blocks (v7x-optimal; near-optimal on v5e/v6e).
    fwd2 = jax.jit(lambda xx: discriminator_forward(xx, ops))
    out2 = jax.block_until_ready(fwd2(x))
    assert out2.shape == (B,), out2.shape
    assert bool(jnp.all(jnp.isfinite(out2)))
    assert bool(jnp.allclose(out2, ref, atol=5e-2, rtol=5e-2)), (out2, ref)

    # Single-step grid (whole batch in one block) — the v5e/v6e-optimal configuration.
    fwd1 = jax.jit(lambda xx: discriminator_forward(xx, ops, num_batch_blocks=1))
    out1 = jax.block_until_ready(fwd1(x))
    assert out1.shape == (B,), out1.shape
    assert bool(jnp.all(jnp.isfinite(out1)))
    assert bool(jnp.allclose(out1, ref, atol=5e-2, rtol=5e-2)), (out1, ref)

    print("KERNEL_OK")
</pallas_src>

<mosaic_0001>
module attributes {stable_mosaic.version = 11 : i64} {
  func.func @kernel(%arg0: i32, %arg1: memref<1x1x1024xbf16, #tpu.memory_space<vmem>>, %arg2: memref<1024x512xbf16, #tpu.memory_space<vmem>>, %arg3: memref<512x8xf32, #tpu.memory_space<vmem>>, %arg4: memref<8x512xf32, #tpu.memory_space<vmem>>, %arg5: memref<512x256xbf16, #tpu.memory_space<vmem>>, %arg6: memref<256x16xf32, #tpu.memory_space<vmem>>, %arg7: memref<16x256xf32, #tpu.memory_space<vmem>>, %arg8: memref<256x32xbf16, #tpu.memory_space<vmem>>, %arg9: memref<1x32xf32, #tpu.memory_space<vmem>>, %arg10: memref<1x1x1xf32, #tpu.memory_space<vmem>>) attributes {dimension_semantics = [#tpu.dimension_semantics<parallel>], iteration_bounds = array<i64: 2>, scalar_prefetch = 0 : i64, scratch_operands = 0 : i64, tpu.core_type = #tpu.core_type<tc>, window_params = [{transform_indices = @transform_0, window_bounds = array<i64: 1, 1, 1024>}, {pipeline_mode = #tpu.pipeline_mode<synchronous>, transform_indices = @transform_1, window_bounds = array<i64: 1024, 512>}, {pipeline_mode = #tpu.pipeline_mode<synchronous>, transform_indices = @transform_2, window_bounds = array<i64: 512, 8>}, {pipeline_mode = #tpu.pipeline_mode<synchronous>, transform_indices = @transform_3, window_bounds = array<i64: 8, 512>}, {pipeline_mode = #tpu.pipeline_mode<synchronous>, transform_indices = @transform_4, window_bounds = array<i64: 512, 256>}, {pipeline_mode = #tpu.pipeline_mode<synchronous>, transform_indices = @transform_5, window_bounds = array<i64: 256, 16>}, {pipeline_mode = #tpu.pipeline_mode<synchronous>, transform_indices = @transform_6, window_bounds = array<i64: 16, 256>}, {pipeline_mode = #tpu.pipeline_mode<synchronous>, transform_indices = @transform_7, window_bounds = array<i64: 256, 32>}, {pipeline_mode = #tpu.pipeline_mode<synchronous>, transform_indices = @transform_8, window_bounds = array<i64: 1, 32>}, {transform_indices = @transform_9, window_bounds = array<i64: 1, 1, 1>}]} {
    %c0 = arith.constant 0 : index
    %c0_0 = arith.constant 0 : index
    %c0_1 = arith.constant 0 : index
    %0 = vector.load %arg1[%c0, %c0_0, %c0_1] : memref<1x1x1024xbf16, #tpu.memory_space<vmem>>, vector<1x1x1024xbf16>
    %1 = vector.shape_cast %0 : vector<1x1x1024xbf16> to vector<1x1024xbf16>
    %c0_2 = arith.constant 0 : index
    %c0_3 = arith.constant 0 : index
    %2 = vector.load %arg2[%c0_2, %c0_3] : memref<1024x512xbf16, #tpu.memory_space<vmem>>, vector<1024x512xbf16>
    %cst = arith.constant dense<0.000000e+00> : vector<1x512xf32>
    %3 = tpu.matmul %1, %2, %cst {dimension_numbers = #tpu.dot_dimension_numbers<[1], [0], [0], [1], [0, 0, 1, 1], [], []>} : vector<1x1024xbf16>, vector<1024x512xbf16>, vector<1x512xf32> -> vector<1x512xf32>
    %c0_4 = arith.constant 0 : index
    %c0_5 = arith.constant 0 : index
    %4 = vector.load %arg3[%c0_4, %c0_5] : memref<512x8xf32, #tpu.memory_space<vmem>>, vector<512x8xf32>
    %cst_6 = arith.constant dense<0.000000e+00> : vector<1x8xf32>
    %5 = tpu.matmul %3, %4, %cst_6 {dimension_numbers = #tpu.dot_dimension_numbers<[1], [0], [0], [1], [0, 0, 1, 1], [], []>} : vector<1x512xf32>, vector<512x8xf32>, vector<1x8xf32> -> vector<1x8xf32>
    %c0_7 = arith.constant 0 : index
    %c0_8 = arith.constant 0 : index
    %6 = vector.load %arg4[%c0_7, %c0_8] : memref<8x512xf32, #tpu.memory_space<vmem>>, vector<8x512xf32>
    %cst_9 = arith.constant dense<0.000000e+00> : vector<1x512xf32>
    %7 = tpu.matmul %5, %6, %cst_9 {dimension_numbers = #tpu.dot_dimension_numbers<[1], [0], [0], [1], [0, 0, 1, 1], [], []>} : vector<1x8xf32>, vector<8x512xf32>, vector<1x512xf32> -> vector<1x512xf32>
    %8 = arith.subf %3, %7 : vector<1x512xf32>
    %9 = arith.mulf %8, %8 : vector<1x512xf32>
    %c0_10 = arith.constant 0 : index
    %c0_11 = arith.constant 0 : index
    %10 = vector.load %arg3[%c0_10, %c0_11] : memref<512x8xf32, #tpu.memory_space<vmem>>, vector<512x8xf32>
    %cst_12 = arith.constant dense<0.000000e+00> : vector<1x8xf32>
    %11 = tpu.matmul %9, %10, %cst_12 {dimension_numbers = #tpu.dot_dimension_numbers<[1], [0], [0], [1], [0, 0, 1, 1], [], []>} : vector<1x512xf32>, vector<512x8xf32>, vector<1x8xf32> -> vector<1x8xf32>
    %cst_13 = arith.constant 9.99999974E-6 : f32
    %12 = vector.broadcast %cst_13 : f32 to vector<1x8xf32>
    %13 = arith.addf %11, %12 : vector<1x8xf32>
    %14 = math.rsqrt %13 : vector<1x8xf32>
    %c0_14 = arith.constant 0 : index
    %c0_15 = arith.constant 0 : index
    %15 = vector.load %arg4[%c0_14, %c0_15] : memref<8x512xf32, #tpu.memory_space<vmem>>, vector<8x512xf32>
    %cst_16 = arith.constant dense<0.000000e+00> : vector<1x512xf32>
    %16 = tpu.matmul %14, %15, %cst_16 {dimension_numbers = #tpu.dot_dimension_numbers<[1], [0], [0], [1], [0, 0, 1, 1], [], []>} : vector<1x8xf32>, vector<8x512xf32>, vector<1x512xf32> -> vector<1x512xf32>
    %17 = arith.mulf %8, %16 : vector<1x512xf32>
    %cst_17 = arith.constant 0.000000e+00 : f32
    %18 = vector.broadcast %cst_17 : f32 to vector<1x512xf32>
    %19 = arith.cmpf oge, %17, %18 : vector<1x512xf32>
    %cst_18 = arith.constant 0.00999999977 : f32
    %20 = vector.broadcast %cst_18 : f32 to vector<1x512xf32>
    %21 = arith.mulf %20, %17 : vector<1x512xf32>
    %22 = arith.select %19, %17, %21 : vector<1x512xi1>, vector<1x512xf32>
    %23 = arith.truncf %22 : vector<1x512xf32> to vector<1x512xbf16>
    %c0_19 = arith.constant 0 : index
    %c0_20 = arith.constant 0 : index
    %24 = vector.load %arg5[%c0_19, %c0_20] : memref<512x256xbf16, #tpu.memory_space<vmem>>, vector<512x256xbf16>
    %cst_21 = arith.constant dense<0.000000e+00> : vector<1x256xf32>
    %25 = tpu.matmul %23, %24, %cst_21 {dimension_numbers = #tpu.dot_dimension_numbers<[1], [0], [0], [1], [0, 0, 1, 1], [], []>} : vector<1x512xbf16>, vector<512x256xbf16>, vector<1x256xf32> -> vector<1x256xf32>
    %c0_22 = arith.constant 0 : index
    %c0_23 = arith.constant 0 : index
    %26 = vector.load %arg6[%c0_22, %c0_23] : memref<256x16xf32, #tpu.memory_space<vmem>>, vector<256x16xf32>
    %cst_24 = arith.constant dense<0.000000e+00> : vector<1x16xf32>
    %27 = tpu.matmul %25, %26, %cst_24 {dimension_numbers = #tpu.dot_dimension_numbers<[1], [0], [0], [1], [0, 0, 1, 1], [], []>} : vector<1x256xf32>, vector<256x16xf32>, vector<1x16xf32> -> vector<1x16xf32>
    %c0_25 = arith.constant 0 : index
    %c0_26 = arith.constant 0 : index
    %28 = vector.load %arg7[%c0_25, %c0_26] : memref<16x256xf32, #tpu.memory_space<vmem>>, vector<16x256xf32>
    %cst_27 = arith.constant dense<0.000000e+00> : vector<1x256xf32>
    %29 = tpu.matmul %27, %28, %cst_27 {dimension_numbers = #tpu.dot_dimension_numbers<[1], [0], [0], [1], [0, 0, 1, 1], [], []>} : vector<1x16xf32>, vector<16x256xf32>, vector<1x256xf32> -> vector<1x256xf32>
    %30 = arith.subf %25, %29 : vector<1x256xf32>
    %31 = arith.mulf %30, %30 : vector<1x256xf32>
    %c0_28 = arith.constant 0 : index
    %c0_29 = arith.constant 0 : index
    %32 = vector.load %arg6[%c0_28, %c0_29] : memref<256x16xf32, #tpu.memory_space<vmem>>, vector<256x16xf32>
    %cst_30 = arith.constant dense<0.000000e+00> : vector<1x16xf32>
    %33 = tpu.matmul %31, %32, %cst_30 {dimension_numbers = #tpu.dot_dimension_numbers<[1], [0], [0], [1], [0, 0, 1, 1], [], []>} : vector<1x256xf32>, vector<256x16xf32>, vector<1x16xf32> -> vector<1x16xf32>
    %cst_31 = arith.constant 9.99999974E-6 : f32
    %34 = vector.broadcast %cst_31 : f32 to vector<1x16xf32>
    %35 = arith.addf %33, %34 : vector<1x16xf32>
    %36 = math.rsqrt %35 : vector<1x16xf32>
    %c0_32 = arith.constant 0 : index
    %c0_33 = arith.constant 0 : index
    %37 = vector.load %arg7[%c0_32, %c0_33] : memref<16x256xf32, #tpu.memory_space<vmem>>, vector<16x256xf32>
    %cst_34 = arith.constant dense<0.000000e+00> : vector<1x256xf32>
    %38 = tpu.matmul %36, %37, %cst_34 {dimension_numbers = #tpu.dot_dimension_numbers<[1], [0], [0], [1], [0, 0, 1, 1], [], []>} : vector<1x16xf32>, vector<16x256xf32>, vector<1x256xf32> -> vector<1x256xf32>
    %39 = arith.mulf %30, %38 : vector<1x256xf32>
    %cst_35 = arith.constant 0.000000e+00 : f32
    %40 = vector.broadcast %cst_35 : f32 to vector<1x256xf32>
    %41 = arith.cmpf oge, %39, %40 : vector<1x256xf32>
    %cst_36 = arith.constant 0.00999999977 : f32
    %42 = vector.broadcast %cst_36 : f32 to vector<1x256xf32>
    %43 = arith.mulf %42, %39 : vector<1x256xf32>
    %44 = arith.select %41, %39, %43 : vector<1x256xi1>, vector<1x256xf32>
    %45 = arith.truncf %44 : vector<1x256xf32> to vector<1x256xbf16>
    %c0_37 = arith.constant 0 : index
    %c0_38 = arith.constant 0 : index
    %46 = vector.load %arg8[%c0_37, %c0_38] : memref<256x32xbf16, #tpu.memory_space<vmem>>, vector<256x32xbf16>
    %cst_39 = arith.constant dense<0.000000e+00> : vector<1x32xf32>
    %47 = tpu.matmul %45, %46, %cst_39 {dimension_numbers = #tpu.dot_dimension_numbers<[1], [0], [0], [1], [0, 0, 1, 1], [], []>} : vector<1x256xbf16>, vector<256x32xbf16>, vector<1x32xf32> -> vector<1x32xf32>
    %c0_40 = arith.constant 0 : index
    %c0_41 = arith.constant 0 : index
    %48 = vector.load %arg9[%c0_40, %c0_41] : memref<1x32xf32, #tpu.memory_space<vmem>>, vector<1x32xf32>
    %49 = arith.addf %47, %48 : vector<1x32xf32>
    %cst_42 = arith.constant 0.000000e+00 : f32
    %50 = vector.broadcast %cst_42 : f32 to vector<1x32xf32>
    %51 = arith.maximumf %49, %50 : vector<1x32xf32>
    %cst_43 = arith.constant dense<0.000000e+00> : vector<1xf32>
    %52 = vector.multi_reduction <add>, %51, %cst_43 [1] : vector<1x32xf32> to vector<1xf32>
    %53 = vector.shape_cast %52 : vector<1xf32> to vector<1x1xf32>
    %cst_44 = arith.constant 3.200000e+01 : f32
    %54 = vector.broadcast %cst_44 : f32 to vector<1x1xf32>
    %55 = arith.divf %53, %54 : vector<1x1xf32>
    %c0_45 = arith.constant 0 : index
    %c0_46 = arith.constant 0 : index
    %c0_47 = arith.constant 0 : index
    %56 = vector.load %arg10[%c0_45, %c0_46, %c0_47] : memref<1x1x1xf32, #tpu.memory_space<vmem>>, vector<1x1x1xf32>
    %57 = vector.shape_cast %56 : vector<1x1x1xf32> to vector<1x1xf32>
    %58 = vector.shape_cast %55 : vector<1x1xf32> to vector<1x1x1xf32>
    tpu.vector_store %arg10[%c0_45, %c0_46, %c0_47], %58 {strides = array<i32>} : memref<1x1x1xf32, #tpu.memory_space<vmem>>, vector<1x1x1xf32>,
    return
  }
  func.func @transform_0(%arg0: i32) -> (i32, i32, i32) {
    %c0_i32 = arith.constant 0 : i32
    %c0_i32_0 = arith.constant 0 : i32
    %c0_i32_1 = arith.constant 0 : i32
    return %arg0, %c0_i32, %c0_i32_0 : i32, i32, i32
  }
  func.func @transform_1(%arg0: i32) -> (i32, i32) {
    %c0_i32 = arith.constant 0 : i32
    %c0_i32_0 = arith.constant 0 : i32
    %c0_i32_1 = arith.constant 0 : i32
    return %c0_i32, %c0_i32_0 : i32, i32
  }
  func.func @transform_2(%arg0: i32) -> (i32, i32) {
    %c0_i32 = arith.constant 0 : i32
    %c0_i32_0 = arith.constant 0 : i32
    %c0_i32_1 = arith.constant 0 : i32
    return %c0_i32, %c0_i32_0 : i32, i32
  }
  func.func @transform_3(%arg0: i32) -> (i32, i32) {
    %c0_i32 = arith.constant 0 : i32
    %c0_i32_0 = arith.constant 0 : i32
    %c0_i32_1 = arith.constant 0 : i32
    return %c0_i32, %c0_i32_0 : i32, i32
  }
  func.func @transform_4(%arg0: i32) -> (i32, i32) {
    %c0_i32 = arith.constant 0 : i32
    %c0_i32_0 = arith.constant 0 : i32
    %c0_i32_1 = arith.constant 0 : i32
    return %c0_i32, %c0_i32_0 : i32, i32
  }
  func.func @transform_5(%arg0: i32) -> (i32, i32) {
    %c0_i32 = arith.constant 0 : i32
    %c0_i32_0 = arith.constant 0 : i32
    %c0_i32_1 = arith.constant 0 : i32
    return %c0_i32, %c0_i32_0 : i32, i32
  }
  func.func @transform_6(%arg0: i32) -> (i32, i32) {
    %c0_i32 = arith.constant 0 : i32
    %c0_i32_0 = arith.constant 0 : i32
    %c0_i32_1 = arith.constant 0 : i32
    return %c0_i32, %c0_i32_0 : i32, i32
  }
  func.func @transform_7(%arg0: i32) -> (i32, i32) {
    %c0_i32 = arith.constant 0 : i32
    %c0_i32_0 = arith.constant 0 : i32
    %c0_i32_1 = arith.constant 0 : i32
    return %c0_i32, %c0_i32_0 : i32, i32
  }
  func.func @transform_8(%arg0: i32) -> (i32, i32) {
    %c0_i32 = arith.constant 0 : i32
    %c0_i32_0 = arith.constant 0 : i32
    %c0_i32_1 = arith.constant 0 : i32
    return %c0_i32, %c0_i32_0 : i32, i32
  }
  func.func @transform_9(%arg0: i32) -> (i32, i32, i32) {
    %c0_i32 = arith.constant 0 : i32
    %c0_i32_0 = arith.constant 0 : i32
    %c0_i32_1 = arith.constant 0 : i32
    return %arg0, %c0_i32, %c0_i32_0 : i32, i32, i32
  }
}

</mosaic_0001>

<llo_original>
// kernel: _lambda_.1
$region0: #{_lambda_.1}
  #allocation0 [shape = 'u32[]', space=smem, size = 0x4, offset = 0x4, fixed_abs, tag = 'smem constant byte address 0x4 - core index']
  #allocation1 [shape = 'u32[144,128]{1,0:T(1,128)}', space=vmem, size = 0x12000, scoped, tag = 'internal scratch']
  %s0 = inlined_call_operand.vmem [shape: bf16[2,1,1024], index: 0, kind: input, shape index: {}]
  %s1 = inlined_call_operand.vmem [shape: bf16[1024,512], index: 1, kind: input, shape index: {}]
  %s2 = inlined_call_operand.vmem [shape: f32[512,8], index: 2, kind: input, shape index: {}]
  %s3 = inlined_call_operand.vmem [shape: f32[8,512], index: 3, kind: input, shape index: {}]
  %s4 = inlined_call_operand.vmem [shape: bf16[512,256], index: 4, kind: input, shape index: {}]
  %s5 = inlined_call_operand.vmem [shape: f32[256,16], index: 5, kind: input, shape index: {}]
  %s6 = inlined_call_operand.vmem [shape: f32[16,256], index: 6, kind: input, shape index: {}]
  %s7 = inlined_call_operand.vmem [shape: bf16[256,32], index: 7, kind: input, shape index: {}]
  %s8 = inlined_call_operand.vmem [shape: f32[1,32], index: 8, kind: input, shape index: {}]
  %s9 = inlined_call_operand.vmem [shape: f32[2,1,1], index: 9, kind: output, shape index: {}]
  %s10 = sld [smem:[#allocation0]]
  $region69: #{_lambda_.1} parent=0
    _
  %s12 = ssub.s32 1, %s10
  %s13 = scalar_select 0, %s12, %s10
  loop: start=0, step=1, limit=4
  $region2: #{_lambda_.1} parent=0 // loop_pre_header
    _
  $region3: #{_lambda_.1} parent=0 // loop_header
    %s15 = sphi 0, %s19
    %p16 = scmp.ge.s32.totalorder %s15, 4
    %s25 = sphi 0, %s27
    %s28 = sphi 0, %s25
    %s29 = sphi 0, %s28
    %s45 = sphi 0, %s29
    %s49 = sphi 0, %s49
    %s51 = sphi 0, %s49
    %s52 = sphi 0, %s51
    %s66 = sphi 0, %s52
    %s70 = sphi 0, %s70
    %s72 = sphi 0, %s70
    %s73 = sphi 0, %s72
    %s87 = sphi 0, %s73
    %s91 = sphi 0, %s91
    %s93 = sphi 0, %s91
    %s94 = sphi 0, %s93
    %s108 = sphi 0, %s94
    %s112 = sphi 0, %s112
    %s114 = sphi 0, %s112
    %s115 = sphi 0, %s114
    %s129 = sphi 0, %s115
    %s133 = sphi 0, %s133
    %s135 = sphi 0, %s133
    %s136 = sphi 0, %s135
    %s150 = sphi 0, %s136
    %s154 = sphi 0, %s154
    %s156 = sphi 0, %s154
    %s157 = sphi 0, %s156
    %s171 = sphi 0, %s157
    %s175 = sphi 0, %s175
    %s177 = sphi 0, %s175
    %s178 = sphi 0, %s177
    %s192 = sphi 0, %s178
    %s196 = sphi 0, %s196
    %s198 = sphi 0, %s196
    %s199 = sphi 0, %s198
    %s213 = sphi 0, %s199
    %s219 = sphi 0, %s221
    %s222 = sphi 0, %s219
    %s223 = sphi 0, %s222
    %s239 = sphi 0, %s223
  $region4: #{_lambda_.1} parent=0 // loop_header_branch
    %18 = sbr.rel (%p16) target = $region8
  $region5: #{_lambda_.1} parent=0 // loop_body
    %s20 = ssub.s32 %s15, 1
    %s21 = ssub.s32 %s15, 2
    %s22 = sadd.s32 %s15, 1
    %s23 = ssub.s32 %s15, %s22
    %p24 = scmp.eq.s32.totalorder %s23, 0
    %s26 = sadd.s32 %s25, 1
    %s27 = scalar_select %p24, %s25, %s26
    %p30 = pneg %p24
    %p31 = scmp.eq.s32.totalorder %s15, 1
    %p32 = por %p30, %p31
    %p33 = scmp.ne.s32.totalorder %s25, %s28
    %p34 = scmp.eq.s32.totalorder %s15, 0
    %p35 = por %p33, %p34
    %p36 = scmp.ne.s32.totalorder %s25, %s28
    %p37 = scmp.eq.s32.totalorder %s20, 1
    %p38 = por %p36, %p37
    %p39 = scmp.ne.s32.totalorder %s28, %s29
    %p40 = scmp.eq.s32.totalorder %s20, 0
    %p41 = por %p39, %p40
    %p42 = scmp.ne.s32.totalorder %s28, %s29
    %p43 = scmp.eq.s32.totalorder %s21, 1
    %p44 = por %p42, %p43
    %p46 = scmp.ne.s32.totalorder %s29, %s45
    %p47 = scmp.eq.s32.totalorder %s21, 0
    %p48 = por %p46, %p47
    %s50 = sadd.s32 %s49, 1
    %p53 = scmp.eq.s32.totalorder %s15, 1
    %p54 = scmp.ne.s32.totalorder %s49, %s51
    %p55 = scmp.eq.s32.totalorder %s15, 0
    %p56 = por %p54, %p55
    %p57 = scmp.ne.s32.totalorder %s49, %s51
    %p58 = scmp.eq.s32.totalorder %s20, 1
    %p59 = por %p57, %p58
    %p60 = scmp.ne.s32.totalorder %s51, %s52
    %p61 = scmp.eq.s32.totalorder %s20, 0
    %p62 = por %p60, %p61
    %p63 = scmp.ne.s32.totalorder %s51, %s52
    %p64 = scmp.eq.s32.totalorder %s21, 1
    %p65 = por %p63, %p64
    %p67 = scmp.ne.s32.totalorder %s52, %s66
    %p68 = scmp.eq.s32.totalorder %s21, 0
    %p69 = por %p67, %p68
    %s71 = sadd.s32 %s70, 1
    %p74 = scmp.eq.s32.totalorder %s15, 1
    %p75 = scmp.ne.s32.totalorder %s70, %s72
    %p76 = scmp.eq.s32.totalorder %s15, 0
    %p77 = por %p75, %p76
    %p78 = scmp.ne.s32.totalorder %s70, %s72
    %p79 = scmp.eq.s32.totalorder %s20, 1
    %p80 = por %p78, %p79
    %p81 = scmp.ne.s32.totalorder %s72, %s73
    %p82 = scmp.eq.s32.totalorder %s20, 0
    %p83 = por %p81, %p82
    %p84 = scmp.ne.s32.totalorder %s72, %s73
    %p85 = scmp.eq.s32.totalorder %s21, 1
    %p86 = por %p84, %p85
    %p88 = scmp.ne.s32.totalorder %s73, %s87
    %p89 = scmp.eq.s32.totalorder %s21, 0
    %p90 = por %p88, %p89
    %s92 = sadd.s32 %s91, 1
    %p95 = scmp.eq.s32.totalorder %s15, 1
    %p96 = scmp.ne.s32.totalorder %s91, %s93
    %p97 = scmp.eq.s32.totalorder %s15, 0
    %p98 = por %p96, %p97
    %p99 = scmp.ne.s32.totalorder %s91, %s93
    %p100 = scmp.eq.s32.totalorder %s20, 1
    %p101 = por %p99, %p100
    %p102 = scmp.ne.s32.totalorder %s93, %s94
    %p103 = scmp.eq.s32.totalorder %s20, 0
    %p104 = por %p102, %p103
    %p105 = scmp.ne.s32.totalorder %s93, %s94
    %p106 = scmp.eq.s32.totalorder %s21, 1
    %p107 = por %p105, %p106
    %p109 = scmp.ne.s32.totalorder %s94, %s108
    %p110 = scmp.eq.s32.totalorder %s21, 0
    %p111 = por %p109, %p110
    %s113 = sadd.s32 %s112, 1
    %p116 = scmp.eq.s32.totalorder %s15, 1
    %p117 = scmp.ne.s32.totalorder %s112, %s114
    %p118 = scmp.eq.s32.totalorder %s15, 0
    %p119 = por %p117, %p118
    %p120 = scmp.ne.s32.totalorder %s112, %s114
    %p121 = scmp.eq.s32.totalorder %s20, 1
    %p122 = por %p120, %p121
    %p123 = scmp.ne.s32.totalorder %s114, %s115
    %p124 = scmp.eq.s32.totalorder %s20, 0
    %p125 = por %p123, %p124
    %p126 = scmp.ne.s32.totalorder %s114, %s115
    %p127 = scmp.eq.s32.totalorder %s21, 1
    %p128 = por %p126, %p127
    %p130 = scmp.ne.s32.totalorder %s115, %s129
    %p131 = scmp.eq.s32.totalorder %s21, 0
    %p132 = por %p130, %p131
    %s134 = sadd.s32 %s133, 1
    %p137 = scmp.eq.s32.totalorder %s15, 1
    %p138 = scmp.ne.s32.totalorder %s133, %s135
    %p139 = scmp.eq.s32.totalorder %s15, 0
    %p140 = por %p138, %p139
    %p141 = scmp.ne.s32.totalorder %s133, %s135
    %p142 = scmp.eq.s32.totalorder %s20, 1
    %p143 = por %p141, %p142
    %p144 = scmp.ne.s32.totalorder %s135, %s136
    %p145 = scmp.eq.s32.totalorder %s20, 0
    %p146 = por %p144, %p145
    %p147 = scmp.ne.s32.totalorder %s135, %s136
    %p148 = scmp.eq.s32.totalorder %s21, 1
    %p149 = por %p147, %p148
    %p151 = scmp.ne.s32.totalorder %s136, %s150
    %p152 = scmp.eq.s32.totalorder %s21, 0
    %p153 = por %p151, %p152
    %s155 = sadd.s32 %s154, 1
    %p158 = scmp.eq.s32.totalorder %s15, 1
    %p159 = scmp.ne.s32.totalorder %s154, %s156
    %p160 = scmp.eq.s32.totalorder %s15, 0
    %p161 = por %p159, %p160
    %p162 = scmp.ne.s32.totalorder %s154, %s156
    %p163 = scmp.eq.s32.totalorder %s20, 1
    %p164 = por %p162, %p163
    %p165 = scmp.ne.s32.totalorder %s156, %s157
    %p166 = scmp.eq.s32.totalorder %s20, 0
    %p167 = por %p165, %p166
    %p168 = scmp.ne.s32.totalorder %s156, %s157
    %p169 = scmp.eq.s32.totalorder %s21, 1
    %p170 = por %p168, %p169
    %p172 = scmp.ne.s32.totalorder %s157, %s171
    %p173 = scmp.eq.s32.totalorder %s21, 0
    %p174 = por %p172, %p173
    %s176 = sadd.s32 %s175, 1
    %p179 = scmp.eq.s32.totalorder %s15, 1
    %p180 = scmp.ne.s32.totalorder %s175, %s177
    %p181 = scmp.eq.s32.totalorder %s15, 0
    %p182 = por %p180, %p181
    %p183 = scmp.ne.s32.totalorder %s175, %s177
    %p184 = scmp.eq.s32.totalorder %s20, 1
    %p185 = por %p183, %p184
    %p186 = scmp.ne.s32.totalorder %s177, %s178
    %p187 = scmp.eq.s32.totalorder %s20, 0
    %p188 = por %p186, %p187
    %p189 = scmp.ne.s32.totalorder %s177, %s178
    %p190 = scmp.eq.s32.totalorder %s21, 1
    %p191 = por %p189, %p190
    %p193 = scmp.ne.s32.totalorder %s178, %s192
    %p194 = scmp.eq.s32.totalorder %s21, 0
    %p195 = por %p193, %p194
    %s197 = sadd.s32 %s196, 1
    %p200 = scmp.eq.s32.totalorder %s15, 1
    %p201 = scmp.ne.s32.totalorder %s196, %s198
    %p202 = scmp.eq.s32.totalorder %s15, 0
    %p203 = por %p201, %p202
    %p204 = scmp.ne.s32.totalorder %s196, %s198
    %p205 = scmp.eq.s32.totalorder %s20, 1
    %p206 = por %p204, %p205
    %p207 = scmp.ne.s32.totalorder %s198, %s199
    %p208 = scmp.eq.s32.totalorder %s20, 0
    %p209 = por %p207, %p208
    %p210 = scmp.ne.s32.totalorder %s198, %s199
    %p211 = scmp.eq.s32.totalorder %s21, 1
    %p212 = por %p210, %p211
    %p214 = scmp.ne.s32.totalorder %s199, %s213
    %p215 = scmp.eq.s32.totalorder %s21, 0
    %p216 = por %p214, %p215
    %s217 = ssub.s32 %s15, %s22
    %p218 = scmp.eq.s32.totalorder %s217, 0
    %s220 = sadd.s32 %s219, 1
    %s221 = scalar_select %p218, %s219, %s220
    %p224 = pneg %p218
    %p225 = scmp.eq.s32.totalorder %s15, 1
    %p226 = por %p224, %p225
    %p227 = scmp.ne.s32.totalorder %s219, %s222
    %p228 = scmp.eq.s32.totalorder %s15, 0
    %p229 = por %p227, %p228
    %p230 = scmp.ne.s32.totalorder %s219, %s222
    %p231 = scmp.eq.s32.totalorder %s20, 1
    %p232 = por %p230, %p231
    %p233 = scmp.ne.s32.totalorder %s222, %s223
    %p234 = scmp.eq.s32.totalorder %s20, 0
    %p235 = por %p233, %p234
    %p236 = scmp.ne.s32.totalorder %s222, %s223
    %p237 = scmp.eq.s32.totalorder %s21, 1
    %p238 = por %p236, %p237
    %p240 = scmp.ne.s32.totalorder %s223, %s239
    %p241 = scmp.eq.s32.totalorder %s21, 0
    %p242 = por %p240, %p241
    %p243 = scmp.le.s32.totalorder 1, %s15
    %p244 = scmp.lt.s32.totalorder %s15, 3
    %p245 = pnand %p243, %p244
    %p246 = pneg %p245
    // Predicated region
    $region9: #{_lambda_.1} parent=5 // pred_check
      _
    $region10: #{_lambda_.1} parent=5 // pred_check_branch
      %248 = sbr.rel (%p245) target = $region12
    $region11: #{_lambda_.1} parent=5 // pred_region
      %s249 = ssub.s32 %s15, 1
      // Predicated region
      $region13: #{_lambda_.1} parent=11 // pred_check
        %p250 = pneg %p62
      $region14: #{_lambda_.1} parent=11 // pred_check_branch
        %252 = sbr.rel (%p250) target = $region16
      $region15: #{_lambda_.1} parent=11 // pred_region
        _
      $region16: #{_lambda_.1} parent=11 // pred_fallthru
        _
      // Predicated region
      $region17: #{_lambda_.1} parent=11 // pred_check
        %p253 = pneg %p83
      $region18: #{_lambda_.1} parent=11 // pred_check_branch
        %255 = sbr.rel (%p253) target = $region20
      $region19: #{_lambda_.1} parent=11 // pred_region
        _
      $region20: #{_lambda_.1} parent=11 // pred_fallthru
        _
      // Predicated region
      $region21: #{_lambda_.1} parent=11 // pred_check
        %p256 = pneg %p104
      $region22: #{_lambda_.1} parent=11 // pred_check_branch
        %258 = sbr.rel (%p256) target = $region24
      $region23: #{_lambda_.1} parent=11 // pred_region
        _
      $region24: #{_lambda_.1} parent=11 // pred_fallthru
        _
      // Predicated region
      $region25: #{_lambda_.1} parent=11 // pred_check
        %p259 = pneg %p125
      $region26: #{_lambda_.1} parent=11 // pred_check_branch
        %261 = sbr.rel (%p259) target = $region28
      $region27: #{_lambda_.1} parent=11 // pred_region
        _
      $region28: #{_lambda_.1} parent=11 // pred_fallthru
        _
      // Predicated region
      $region29: #{_lambda_.1} parent=11 // pred_check
        %p262 = pneg %p146
      $region30: #{_lambda_.1} parent=11 // pred_check_branch
        %264 = sbr.rel (%p262) target = $region32
      $region31: #{_lambda_.1} parent=11 // pred_region
        _
      $region32: #{_lambda_.1} parent=11 // pred_fallthru
        _
      // Predicated region
      $region33: #{_lambda_.1} parent=11 // pred_check
        %p265 = pneg %p167
      $region34: #{_lambda_.1} parent=11 // pred_check_branch
        %267 = sbr.rel (%p265) target = $region36
      $region35: #{_lambda_.1} parent=11 // pred_region
        _
      $region36: #{_lambda_.1} parent=11 // pred_fallthru
        _
      // Predicated region
      $region37: #{_lambda_.1} parent=11 // pred_check
        %p268 = pneg %p188
      $region38: #{_lambda_.1} parent=11 // pred_check_branch
        %270 = sbr.rel (%p268) target = $region40
      $region39: #{_lambda_.1} parent=11 // pred_region
        _
      $region40: #{_lambda_.1} parent=11 // pred_fallthru
        _
      // Predicated region
      $region41: #{_lambda_.1} parent=11 // pred_check
        %p271 = pneg %p209
      $region42: #{_lambda_.1} parent=11 // pred_check_branch
        %273 = sbr.rel (%p271) target = $region44
      $region43: #{_lambda_.1} parent=11 // pred_region
        _
      $region44: #{_lambda_.1} parent=11 // pred_fallthru
        _
    $region12: #{_lambda_.1} parent=5 // pred_fallthru
      _
    %p274 = scmp.lt.s32.totalorder %s15, 2
    // Predicated region
    $region45: #{_lambda_.1} parent=5 // pred_check
      %p275 = pneg %p274
    $region46: #{_lambda_.1} parent=5 // pred_check_branch
      %277 = sbr.rel (%p275) target = $region48
    $region47: #{_lambda_.1} parent=5 // pred_region
      // Predicated region
      $region49: #{_lambda_.1} parent=47 // pred_check
        %p278 = pneg %p35
      $region50: #{_lambda_.1} parent=47 // pred_check_branch
        %280 = sbr.rel (%p278) target = $region52
      $region51: #{_lambda_.1} parent=47 // pred_region
        %p281 = scmp.lt.s32.totalorder %s15, 1
        %s282 = scalar_select %p281, %s15, 1
        %s283 = smul.addr %s282, 8
        %s284 = scalar_lea.vmem %s0, %s283
      $region52: #{_lambda_.1} parent=47 // pred_fallthru
        _
    $region48: #{_lambda_.1} parent=5 // pred_fallthru
      _
    %p285 = scmp.le.s32.totalorder 1, %s15
    %p286 = scmp.lt.s32.totalorder %s15, 3
    %p287 = pnand %p285, %p286
    %p288 = pneg %p287
    // Predicated region
    $region53: #{_lambda_.1} parent=5 // pred_check
      _
    $region54: #{_lambda_.1} parent=5 // pred_check_branch
      %290 = sbr.rel (%p287) target = $region56
    $region55: #{_lambda_.1} parent=5 // pred_region
      %s291 = ssub.s32 %s15, 1
      %p292 = scmp.lt.s32.totalorder %s20, 1
      %s293 = scalar_select %p292, %s20, 1
      %s294 = smul.addr %s293, 8
      %s295 = scalar_lea.vmem %s0, %s294
      %p296 = pneg %p41
      %p297 = pneg %p38
      %p298 = pneg %p62
      %p299 = pneg %p59
      %p300 = pneg %p83
      %p301 = pneg %p80
      %p302 = pneg %p104
      %p303 = pneg %p101
      %p304 = pneg %p125
      %p305 = pneg %p122
      %p306 = pneg %p146
      %p307 = pneg %p143
      %p308 = pneg %p167
      %p309 = pneg %p164
      %p310 = pneg %p188
      %p311 = pneg %p185
      %p312 = pneg %p209
      %p313 = pneg %p206
      %p314 = pneg %p235
      %p315 = pneg %p232
      %p316 = scmp.lt.s32.totalorder %s20, 1
      %s317 = scalar_select %p316, %s20, 1
      %s318 = scalar_lea.vmem %s9, %s317
      %p319 = scmp.lt.s32.totalorder %s20, 1
      %s320 = scalar_select %p319, %s20, 1
      %s321 = smul.addr %s320, 8
      %s322 = scalar_lea.vmem %s0, %s321
      %p323 = scmp.lt.s32.totalorder %s20, 1
      %s324 = scalar_select %p323, %s20, 1
      %s325 = scalar_lea.vmem %s9, %s324
      %v327 = vld [vmem:[%s322] sm:$0xff]
      %v328 = vld [vmem:[%s1] sm:$0xff]
      %v329 = vld [vmem:[%s1 + $0x8] sm:$0xff]
      %v330 = vld [vmem:[%s1 + $0x10] sm:$0xff]
      %v331 = vld [vmem:[%s1 + $0x18] sm:$0xff]
      %v332 = vld [vmem:[%s1 + $0x20] sm:$0xff]
      %v333 = vld [vmem:[%s1 + $0x28] sm:$0xff]
      %v334 = vld [vmem:[%s1 + $0x30] sm:$0xff]
      %v335 = vld [vmem:[%s1 + $0x38] sm:$0xff]
      %v336 = vld [vmem:[%s1 + $0x40] sm:$0xff]
      %v337 = vld [vmem:[%s1 + $0x48] sm:$0xff]
      %v338 = vld [vmem:[%s1 + $0x50] sm:$0xff]
      %v339 = vld [vmem:[%s1 + $0x58] sm:$0xff]
      %v340 = vld [vmem:[%s1 + $0x60] sm:$0xff]
      %v341 = vld [vmem:[%s1 + $0x68] sm:$0xff]
      %v342 = vld [vmem:[%s1 + $0x70] sm:$0xff]
      %v343 = vld [vmem:[%s1 + $0x78] sm:$0xff]
      %v344 = vld [vmem:[%s1 + $0x80] sm:$0xff]
      %v345 = vld [vmem:[%s1 + $0x88] sm:$0xff]
      %v346 = vld [vmem:[%s1 + $0x90] sm:$0xff]
      %v347 = vld [vmem:[%s1 + $0x98] sm:$0xff]
      %v348 = vld [vmem:[%s1 + $0xa0] sm:$0xff]
      %v349 = vld [vmem:[%s1 + $0xa8] sm:$0xff]
      %v350 = vld [vmem:[%s1 + $0xb0] sm:$0xff]
      %v351 = vld [vmem:[%s1 + $0xb8] sm:$0xff]
      %v352 = vld [vmem:[%s1 + $0xc0] sm:$0xff]
      %v353 = vld [vmem:[%s1 + $0xc8] sm:$0xff]
      %v354 = vld [vmem:[%s1 + $0xd0] sm:$0xff]
      %v355 = vld [vmem:[%s1 + $0xd8] sm:$0xff]
      %v356 = vld [vmem:[%s1 + $0xe0] sm:$0xff]
      %v357 = vld [vmem:[%s1 + $0xe8] sm:$0xff]
      %v358 = vld [vmem:[%s1 + $0xf0] sm:$0xff]
      %v359 = vld [vmem:[%s1 + $0xf8] sm:$0xff]
      %v360 = vld [vmem:[%s1 + $0x100] sm:$0xff]
      %v361 = vld [vmem:[%s1 + $0x108] sm:$0xff]
      %v362 = vld [vmem:[%s1 + $0x110] sm:$0xff]
      %v363 = vld [vmem:[%s1 + $0x118] sm:$0xff]
      %v364 = vld [vmem:[%s1 + $0x120] sm:$0xff]
      %v365 = vld [vmem:[%s1 + $0x128] sm:$0xff]
      %v366 = vld [vmem:[%s1 + $0x130] sm:$0xff]
      %v367 = vld [vmem:[%s1 + $0x138] sm:$0xff]
      %v368 = vld [vmem:[%s1 + $0x140] sm:$0xff]
      %v369 = vld [vmem:[%s1 + $0x148] sm:$0xff]
      %v370 = vld [vmem:[%s1 + $0x150] sm:$0xff]
      %v371 = vld [vmem:[%s1 + $0x158] sm:$0xff]
      %v372 = vld [vmem:[%s1 + $0x160] sm:$0xff]
      %v373 = vld [vmem:[%s1 + $0x168] sm:$0xff]
      %v374 = vld [vmem:[%s1 + $0x170] sm:$0xff]
      %v375 = vld [vmem:[%s1 + $0x178] sm:$0xff]
      %v376 = vld [vmem:[%s1 + $0x180] sm:$0xff]
      %v377 = vld [vmem:[%s1 + $0x188] sm:$0xff]
      %v378 = vld [vmem:[%s1 + $0x190] sm:$0xff]
      %v379 = vld [vmem:[%s1 + $0x198] sm:$0xff]
      %v380 = vld [vmem:[%s1 + $0x1a0] sm:$0xff]
      %v381 = vld [vmem:[%s1 + $0x1a8] sm:$0xff]
      %v382 = vld [vmem:[%s1 + $0x1b0] sm:$0xff]
      %v383 = vld [vmem:[%s1 + $0x1b8] sm:$0xff]
      %v384 = vld [vmem:[%s1 + $0x1c0] sm:$0xff]
      %v385 = vld [vmem:[%s1 + $0x1c8] sm:$0xff]
      %v386 = vld [vmem:[%s1 + $0x1d0] sm:$0xff]
      %v387 = vld [vmem:[%s1 + $0x1d8] sm:$0xff]
      %v388 = vld [vmem:[%s1 + $0x1e0] sm:$0xff]
      %v389 = vld [vmem:[%s1 + $0x1e8] sm:$0xff]
      %v390 = vld [vmem:[%s1 + $0x1f0] sm:$0xff]
      %v391 = vld [vmem:[%s1 + $0x1f8] sm:$0xff]
      %v392 = vld [vmem:[%s1 + $0x200] sm:$0xff]
      %v393 = vld [vmem:[%s1 + $0x208] sm:$0xff]
      %v394 = vld [vmem:[%s1 + $0x210] sm:$0xff]
      %v395 = vld [vmem:[%s1 + $0x218] sm:$0xff]
      %v396 = vld [vmem:[%s1 + $0x220] sm:$0xff]
      %v397 = vld [vmem:[%s1 + $0x228] sm:$0xff]
      %v398 = vld [vmem:[%s1 + $0x230] sm:$0xff]
      %v399 = vld [vmem:[%s1 + $0x238] sm:$0xff]
      %v400 = vld [vmem:[%s1 + $0x240] sm:$0xff]
      %v401 = vld [vmem:[%s1 + $0x248] sm:$0xff]
      %v402 = vld [vmem:[%s1 + $0x250] sm:$0xff]
      %v403 = vld [vmem:[%s1 + $0x258] sm:$0xff]
      %v404 = vld [vmem:[%s1 + $0x260] sm:$0xff]
      %v405 = vld [vmem:[%s1 + $0x268] sm:$0xff]
      %v406 = vld [vmem:[%s1 + $0x270] sm:$0xff]
      %v407 = vld [vmem:[%s1 + $0x278] sm:$0xff]
      %v408 = vld [vmem:[%s1 + $0x280] sm:$0xff]
      %v409 = vld [vmem:[%s1 + $0x288] sm:$0xff]
      %v410 = vld [vmem:[%s1 + $0x290] sm:$0xff]
      %v411 = vld [vmem:[%s1 + $0x298] sm:$0xff]
      %v412 = vld [vmem:[%s1 + $0x2a0] sm:$0xff]
      %v413 = vld [vmem:[%s1 + $0x2a8] sm:$0xff]
      %v414 = vld [vmem:[%s1 + $0x2b0] sm:$0xff]
      %v415 = vld [vmem:[%s1 + $0x2b8] sm:$0xff]
      %v416 = vld [vmem:[%s1 + $0x2c0] sm:$0xff]
      %v417 = vld [vmem:[%s1 + $0x2c8] sm:$0xff]
      %v418 = vld [vmem:[%s1 + $0x2d0] sm:$0xff]
      %v419 = vld [vmem:[%s1 + $0x2d8] sm:$0xff]
      %v420 = vld [vmem:[%s1 + $0x2e0] sm:$0xff]
      %v421 = vld [vmem:[%s1 + $0x2e8] sm:$0xff]
      %v422 = vld [vmem:[%s1 + $0x2f0] sm:$0xff]
      %v423 = vld [vmem:[%s1 + $0x2f8] sm:$0xff]
      %v424 = vld [vmem:[%s1 + $0x300] sm:$0xff]
      %v425 = vld [vmem:[%s1 + $0x308] sm:$0xff]
      %v426 = vld [vmem:[%s1 + $0x310] sm:$0xff]
      %v427 = vld [vmem:[%s1 + $0x318] sm:$0xff]
      %v428 = vld [vmem:[%s1 + $0x320] sm:$0xff]
      %v429 = vld [vmem:[%s1 + $0x328] sm:$0xff]
      %v430 = vld [vmem:[%s1 + $0x330] sm:$0xff]
      %v431 = vld [vmem:[%s1 + $0x338] sm:$0xff]
      %v432 = vld [vmem:[%s1 + $0x340] sm:$0xff]
      %v433 = vld [vmem:[%s1 + $0x348] sm:$0xff]
      %v434 = vld [vmem:[%s1 + $0x350] sm:$0xff]
      %v435 = vld [vmem:[%s1 + $0x358] sm:$0xff]
      %v436 = vld [vmem:[%s1 + $0x360] sm:$0xff]
      %v437 = vld [vmem:[%s1 + $0x368] sm:$0xff]
      %v438 = vld [vmem:[%s1 + $0x370] sm:$0xff]
      %v439 = vld [vmem:[%s1 + $0x378] sm:$0xff]
      %v440 = vld [vmem:[%s1 + $0x380] sm:$0xff]
      %v441 = vld [vmem:[%s1 + $0x388] sm:$0xff]
      %v442 = vld [vmem:[%s1 + $0x390] sm:$0xff]
      %v443 = vld [vmem:[%s1 + $0x398] sm:$0xff]
      %v444 = vld [vmem:[%s1 + $0x3a0] sm:$0xff]
      %v445 = vld [vmem:[%s1 + $0x3a8] sm:$0xff]
      %v446 = vld [vmem:[%s1 + $0x3b0] sm:$0xff]
      %v447 = vld [vmem:[%s1 + $0x3b8] sm:$0xff]
      %v448 = vld [vmem:[%s1 + $0x3c0] sm:$0xff]
      %v449 = vld [vmem:[%s1 + $0x3c8] sm:$0xff]
      %v450 = vld [vmem:[%s1 + $0x3d0] sm:$0xff]
      %v451 = vld [vmem:[%s1 + $0x3d8] sm:$0xff]
      %v452 = vld [vmem:[%s1 + $0x3e0] sm:$0xff]
      %v453 = vld [vmem:[%s1 + $0x3e8] sm:$0xff]
      %v454 = vld [vmem:[%s1 + $0x3f0] sm:$0xff]
      %v455 = vld [vmem:[%s1 + $0x3f8] sm:$0xff]
      %v456 = vld [vmem:[%s1 + $0x400] sm:$0xff]
      %v457 = vld [vmem:[%s1 + $0x408] sm:$0xff]
      %v458 = vld [vmem:[%s1 + $0x410] sm:$0xff]
      %v459 = vld [vmem:[%s1 + $0x418] sm:$0xff]
      %v460 = vld [vmem:[%s1 + $0x420] sm:$0xff]
      %v461 = vld [vmem:[%s1 + $0x428] sm:$0xff]
      %v462 = vld [vmem:[%s1 + $0x430] sm:$0xff]
      %v463 = vld [vmem:[%s1 + $0x438] sm:$0xff]
      %v464 = vld [vmem:[%s1 + $0x440] sm:$0xff]
      %v465 = vld [vmem:[%s1 + $0x448] sm:$0xff]
      %v466 = vld [vmem:[%s1 + $0x450] sm:$0xff]
      %v467 = vld [vmem:[%s1 + $0x458] sm:$0xff]
      %v468 = vld [vmem:[%s1 + $0x460] sm:$0xff]
      %v469 = vld [vmem:[%s1 + $0x468] sm:$0xff]
      %v470 = vld [vmem:[%s1 + $0x470] sm:$0xff]
      %v471 = vld [vmem:[%s1 + $0x478] sm:$0xff]
      %v472 = vld [vmem:[%s1 + $0x480] sm:$0xff]
      %v473 = vld [vmem:[%s1 + $0x488] sm:$0xff]
      %v474 = vld [vmem:[%s1 + $0x490] sm:$0xff]
      %v475 = vld [vmem:[%s1 + $0x498] sm:$0xff]
      %v476 = vld [vmem:[%s1 + $0x4a0] sm:$0xff]
      %v477 = vld [vmem:[%s1 + $0x4a8] sm:$0xff]
      %v478 = vld [vmem:[%s1 + $0x4b0] sm:$0xff]
      %v479 = vld [vmem:[%s1 + $0x4b8] sm:$0xff]
      %v480 = vld [vmem:[%s1 + $0x4c0] sm:$0xff]
      %v481 = vld [vmem:[%s1 + $0x4c8] sm:$0xff]
      %v482 = vld [vmem:[%s1 + $0x4d0] sm:$0xff]
      %v483 = vld [vmem:[%s1 + $0x4d8] sm:$0xff]
      %v484 = vld [vmem:[%s1 + $0x4e0] sm:$0xff]
      %v485 = vld [vmem:[%s1 + $0x4e8] sm:$0xff]
      %v486 = vld [vmem:[%s1 + $0x4f0] sm:$0xff]
      %v487 = vld [vmem:[%s1 + $0x4f8] sm:$0xff]
      %v488 = vld [vmem:[%s1 + $0x500] sm:$0xff]
      %v489 = vld [vmem:[%s1 + $0x508] sm:$0xff]
      %v490 = vld [vmem:[%s1 + $0x510] sm:$0xff]
      %v491 = vld [vmem:[%s1 + $0x518] sm:$0xff]
      %v492 = vld [vmem:[%s1 + $0x520] sm:$0xff]
      %v493 = vld [vmem:[%s1 + $0x528] sm:$0xff]
      %v494 = vld [vmem:[%s1 + $0x530] sm:$0xff]
      %v495 = vld [vmem:[%s1 + $0x538] sm:$0xff]
      %v496 = vld [vmem:[%s1 + $0x540] sm:$0xff]
      %v497 = vld [vmem:[%s1 + $0x548] sm:$0xff]
      %v498 = vld [vmem:[%s1 + $0x550] sm:$0xff]
      %v499 = vld [vmem:[%s1 + $0x558] sm:$0xff]
      %v500 = vld [vmem:[%s1 + $0x560] sm:$0xff]
      %v501 = vld [vmem:[%s1 + $0x568] sm:$0xff]
      %v502 = vld [vmem:[%s1 + $0x570] sm:$0xff]
      %v503 = vld [vmem:[%s1 + $0x578] sm:$0xff]
      %v504 = vld [vmem:[%s1 + $0x580] sm:$0xff]
      %v505 = vld [vmem:[%s1 + $0x588] sm:$0xff]
      %v506 = vld [vmem:[%s1 + $0x590] sm:$0xff]
      %v507 = vld [vmem:[%s1 + $0x598] sm:$0xff]
      %v508 = vld [vmem:[%s1 + $0x5a0] sm:$0xff]
      %v509 = vld [vmem:[%s1 + $0x5a8] sm:$0xff]
      %v510 = vld [vmem:[%s1 + $0x5b0] sm:$0xff]
      %v511 = vld [vmem:[%s1 + $0x5b8] sm:$0xff]
      %v512 = vld [vmem:[%s1 + $0x5c0] sm:$0xff]
      %v513 = vld [vmem:[%s1 + $0x5c8] sm:$0xff]
      %v514 = vld [vmem:[%s1 + $0x5d0] sm:$0xff]
      %v515 = vld [vmem:[%s1 + $0x5d8] sm:$0xff]
      %v516 = vld [vmem:[%s1 + $0x5e0] sm:$0xff]
      %v517 = vld [vmem:[%s1 + $0x5e8] sm:$0xff]
      %v518 = vld [vmem:[%s1 + $0x5f0] sm:$0xff]
      %v519 = vld [vmem:[%s1 + $0x5f8] sm:$0xff]
      %v520 = vld [vmem:[%s1 + $0x600] sm:$0xff]
      %v521 = vld [vmem:[%s1 + $0x608] sm:$0xff]
      %v522 = vld [vmem:[%s1 + $0x610] sm:$0xff]
      %v523 = vld [vmem:[%s1 + $0x618] sm:$0xff]
      %v524 = vld [vmem:[%s1 + $0x620] sm:$0xff]
      %v525 = vld [vmem:[%s1 + $0x628] sm:$0xff]
      %v526 = vld [vmem:[%s1 + $0x630] sm:$0xff]
      %v527 = vld [vmem:[%s1 + $0x638] sm:$0xff]
      %v528 = vld [vmem:[%s1 + $0x640] sm:$0xff]
      %v529 = vld [vmem:[%s1 + $0x648] sm:$0xff]
      %v530 = vld [vmem:[%s1 + $0x650] sm:$0xff]
      %v531 = vld [vmem:[%s1 + $0x658] sm:$0xff]
      %v532 = vld [vmem:[%s1 + $0x660] sm:$0xff]
      %v533 = vld [vmem:[%s1 + $0x668] sm:$0xff]
      %v534 = vld [vmem:[%s1 + $0x670] sm:$0xff]
      %v535 = vld [vmem:[%s1 + $0x678] sm:$0xff]
      %v536 = vld [vmem:[%s1 + $0x680] sm:$0xff]
      %v537 = vld [vmem:[%s1 + $0x688] sm:$0xff]
      %v538 = vld [vmem:[%s1 + $0x690] sm:$0xff]
      %v539 = vld [vmem:[%s1 + $0x698] sm:$0xff]
      %v540 = vld [vmem:[%s1 + $0x6a0] sm:$0xff]
      %v541 = vld [vmem:[%s1 + $0x6a8] sm:$0xff]
      %v542 = vld [vmem:[%s1 + $0x6b0] sm:$0xff]
      %v543 = vld [vmem:[%s1 + $0x6b8] sm:$0xff]
      %v544 = vld [vmem:[%s1 + $0x6c0] sm:$0xff]
      %v545 = vld [vmem:[%s1 + $0x6c8] sm:$0xff]
      %v546 = vld [vmem:[%s1 + $0x6d0] sm:$0xff]
      %v547 = vld [vmem:[%s1 + $0x6d8] sm:$0xff]
      %v548 = vld [vmem:[%s1 + $0x6e0] sm:$0xff]
      %v549 = vld [vmem:[%s1 + $0x6e8] sm:$0xff]
      %v550 = vld [vmem:[%s1 + $0x6f0] sm:$0xff]
      %v551 = vld [vmem:[%s1 + $0x6f8] sm:$0xff]
      %v552 = vld [vmem:[%s1 + $0x700] sm:$0xff]
      %v553 = vld [vmem:[%s1 + $0x708] sm:$0xff]
      %v554 = vld [vmem:[%s1 + $0x710] sm:$0xff]
      %v555 = vld [vmem:[%s1 + $0x718] sm:$0xff]
      %v556 = vld [vmem:[%s1 + $0x720] sm:$0xff]
      %v557 = vld [vmem:[%s1 + $0x728] sm:$0xff]
      %v558 = vld [vmem:[%s1 + $0x730] sm:$0xff]
      %v559 = vld [vmem:[%s1 + $0x738] sm:$0xff]
      %v560 = vld [vmem:[%s1 + $0x740] sm:$0xff]
      %v561 = vld [vmem:[%s1 + $0x748] sm:$0xff]
      %v562 = vld [vmem:[%s1 + $0x750] sm:$0xff]
      %v563 = vld [vmem:[%s1 + $0x758] sm:$0xff]
      %v564 = vld [vmem:[%s1 + $0x760] sm:$0xff]
      %v565 = vld [vmem:[%s1 + $0x768] sm:$0xff]
      %v566 = vld [vmem:[%s1 + $0x770] sm:$0xff]
      %v567 = vld [vmem:[%s1 + $0x778] sm:$0xff]
      %v568 = vld [vmem:[%s1 + $0x780] sm:$0xff]
      %v569 = vld [vmem:[%s1 + $0x788] sm:$0xff]
      %v570 = vld [vmem:[%s1 + $0x790] sm:$0xff]
      %v571 = vld [vmem:[%s1 + $0x798] sm:$0xff]
      %v572 = vld [vmem:[%s1 + $0x7a0] sm:$0xff]
      %v573 = vld [vmem:[%s1 + $0x7a8] sm:$0xff]
      %v574 = vld [vmem:[%s1 + $0x7b0] sm:$0xff]
      %v575 = vld [vmem:[%s1 + $0x7b8] sm:$0xff]
      %v576 = vld [vmem:[%s1 + $0x7c0] sm:$0xff]
      %v577 = vld [vmem:[%s1 + $0x7c8] sm:$0xff]
      %v578 = vld [vmem:[%s1 + $0x7d0] sm:$0xff]
      %v579 = vld [vmem:[%s1 + $0x7d8] sm:$0xff]
      %v580 = vld [vmem:[%s1 + $0x7e0] sm:$0xff]
      %v581 = vld [vmem:[%s1 + $0x7e8] sm:$0xff]
      %v582 = vld [vmem:[%s1 + $0x7f0] sm:$0xff]
      %v583 = vld [vmem:[%s1 + $0x7f8] sm:$0xff]
      %v585 = vcombine.high %v327, %v327
      %v587 = vunpack.c.l.s4 1966171168
      %v588 = vunpack.c.0.s8 %v587
      %v589 = vlaneseq
      %v590 = vshrl.u32 %v589, 7
      %v591 = vsub.s32 %v588, %v590
      %v592 = vrot.slane %v327, %v591
      %v594 = vunpack.c.l.s4 1966171168
      %v595 = vunpack.c.0.s8 %v594
      %v596 = vlaneseq
      %v597 = vshrl.u32 %v596, 7
      %v598 = vsub.s32 %v595, %v597
      %v599 = vrot.slane %v585, %v598
      %v600 = vcombine.high %v592, %v592
      %v601 = vcombine.high %v599, %v599
      %v603 = vunpack.c.l.s4 1966171168
      %v604 = vunpack.c.0.s8 %v603
      %v605 = vlaneseq
      %v606 = vshrl.u32 %v605, 7
      %v607 = vsub.s32 %v604, %v606
      %v608 = vrot.slane %v592, %v607
      %v610 = vunpack.c.l.s4 1966171168
      %v611 = vunpack.c.0.s8 %v610
      %v612 = vlaneseq
      %v613 = vshrl.u32 %v612, 7
      %v614 = vsub.s32 %v611, %v613
      %v615 = vrot.slane %v599, %v614
      %v617 = vunpack.c.l.s4 1966171168
      %v618 = vunpack.c.0.s8 %v617
      %v619 = vlaneseq
      %v620 = vshrl.u32 %v619, 7
      %v621 = vsub.s32 %v618, %v620
      %v622 = vrot.slane %v600, %v621
      %v624 = vunpack.c.l.s4 1966171168
      %v625 = vunpack.c.0.s8 %v624
      %v626 = vlaneseq
      %v627 = vshrl.u32 %v626, 7
      %v628 = vsub.s32 %v625, %v627
      %v629 = vrot.slane %v601, %v628
      %v630 = vcombine.high %v608, %v608
      %v631 = vcombine.high %v615, %v615
      %v632 = vcombine.high %v622, %v622
      %v633 = vcombine.high %v629, %v629
      %v898 = vunpack.c.l.b16 %v328
      %v899 = vunpack.c.h.b16 %v328
      %v900 = vunpack.c.l.b16 %v329
      %v901 = vunpack.c.h.b16 %v329
      %v902 = vunpack.c.l.b16 %v330
      %v903 = vunpack.c.h.b16 %v330
      %v904 = vunpack.c.l.b16 %v331
      %v905 = vunpack.c.h.b16 %v331
      %v906 = vunpack.c.l.b16 %v332
      %v907 = vunpack.c.h.b16 %v332
      %v908 = vunpack.c.l.b16 %v333
      %v909 = vunpack.c.h.b16 %v333
      %v910 = vunpack.c.l.b16 %v334
      %v911 = vunpack.c.h.b16 %v334
      %v912 = vunpack.c.l.b16 %v335
      %v913 = vunpack.c.h.b16 %v335
      %v914 = vunpack.c.l.b16 %v336
      %v915 = vunpack.c.h.b16 %v336
      %v916 = vunpack.c.l.b16 %v337
      %v917 = vunpack.c.h.b16 %v337
      %v918 = vunpack.c.l.b16 %v338
      %v919 = vunpack.c.h.b16 %v338
      %v920 = vunpack.c.l.b16 %v339
      %v921 = vunpack.c.h.b16 %v339
      %v922 = vunpack.c.l.b16 %v340
      %v923 = vunpack.c.h.b16 %v340
      %v924 = vunpack.c.l.b16 %v341
      %v925 = vunpack.c.h.b16 %v341
      %v926 = vunpack.c.l.b16 %v342
      %v927 = vunpack.c.h.b16 %v342
      %v928 = vunpack.c.l.b16 %v343
      %v929 = vunpack.c.h.b16 %v343
      %v930 = vunpack.c.l.b16 %v344
      %v931 = vunpack.c.h.b16 %v344
      %v932 = vunpack.c.l.b16 %v345
      %v933 = vunpack.c.h.b16 %v345
      %v934 = vunpack.c.l.b16 %v346
      %v935 = vunpack.c.h.b16 %v346
      %v936 = vunpack.c.l.b16 %v347
      %v937 = vunpack.c.h.b16 %v347
      %v938 = vunpack.c.l.b16 %v348
      %v939 = vunpack.c.h.b16 %v348
      %v940 = vunpack.c.l.b16 %v349
      %v941 = vunpack.c.h.b16 %v349
      %v942 = vunpack.c.l.b16 %v350
      %v943 = vunpack.c.h.b16 %v350
      %v944 = vunpack.c.l.b16 %v351
      %v945 = vunpack.c.h.b16 %v351
      %v946 = vunpack.c.l.b16 %v352
      %v947 = vunpack.c.h.b16 %v352
      %v948 = vunpack.c.l.b16 %v353
      %v949 = vunpack.c.h.b16 %v353
      %v950 = vunpack.c.l.b16 %v354
      %v951 = vunpack.c.h.b16 %v354
      %v952 = vunpack.c.l.b16 %v355
      %v953 = vunpack.c.h.b16 %v355
      %v954 = vunpack.c.l.b16 %v356
      %v955 = vunpack.c.h.b16 %v356
      %v956 = vunpack.c.l.b16 %v357
      %v957 = vunpack.c.h.b16 %v357
      %v958 = vunpack.c.l.b16 %v358
      %v959 = vunpack.c.h.b16 %v358
      %v960 = vunpack.c.l.b16 %v359
      %v961 = vunpack.c.h.b16 %v359
      %v962 = vunpack.c.l.b16 %v360
      %v963 = vunpack.c.h.b16 %v360
      %v964 = vunpack.c.l.b16 %v361
      %v965 = vunpack.c.h.b16 %v361
      %v966 = vunpack.c.l.b16 %v362
      %v967 = vunpack.c.h.b16 %v362
      %v968 = vunpack.c.l.b16 %v363
      %v969 = vunpack.c.h.b16 %v363
      %v970 = vunpack.c.l.b16 %v364
      %v971 = vunpack.c.h.b16 %v364
      %v972 = vunpack.c.l.b16 %v365
      %v973 = vunpack.c.h.b16 %v365
      %v974 = vunpack.c.l.b16 %v366
      %v975 = vunpack.c.h.b16 %v366
      %v976 = vunpack.c.l.b16 %v367
      %v977 = vunpack.c.h.b16 %v367
      %v978 = vunpack.c.l.b16 %v368
      %v979 = vunpack.c.h.b16 %v368
      %v980 = vunpack.c.l.b16 %v369
      %v981 = vunpack.c.h.b16 %v369
      %v982 = vunpack.c.l.b16 %v370
      %v983 = vunpack.c.h.b16 %v370
      %v984 = vunpack.c.l.b16 %v371
      %v985 = vunpack.c.h.b16 %v371
      %v986 = vunpack.c.l.b16 %v372
      %v987 = vunpack.c.h.b16 %v372
      %v988 = vunpack.c.l.b16 %v373
      %v989 = vunpack.c.h.b16 %v373
      %v990 = vunpack.c.l.b16 %v374
      %v991 = vunpack.c.h.b16 %v374
      %v992 = vunpack.c.l.b16 %v375
      %v993 = vunpack.c.h.b16 %v375
      %v994 = vunpack.c.l.b16 %v376
      %v995 = vunpack.c.h.b16 %v376
      %v996 = vunpack.c.l.b16 %v377
      %v997 = vunpack.c.h.b16 %v377
      %v998 = vunpack.c.l.b16 %v378
      %v999 = vunpack.c.h.b16 %v378
      %v1000 = vunpack.c.l.b16 %v379
      %v1001 = vunpack.c.h.b16 %v379
      %v1002 = vunpack.c.l.b16 %v380
      %v1003 = vunpack.c.h.b16 %v380
      %v1004 = vunpack.c.l.b16 %v381
      %v1005 = vunpack.c.h.b16 %v381
      %v1006 = vunpack.c.l.b16 %v382
      %v1007 = vunpack.c.h.b16 %v382
      %v1008 = vunpack.c.l.b16 %v383
      %v1009 = vunpack.c.h.b16 %v383
      %v1010 = vunpack.c.l.b16 %v384
      %v1011 = vunpack.c.h.b16 %v384
      %v1012 = vunpack.c.l.b16 %v385
      %v1013 = vunpack.c.h.b16 %v385
      %v1014 = vunpack.c.l.b16 %v386
      %v1015 = vunpack.c.h.b16 %v386
      %v1016 = vunpack.c.l.b16 %v387
      %v1017 = vunpack.c.h.b16 %v387
      %v1018 = vunpack.c.l.b16 %v388
      %v1019 = vunpack.c.h.b16 %v388
      %v1020 = vunpack.c.l.b16 %v389
      %v1021 = vunpack.c.h.b16 %v389
      %v1022 = vunpack.c.l.b16 %v390
      %v1023 = vunpack.c.h.b16 %v390
      %v1024 = vunpack.c.l.b16 %v391
      %v1025 = vunpack.c.h.b16 %v391
      %v1026 = vunpack.c.l.b16 %v392
      %v1027 = vunpack.c.h.b16 %v392
      %v1028 = vunpack.c.l.b16 %v393
      %v1029 = vunpack.c.h.b16 %v393
      %v1030 = vunpack.c.l.b16 %v394
      %v1031 = vunpack.c.h.b16 %v394
      %v1032 = vunpack.c.l.b16 %v395
      %v1033 = vunpack.c.h.b16 %v395
      %v1034 = vunpack.c.l.b16 %v396
      %v1035 = vunpack.c.h.b16 %v396
      %v1036 = vunpack.c.l.b16 %v397
      %v1037 = vunpack.c.h.b16 %v397
      %v1038 = vunpack.c.l.b16 %v398
      %v1039 = vunpack.c.h.b16 %v398
      %v1040 = vunpack.c.l.b16 %v399
      %v1041 = vunpack.c.h.b16 %v399
      %v1042 = vunpack.c.l.b16 %v400
      %v1043 = vunpack.c.h.b16 %v400
      %v1044 = vunpack.c.l.b16 %v401
      %v1045 = vunpack.c.h.b16 %v401
      %v1046 = vunpack.c.l.b16 %v402
      %v1047 = vunpack.c.h.b16 %v402
      %v1048 = vunpack.c.l.b16 %v403
      %v1049 = vunpack.c.h.b16 %v403
      %v1050 = vunpack.c.l.b16 %v404
      %v1051 = vunpack.c.h.b16 %v404
      %v1052 = vunpack.c.l.b16 %v405
      %v1053 = vunpack.c.h.b16 %v405
      %v1054 = vunpack.c.l.b16 %v406
      %v1055 = vunpack.c.h.b16 %v406
      %v1056 = vunpack.c.l.b16 %v407
      %v1057 = vunpack.c.h.b16 %v407
      %v1058 = vunpack.c.l.b16 %v408
      %v1059 = vunpack.c.h.b16 %v408
      %v1060 = vunpack.c.l.b16 %v409
      %v1061 = vunpack.c.h.b16 %v409
      %v1062 = vunpack.c.l.b16 %v410
      %v1063 = vunpack.c.h.b16 %v410
      %v1064 = vunpack.c.l.b16 %v411
      %v1065 = vunpack.c.h.b16 %v411
      %v1066 = vunpack.c.l.b16 %v412
      %v1067 = vunpack.c.h.b16 %v412
      %v1068 = vunpack.c.l.b16 %v413
      %v1069 = vunpack.c.h.b16 %v413
      %v1070 = vunpack.c.l.b16 %v414
      %v1071 = vunpack.c.h.b16 %v414
      %v1072 = vunpack.c.l.b16 %v415
      %v1073 = vunpack.c.h.b16 %v415
      %v1074 = vunpack.c.l.b16 %v416
      %v1075 = vunpack.c.h.b16 %v416
      %v1076 = vunpack.c.l.b16 %v417
      %v1077 = vunpack.c.h.b16 %v417
      %v1078 = vunpack.c.l.b16 %v418
      %v1079 = vunpack.c.h.b16 %v418
      %v1080 = vunpack.c.l.b16 %v419
      %v1081 = vunpack.c.h.b16 %v419
      %v1082 = vunpack.c.l.b16 %v420
      %v1083 = vunpack.c.h.b16 %v420
      %v1084 = vunpack.c.l.b16 %v421
      %v1085 = vunpack.c.h.b16 %v421
      %v1086 = vunpack.c.l.b16 %v422
      %v1087 = vunpack.c.h.b16 %v422
      %v1088 = vunpack.c.l.b16 %v423
      %v1089 = vunpack.c.h.b16 %v423
      %v1090 = vunpack.c.l.b16 %v424
      %v1091 = vunpack.c.h.b16 %v424
      %v1092 = vunpack.c.l.b16 %v425
      %v1093 = vunpack.c.h.b16 %v425
      %v1094 = vunpack.c.l.b16 %v426
      %v1095 = vunpack.c.h.b16 %v426
      %v1096 = vunpack.c.l.b16 %v427
      %v1097 = vunpack.c.h.b16 %v427
      %v1098 = vunpack.c.l.b16 %v428
      %v1099 = vunpack.c.h.b16 %v428
      %v1100 = vunpack.c.l.b16 %v429
      %v1101 = vunpack.c.h.b16 %v429
      %v1102 = vunpack.c.l.b16 %v430
      %v1103 = vunpack.c.h.b16 %v430
      %v1104 = vunpack.c.l.b16 %v431
      %v1105 = vunpack.c.h.b16 %v431
      %v1106 = vunpack.c.l.b16 %v432
      %v1107 = vunpack.c.h.b16 %v432
      %v1108 = vunpack.c.l.b16 %v433
      %v1109 = vunpack.c.h.b16 %v433
      %v1110 = vunpack.c.l.b16 %v434
      %v1111 = vunpack.c.h.b16 %v434
      %v1112 = vunpack.c.l.b16 %v435
      %v1113 = vunpack.c.h.b16 %v435
      %v1114 = vunpack.c.l.b16 %v436
      %v1115 = vunpack.c.h.b16 %v436
      %v1116 = vunpack.c.l.b16 %v437
      %v1117 = vunpack.c.h.b16 %v437
      %v1118 = vunpack.c.l.b16 %v438
      %v1119 = vunpack.c.h.b16 %v438
      %v1120 = vunpack.c.l.b16 %v439
      %v1121 = vunpack.c.h.b16 %v439
      %v1122 = vunpack.c.l.b16 %v440
      %v1123 = vunpack.c.h.b16 %v440
      %v1124 = vunpack.c.l.b16 %v441
      %v1125 = vunpack.c.h.b16 %v441
      %v1126 = vunpack.c.l.b16 %v442
      %v1127 = vunpack.c.h.b16 %v442
      %v1128 = vunpack.c.l.b16 %v443
      %v1129 = vunpack.c.h.b16 %v443
      %v1130 = vunpack.c.l.b16 %v444
      %v1131 = vunpack.c.h.b16 %v444
      %v1132 = vunpack.c.l.b16 %v445
      %v1133 = vunpack.c.h.b16 %v445
      %v1134 = vunpack.c.l.b16 %v446
      %v1135 = vunpack.c.h.b16 %v446
      %v1136 = vunpack.c.l.b16 %v447
      %v1137 = vunpack.c.h.b16 %v447
      %v1138 = vunpack.c.l.b16 %v448
      %v1139 = vunpack.c.h.b16 %v448
      %v1140 = vunpack.c.l.b16 %v449
      %v1141 = vunpack.c.h.b16 %v449
      %v1142 = vunpack.c.l.b16 %v450
      %v1143 = vunpack.c.h.b16 %v450
      %v1144 = vunpack.c.l.b16 %v451
      %v1145 = vunpack.c.h.b16 %v451
      %v1146 = vunpack.c.l.b16 %v452
      %v1147 = vunpack.c.h.b16 %v452
      %v1148 = vunpack.c.l.b16 %v453
      %v1149 = vunpack.c.h.b16 %v453
      %v1150 = vunpack.c.l.b16 %v454
      %v1151 = vunpack.c.h.b16 %v454
      %v1152 = vunpack.c.l.b16 %v455
      %v1153 = vunpack.c.h.b16 %v455
      %v1154 = vunpack.c.l.b16 %v456
      %v1155 = vunpack.c.h.b16 %v456
      %v1156 = vunpack.c.l.b16 %v457
      %v1157 = vunpack.c.h.b16 %v457
      %v1158 = vunpack.c.l.b16 %v458
      %v1159 = vunpack.c.h.b16 %v458
      %v1160 = vunpack.c.l.b16 %v459
      %v1161 = vunpack.c.h.b16 %v459
      %v1162 = vunpack.c.l.b16 %v460
      %v1163 = vunpack.c.h.b16 %v460
      %v1164 = vunpack.c.l.b16 %v461
      %v1165 = vunpack.c.h.b16 %v461
      %v1166 = vunpack.c.l.b16 %v462
      %v1167 = vunpack.c.h.b16 %v462
      %v1168 = vunpack.c.l.b16 %v463
      %v1169 = vunpack.c.h.b16 %v463
      %v1170 = vunpack.c.l.b16 %v464
      %v1171 = vunpack.c.h.b16 %v464
      %v1172 = vunpack.c.l.b16 %v465
      %v1173 = vunpack.c.h.b16 %v465
      %v1174 = vunpack.c.l.b16 %v466
      %v1175 = vunpack.c.h.b16 %v466
      %v1176 = vunpack.c.l.b16 %v467
      %v1177 = vunpack.c.h.b16 %v467
      %v1178 = vunpack.c.l.b16 %v468
      %v1179 = vunpack.c.h.b16 %v468
      %v1180 = vunpack.c.l.b16 %v469
      %v1181 = vunpack.c.h.b16 %v469
      %v1182 = vunpack.c.l.b16 %v470
      %v1183 = vunpack.c.h.b16 %v470
      %v1184 = vunpack.c.l.b16 %v471
      %v1185 = vunpack.c.h.b16 %v471
      %v1186 = vunpack.c.l.b16 %v472
      %v1187 = vunpack.c.h.b16 %v472
      %v1188 = vunpack.c.l.b16 %v473
      %v1189 = vunpack.c.h.b16 %v473
      %v1190 = vunpack.c.l.b16 %v474
      %v1191 = vunpack.c.h.b16 %v474
      %v1192 = vunpack.c.l.b16 %v475
      %v1193 = vunpack.c.h.b16 %v475
      %v1194 = vunpack.c.l.b16 %v476
      %v1195 = vunpack.c.h.b16 %v476
      %v1196 = vunpack.c.l.b16 %v477
      %v1197 = vunpack.c.h.b16 %v477
      %v1198 = vunpack.c.l.b16 %v478
      %v1199 = vunpack.c.h.b16 %v478
      %v1200 = vunpack.c.l.b16 %v479
      %v1201 = vunpack.c.h.b16 %v479
      %v1202 = vunpack.c.l.b16 %v480
      %v1203 = vunpack.c.h.b16 %v480
      %v1204 = vunpack.c.l.b16 %v481
      %v1205 = vunpack.c.h.b16 %v481
      %v1206 = vunpack.c.l.b16 %v482
      %v1207 = vunpack.c.h.b16 %v482
      %v1208 = vunpack.c.l.b16 %v483
      %v1209 = vunpack.c.h.b16 %v483
      %v1210 = vunpack.c.l.b16 %v484
      %v1211 = vunpack.c.h.b16 %v484
      %v1212 = vunpack.c.l.b16 %v485
      %v1213 = vunpack.c.h.b16 %v485
      %v1214 = vunpack.c.l.b16 %v486
      %v1215 = vunpack.c.h.b16 %v486
      %v1216 = vunpack.c.l.b16 %v487
      %v1217 = vunpack.c.h.b16 %v487
      %v1218 = vunpack.c.l.b16 %v488
      %v1219 = vunpack.c.h.b16 %v488
      %v1220 = vunpack.c.l.b16 %v489
      %v1221 = vunpack.c.h.b16 %v489
      %v1222 = vunpack.c.l.b16 %v490
      %v1223 = vunpack.c.h.b16 %v490
      %v1224 = vunpack.c.l.b16 %v491
      %v1225 = vunpack.c.h.b16 %v491
      %v1226 = vunpack.c.l.b16 %v492
      %v1227 = vunpack.c.h.b16 %v492
      %v1228 = vunpack.c.l.b16 %v493
      %v1229 = vunpack.c.h.b16 %v493
      %v1230 = vunpack.c.l.b16 %v494
      %v1231 = vunpack.c.h.b16 %v494
      %v1232 = vunpack.c.l.b16 %v495
      %v1233 = vunpack.c.h.b16 %v495
      %v1234 = vunpack.c.l.b16 %v496
      %v1235 = vunpack.c.h.b16 %v496
      %v1236 = vunpack.c.l.b16 %v497
      %v1237 = vunpack.c.h.b16 %v497
      %v1238 = vunpack.c.l.b16 %v498
      %v1239 = vunpack.c.h.b16 %v498
      %v1240 = vunpack.c.l.b16 %v499
      %v1241 = vunpack.c.h.b16 %v499
      %v1242 = vunpack.c.l.b16 %v500
      %v1243 = vunpack.c.h.b16 %v500
      %v1244 = vunpack.c.l.b16 %v501
      %v1245 = vunpack.c.h.b16 %v501
      %v1246 = vunpack.c.l.b16 %v502
      %v1247 = vunpack.c.h.b16 %v502
      %v1248 = vunpack.c.l.b16 %v503
      %v1249 = vunpack.c.h.b16 %v503
      %v1250 = vunpack.c.l.b16 %v504
      %v1251 = vunpack.c.h.b16 %v504
      %v1252 = vunpack.c.l.b16 %v505
      %v1253 = vunpack.c.h.b16 %v505
      %v1254 = vunpack.c.l.b16 %v506
      %v1255 = vunpack.c.h.b16 %v506
      %v1256 = vunpack.c.l.b16 %v507
      %v1257 = vunpack.c.h.b16 %v507
      %v1258 = vunpack.c.l.b16 %v508
      %v1259 = vunpack.c.h.b16 %v508
      %v1260 = vunpack.c.l.b16 %v509
      %v1261 = vunpack.c.h.b16 %v509
      %v1262 = vunpack.c.l.b16 %v510
      %v1263 = vunpack.c.h.b16 %v510
      %v1264 = vunpack.c.l.b16 %v511
      %v1265 = vunpack.c.h.b16 %v511
      %v1266 = vunpack.c.l.b16 %v512
      %v1267 = vunpack.c.h.b16 %v512
      %v1268 = vunpack.c.l.b16 %v513
      %v1269 = vunpack.c.h.b16 %v513
      %v1270 = vunpack.c.l.b16 %v514
      %v1271 = vunpack.c.h.b16 %v514
      %v1272 = vunpack.c.l.b16 %v515
      %v1273 = vunpack.c.h.b16 %v515
      %v1274 = vunpack.c.l.b16 %v516
      %v1275 = vunpack.c.h.b16 %v516
      %v1276 = vunpack.c.l.b16 %v517
      %v1277 = vunpack.c.h.b16 %v517
      %v1278 = vunpack.c.l.b16 %v518
      %v1279 = vunpack.c.h.b16 %v518
      %v1280 = vunpack.c.l.b16 %v519
      %v1281 = vunpack.c.h.b16 %v519
      %v1282 = vunpack.c.l.b16 %v520
      %v1283 = vunpack.c.h.b16 %v520
      %v1284 = vunpack.c.l.b16 %v521
      %v1285 = vunpack.c.h.b16 %v521
      %v1286 = vunpack.c.l.b16 %v522
      %v1287 = vunpack.c.h.b16 %v522
      %v1288 = vunpack.c.l.b16 %v523
      %v1289 = vunpack.c.h.b16 %v523
      %v1290 = vunpack.c.l.b16 %v524
      %v1291 = vunpack.c.h.b16 %v524
      %v1292 = vunpack.c.l.b16 %v525
      %v1293 = vunpack.c.h.b16 %v525
      %v1294 = vunpack.c.l.b16 %v526
      %v1295 = vunpack.c.h.b16 %v526
      %v1296 = vunpack.c.l.b16 %v527
      %v1297 = vunpack.c.h.b16 %v527
      %v1298 = vunpack.c.l.b16 %v528
      %v1299 = vunpack.c.h.b16 %v528
      %v1300 = vunpack.c.l.b16 %v529
      %v1301 = vunpack.c.h.b16 %v529
      %v1302 = vunpack.c.l.b16 %v530
      %v1303 = vunpack.c.h.b16 %v530
      %v1304 = vunpack.c.l.b16 %v531
      %v1305 = vunpack.c.h.b16 %v531
      %v1306 = vunpack.c.l.b16 %v532
      %v1307 = vunpack.c.h.b16 %v532
      %v1308 = vunpack.c.l.b16 %v533
      %v1309 = vunpack.c.h.b16 %v533
      %v1310 = vunpack.c.l.b16 %v534
      %v1311 = vunpack.c.h.b16 %v534
      %v1312 = vunpack.c.l.b16 %v535
      %v1313 = vunpack.c.h.b16 %v535
      %v1314 = vunpack.c.l.b16 %v536
      %v1315 = vunpack.c.h.b16 %v536
      %v1316 = vunpack.c.l.b16 %v537
      %v1317 = vunpack.c.h.b16 %v537
      %v1318 = vunpack.c.l.b16 %v538
      %v1319 = vunpack.c.h.b16 %v538
      %v1320 = vunpack.c.l.b16 %v539
      %v1321 = vunpack.c.h.b16 %v539
      %v1322 = vunpack.c.l.b16 %v540
      %v1323 = vunpack.c.h.b16 %v540
      %v1324 = vunpack.c.l.b16 %v541
      %v1325 = vunpack.c.h.b16 %v541
      %v1326 = vunpack.c.l.b16 %v542
      %v1327 = vunpack.c.h.b16 %v542
      %v1328 = vunpack.c.l.b16 %v543
      %v1329 = vunpack.c.h.b16 %v543
      %v1330 = vunpack.c.l.b16 %v544
      %v1331 = vunpack.c.h.b16 %v544
      %v1332 = vunpack.c.l.b16 %v545
      %v1333 = vunpack.c.h.b16 %v545
      %v1334 = vunpack.c.l.b16 %v546
      %v1335 = vunpack.c.h.b16 %v546
      %v1336 = vunpack.c.l.b16 %v547
      %v1337 = vunpack.c.h.b16 %v547
      %v1338 = vunpack.c.l.b16 %v548
      %v1339 = vunpack.c.h.b16 %v548
      %v1340 = vunpack.c.l.b16 %v549
      %v1341 = vunpack.c.h.b16 %v549
      %v1342 = vunpack.c.l.b16 %v550
      %v1343 = vunpack.c.h.b16 %v550
      %v1344 = vunpack.c.l.b16 %v551
      %v1345 = vunpack.c.h.b16 %v551
      %v1346 = vunpack.c.l.b16 %v552
      %v1347 = vunpack.c.h.b16 %v552
      %v1348 = vunpack.c.l.b16 %v553
      %v1349 = vunpack.c.h.b16 %v553
      %v1350 = vunpack.c.l.b16 %v554
      %v1351 = vunpack.c.h.b16 %v554
      %v1352 = vunpack.c.l.b16 %v555
      %v1353 = vunpack.c.h.b16 %v555
      %v1354 = vunpack.c.l.b16 %v556
      %v1355 = vunpack.c.h.b16 %v556
      %v1356 = vunpack.c.l.b16 %v557
      %v1357 = vunpack.c.h.b16 %v557
      %v1358 = vunpack.c.l.b16 %v558
      %v1359 = vunpack.c.h.b16 %v558
      %v1360 = vunpack.c.l.b16 %v559
      %v1361 = vunpack.c.h.b16 %v559
      %v1362 = vunpack.c.l.b16 %v560
      %v1363 = vunpack.c.h.b16 %v560
      %v1364 = vunpack.c.l.b16 %v561
      %v1365 = vunpack.c.h.b16 %v561
      %v1366 = vunpack.c.l.b16 %v562
      %v1367 = vunpack.c.h.b16 %v562
      %v1368 = vunpack.c.l.b16 %v563
      %v1369 = vunpack.c.h.b16 %v563
      %v1370 = vunpack.c.l.b16 %v564
      %v1371 = vunpack.c.h.b16 %v564
      %v1372 = vunpack.c.l.b16 %v565
      %v1373 = vunpack.c.h.b16 %v565
      %v1374 = vunpack.c.l.b16 %v566
      %v1375 = vunpack.c.h.b16 %v566
      %v1376 = vunpack.c.l.b16 %v567
      %v1377 = vunpack.c.h.b16 %v567
      %v1378 = vunpack.c.l.b16 %v568
      %v1379 = vunpack.c.h.b16 %v568
      %v1380 = vunpack.c.l.b16 %v569
      %v1381 = vunpack.c.h.b16 %v569
      %v1382 = vunpack.c.l.b16 %v570
      %v1383 = vunpack.c.h.b16 %v570
      %v1384 = vunpack.c.l.b16 %v571
      %v1385 = vunpack.c.h.b16 %v571
      %v1386 = vunpack.c.l.b16 %v572
      %v1387 = vunpack.c.h.b16 %v572
      %v1388 = vunpack.c.l.b16 %v573
      %v1389 = vunpack.c.h.b16 %v573
      %v1390 = vunpack.c.l.b16 %v574
      %v1391 = vunpack.c.h.b16 %v574
      %v1392 = vunpack.c.l.b16 %v575
      %v1393 = vunpack.c.h.b16 %v575
      %v1394 = vunpack.c.l.b16 %v576
      %v1395 = vunpack.c.h.b16 %v576
      %v1396 = vunpack.c.l.b16 %v577
      %v1397 = vunpack.c.h.b16 %v577
      %v1398 = vunpack.c.l.b16 %v578
      %v1399 = vunpack.c.h.b16 %v578
      %v1400 = vunpack.c.l.b16 %v579
      %v1401 = vunpack.c.h.b16 %v579
      %v1402 = vunpack.c.l.b16 %v580
      %v1403 = vunpack.c.h.b16 %v580
      %v1404 = vunpack.c.l.b16 %v581
      %v1405 = vunpack.c.h.b16 %v581
      %v1406 = vunpack.c.l.b16 %v582
      %v1407 = vunpack.c.h.b16 %v582
      %v1408 = vunpack.c.l.b16 %v583
      %v1409 = vunpack.c.h.b16 %v583
      %v1410 = vpack.c.b16 %v902, %v898
      %v1411 = vpack.c.b16 %v903, %v899
      %v1412 = vpack.c.b16 %v904, %v900
      %v1413 = vpack.c.b16 %v905, %v901
      %v1414 = vpack.c.b16 %v910, %v906
      %v1415 = vpack.c.b16 %v911, %v907
      %v1416 = vpack.c.b16 %v912, %v908
      %v1417 = vpack.c.b16 %v913, %v909
      %v1418 = vpack.c.b16 %v918, %v914
      %v1419 = vpack.c.b16 %v919, %v915
      %v1420 = vpack.c.b16 %v920, %v916
      %v1421 = vpack.c.b16 %v921, %v917
      %v1422 = vpack.c.b16 %v926, %v922
      %v1423 = vpack.c.b16 %v927, %v923
      %v1424 = vpack.c.b16 %v928, %v924
      %v1425 = vpack.c.b16 %v929, %v925
      %v1426 = vpack.c.b16 %v934, %v930
      %v1427 = vpack.c.b16 %v935, %v931
      %v1428 = vpack.c.b16 %v936, %v932
      %v1429 = vpack.c.b16 %v937, %v933
      %v1430 = vpack.c.b16 %v942, %v938
      %v1431 = vpack.c.b16 %v943, %v939
      %v1432 = vpack.c.b16 %v944, %v940
      %v1433 = vpack.c.b16 %v945, %v941
      %v1434 = vpack.c.b16 %v950, %v946
      %v1435 = vpack.c.b16 %v951, %v947
      %v1436 = vpack.c.b16 %v952, %v948
      %v1437 = vpack.c.b16 %v953, %v949
      %v1438 = vpack.c.b16 %v958, %v954
      %v1439 = vpack.c.b16 %v959, %v955
      %v1440 = vpack.c.b16 %v960, %v956
      %v1441 = vpack.c.b16 %v961, %v957
      %v1442 = vpack.c.b16 %v966, %v962
      %v1443 = vpack.c.b16 %v967, %v963
      %v1444 = vpack.c.b16 %v968, %v964
      %v1445 = vpack.c.b16 %v969, %v965
      %v1446 = vpack.c.b16 %v974, %v970
      %v1447 = vpack.c.b16 %v975, %v971
      %v1448 = vpack.c.b16 %v976, %v972
      %v1449 = vpack.c.b16 %v977, %v973
      %v1450 = vpack.c.b16 %v982, %v978
      %v1451 = vpack.c.b16 %v983, %v979
      %v1452 = vpack.c.b16 %v984, %v980
      %v1453 = vpack.c.b16 %v985, %v981
      %v1454 = vpack.c.b16 %v990, %v986
      %v1455 = vpack.c.b16 %v991, %v987
      %v1456 = vpack.c.b16 %v992, %v988
      %v1457 = vpack.c.b16 %v993, %v989
      %v1458 = vpack.c.b16 %v998, %v994
      %v1459 = vpack.c.b16 %v999, %v995
      %v1460 = vpack.c.b16 %v1000, %v996
      %v1461 = vpack.c.b16 %v1001, %v997
      %v1462 = vpack.c.b16 %v1006, %v1002
      %v1463 = vpack.c.b16 %v1007, %v1003
      %v1464 = vpack.c.b16 %v1008, %v1004
      %v1465 = vpack.c.b16 %v1009, %v1005
      %v1466 = vpack.c.b16 %v1014, %v1010
      %v1467 = vpack.c.b16 %v1015, %v1011
      %v1468 = vpack.c.b16 %v1016, %v1012
      %v1469 = vpack.c.b16 %v1017, %v1013
      %v1470 = vpack.c.b16 %v1022, %v1018
      %v1471 = vpack.c.b16 %v1023, %v1019
      %v1472 = vpack.c.b16 %v1024, %v1020
      %v1473 = vpack.c.b16 %v1025, %v1021
      %v1474 = vpack.c.b16 %v1030, %v1026
      %v1475 = vpack.c.b16 %v1031, %v1027
      %v1476 = vpack.c.b16 %v1032, %v1028
      %v1477 = vpack.c.b16 %v1033, %v1029
      %v1478 = vpack.c.b16 %v1038, %v1034
      %v1479 = vpack.c.b16 %v1039, %v1035
      %v1480 = vpack.c.b16 %v1040, %v1036
      %v1481 = vpack.c.b16 %v1041, %v1037
      %v1482 = vpack.c.b16 %v1046, %v1042
      %v1483 = vpack.c.b16 %v1047, %v1043
      %v1484 = vpack.c.b16 %v1048, %v1044
      %v1485 = vpack.c.b16 %v1049, %v1045
      %v1486 = vpack.c.b16 %v1054, %v1050
      %v1487 = vpack.c.b16 %v1055, %v1051
      %v1488 = vpack.c.b16 %v1056, %v1052
      %v1489 = vpack.c.b16 %v1057, %v1053
      %v1490 = vpack.c.b16 %v1062, %v1058
      %v1491 = vpack.c.b16 %v1063, %v1059
      %v1492 = vpack.c.b16 %v1064, %v1060
      %v1493 = vpack.c.b16 %v1065, %v1061
      %v1494 = vpack.c.b16 %v1070, %v1066
      %v1495 = vpack.c.b16 %v1071, %v1067
      %v1496 = vpack.c.b16 %v1072, %v1068
      %v1497 = vpack.c.b16 %v1073, %v1069
      %v1498 = vpack.c.b16 %v1078, %v1074
      %v1499 = vpack.c.b16 %v1079, %v1075
      %v1500 = vpack.c.b16 %v1080, %v1076
      %v1501 = vpack.c.b16 %v1081, %v1077
      %v1502 = vpack.c.b16 %v1086, %v1082
      %v1503 = vpack.c.b16 %v1087, %v1083
      %v1504 = vpack.c.b16 %v1088, %v1084
      %v1505 = vpack.c.b16 %v1089, %v1085
      %v1506 = vpack.c.b16 %v1094, %v1090
      %v1507 = vpack.c.b16 %v1095, %v1091
      %v1508 = vpack.c.b16 %v1096, %v1092
      %v1509 = vpack.c.b16 %v1097, %v1093
      %v1510 = vpack.c.b16 %v1102, %v1098
      %v1511 = vpack.c.b16 %v1103, %v1099
      %v1512 = vpack.c.b16 %v1104, %v1100
      %v1513 = vpack.c.b16 %v1105, %v1101
      %v1514 = vpack.c.b16 %v1110, %v1106
      %v1515 = vpack.c.b16 %v1111, %v1107
      %v1516 = vpack.c.b16 %v1112, %v1108
      %v1517 = vpack.c.b16 %v1113, %v1109
      %v1518 = vpack.c.b16 %v1118, %v1114
      %v1519 = vpack.c.b16 %v1119, %v1115
      %v1520 = vpack.c.b16 %v1120, %v1116
      %v1521 = vpack.c.b16 %v1121, %v1117
      %v1522 = vpack.c.b16 %v1126, %v1122
      %v1523 = vpack.c.b16 %v1127, %v1123
      %v1524 = vpack.c.b16 %v1128, %v1124
      %v1525 = vpack.c.b16 %v1129, %v1125
      %v1526 = vpack.c.b16 %v1134, %v1130
      %v1527 = vpack.c.b16 %v1135, %v1131
      %v1528 = vpack.c.b16 %v1136, %v1132
      %v1529 = vpack.c.b16 %v1137, %v1133
      %v1530 = vpack.c.b16 %v1142, %v1138
      %v1531 = vpack.c.b16 %v1143, %v1139
      %v1532 = vpack.c.b16 %v1144, %v1140
      %v1533 = vpack.c.b16 %v1145, %v1141
      %v1534 = vpack.c.b16 %v1150, %v1146
      %v1535 = vpack.c.b16 %v1151, %v1147
      %v1536 = vpack.c.b16 %v1152, %v1148
      %v1537 = vpack.c.b16 %v1153, %v1149
      %v1538 = vpack.c.b16 %v1158, %v1154
      %v1539 = vpack.c.b16 %v1159, %v1155
      %v1540 = vpack.c.b16 %v1160, %v1156
      %v1541 = vpack.c.b16 %v1161, %v1157
      %v1542 = vpack.c.b16 %v1166, %v1162
      %v1543 = vpack.c.b16 %v1167, %v1163
      %v1544 = vpack.c.b16 %v1168, %v1164
      %v1545 = vpack.c.b16 %v1169, %v1165
      %v1546 = vpack.c.b16 %v1174, %v1170
      %v1547 = vpack.c.b16 %v1175, %v1171
      %v1548 = vpack.c.b16 %v1176, %v1172
      %v1549 = vpack.c.b16 %v1177, %v1173
      %v1550 = vpack.c.b16 %v1182, %v1178
      %v1551 = vpack.c.b16 %v1183, %v1179
      %v1552 = vpack.c.b16 %v1184, %v1180
      %v1553 = vpack.c.b16 %v1185, %v1181
      %v1554 = vpack.c.b16 %v1190, %v1186
      %v1555 = vpack.c.b16 %v1191, %v1187
      %v1556 = vpack.c.b16 %v1192, %v1188
      %v1557 = vpack.c.b16 %v1193, %v1189
      %v1558 = vpack.c.b16 %v1198, %v1194
      %v1559 = vpack.c.b16 %v1199, %v1195
      %v1560 = vpack.c.b16 %v1200, %v1196
      %v1561 = vpack.c.b16 %v1201, %v1197
      %v1562 = vpack.c.b16 %v1206, %v1202
      %v1563 = vpack.c.b16 %v1207, %v1203
      %v1564 = vpack.c.b16 %v1208, %v1204
      %v1565 = vpack.c.b16 %v1209, %v1205
      %v1566 = vpack.c.b16 %v1214, %v1210
      %v1567 = vpack.c.b16 %v1215, %v1211
      %v1568 = vpack.c.b16 %v1216, %v1212
      %v1569 = vpack.c.b16 %v1217, %v1213
      %v1570 = vpack.c.b16 %v1222, %v1218
      %v1571 = vpack.c.b16 %v1223, %v1219
      %v1572 = vpack.c.b16 %v1224, %v1220
      %v1573 = vpack.c.b16 %v1225, %v1221
      %v1574 = vpack.c.b16 %v1230, %v1226
      %v1575 = vpack.c.b16 %v1231, %v1227
      %v1576 = vpack.c.b16 %v1232, %v1228
      %v1577 = vpack.c.b16 %v1233, %v1229
      %v1578 = vpack.c.b16 %v1238, %v1234
      %v1579 = vpack.c.b16 %v1239, %v1235
      %v1580 = vpack.c.b16 %v1240, %v1236
      %v1581 = vpack.c.b16 %v1241, %v1237
      %v1582 = vpack.c.b16 %v1246, %v1242
      %v1583 = vpack.c.b16 %v1247, %v1243
      %v1584 = vpack.c.b16 %v1248, %v1244
      %v1585 = vpack.c.b16 %v1249, %v1245
      %v1586 = vpack.c.b16 %v1254, %v1250
      %v1587 = vpack.c.b16 %v1255, %v1251
      %v1588 = vpack.c.b16 %v1256, %v1252
      %v1589 = vpack.c.b16 %v1257, %v1253
      %v1590 = vpack.c.b16 %v1262, %v1258
      %v1591 = vpack.c.b16 %v1263, %v1259
      %v1592 = vpack.c.b16 %v1264, %v1260
      %v1593 = vpack.c.b16 %v1265, %v1261
      %v1594 = vpack.c.b16 %v1270, %v1266
      %v1595 = vpack.c.b16 %v1271, %v1267
      %v1596 = vpack.c.b16 %v1272, %v1268
      %v1597 = vpack.c.b16 %v1273, %v1269
      %v1598 = vpack.c.b16 %v1278, %v1274
      %v1599 = vpack.c.b16 %v1279, %v1275
      %v1600 = vpack.c.b16 %v1280, %v1276
      %v1601 = vpack.c.b16 %v1281, %v1277
      %v1602 = vpack.c.b16 %v1286, %v1282
      %v1603 = vpack.c.b16 %v1287, %v1283
      %v1604 = vpack.c.b16 %v1288, %v1284
      %v1605 = vpack.c.b16 %v1289, %v1285
      %v1606 = vpack.c.b16 %v1294, %v1290
      %v1607 = vpack.c.b16 %v1295, %v1291
      %v1608 = vpack.c.b16 %v1296, %v1292
      %v1609 = vpack.c.b16 %v1297, %v1293
      %v1610 = vpack.c.b16 %v1302, %v1298
      %v1611 = vpack.c.b16 %v1303, %v1299
      %v1612 = vpack.c.b16 %v1304, %v1300
      %v1613 = vpack.c.b16 %v1305, %v1301
      %v1614 = vpack.c.b16 %v1310, %v1306
      %v1615 = vpack.c.b16 %v1311, %v1307
      %v1616 = vpack.c.b16 %v1312, %v1308
      %v1617 = vpack.c.b16 %v1313, %v1309
      %v1618 = vpack.c.b16 %v1318, %v1314
      %v1619 = vpack.c.b16 %v1319, %v1315
      %v1620 = vpack.c.b16 %v1320, %v1316
      %v1621 = vpack.c.b16 %v1321, %v1317
      %v1622 = vpack.c.b16 %v1326, %v1322
      %v1623 = vpack.c.b16 %v1327, %v1323
      %v1624 = vpack.c.b16 %v1328, %v1324
      %v1625 = vpack.c.b16 %v1329, %v1325
      %v1626 = vpack.c.b16 %v1334, %v1330
      %v1627 = vpack.c.b16 %v1335, %v1331
      %v1628 = vpack.c.b16 %v1336, %v1332
      %v1629 = vpack.c.b16 %v1337, %v1333
      %v1630 = vpack.c.b16 %v1342, %v1338
      %v1631 = vpack.c.b16 %v1343, %v1339
      %v1632 = vpack.c.b16 %v1344, %v1340
      %v1633 = vpack.c.b16 %v1345, %v1341
      %v1634 = vpack.c.b16 %v1350, %v1346
      %v1635 = vpack.c.b16 %v1351, %v1347
      %v1636 = vpack.c.b16 %v1352, %v1348
      %v1637 = vpack.c.b16 %v1353, %v1349
      %v1638 = vpack.c.b16 %v1358, %v1354
      %v1639 = vpack.c.b16 %v1359, %v1355
      %v1640 = vpack.c.b16 %v1360, %v1356
      %v1641 = vpack.c.b16 %v1361, %v1357
      %v1642 = vpack.c.b16 %v1366, %v1362
      %v1643 = vpack.c.b16 %v1367, %v1363
      %v1644 = vpack.c.b16 %v1368, %v1364
      %v1645 = vpack.c.b16 %v1369, %v1365
      %v1646 = vpack.c.b16 %v1374, %v1370
      %v1647 = vpack.c.b16 %v1375, %v1371
      %v1648 = vpack.c.b16 %v1376, %v1372
      %v1649 = vpack.c.b16 %v1377, %v1373
      %v1650 = vpack.c.b16 %v1382, %v1378
      %v1651 = vpack.c.b16 %v1383, %v1379
      %v1652 = vpack.c.b16 %v1384, %v1380
      %v1653 = vpack.c.b16 %v1385, %v1381
      %v1654 = vpack.c.b16 %v1390, %v1386
      %v1655 = vpack.c.b16 %v1391, %v1387
      %v1656 = vpack.c.b16 %v1392, %v1388
      %v1657 = vpack.c.b16 %v1393, %v1389
      %v1658 = vpack.c.b16 %v1398, %v1394
      %v1659 = vpack.c.b16 %v1399, %v1395
      %v1660 = vpack.c.b16 %v1400, %v1396
      %v1661 = vpack.c.b16 %v1401, %v1397
      %v1662 = vpack.c.b16 %v1406, %v1402
      %v1663 = vpack.c.b16 %v1407, %v1403
      %v1664 = vpack.c.b16 %v1408, %v1404
      %v1665 = vpack.c.b16 %v1409, %v1405
      %1922 = vmatprep.subr.bf16.mxu0 %v1411
      %1923 = vmatpush1.bf16.msra.mxu0 %v1410
      %1924 = vmatprep.subr.bf16.mxu0 %v1415
      %1925 = vmatpush1.bf16.msra.mxu0 %v1414
      %1926 = vmatprep.subr.bf16.mxu0 %v1419
      %1927 = vmatpush1.bf16.msra.mxu0 %v1418
      %1928 = vmatprep.subr.bf16.mxu0 %v1423
      %1929 = vmatpush1.bf16.msra.mxu0 %v1422
      %1930 = vmatprep.subr.bf16.mxu0 %v1427
      %1931 = vmatpush1.bf16.msra.mxu0 %v1426
      %1932 = vmatprep.subr.bf16.mxu0 %v1431
      %1933 = vmatpush1.bf16.msra.mxu0 %v1430
      %1934 = vmatprep.subr.bf16.mxu0 %v1435
      %1935 = vmatpush1.bf16.msra.mxu0 %v1434
      %1936 = vmatprep.subr.bf16.mxu0 %v1439
      %1937 = vmatpush1.bf16.msra.mxu0 %v1438
      %1938 = vmatprep.subr.bf16.mxu0 %v1443
      %1939 = vmatpush1.bf16.msra.mxu0 %v1442
      %1940 = vmatprep.subr.bf16.mxu0 %v1447
      %1941 = vmatpush1.bf16.msra.mxu0 %v1446
      %1942 = vmatprep.subr.bf16.mxu0 %v1451
      %1943 = vmatpush1.bf16.msra.mxu0 %v1450
      %1944 = vmatprep.subr.bf16.mxu0 %v1455
      %1945 = vmatpush1.bf16.msra.mxu0 %v1454
      %1946 = vmatprep.subr.bf16.mxu0 %v1459
      %1947 = vmatpush1.bf16.msra.mxu0 %v1458
      %1948 = vmatprep.subr.bf16.mxu0 %v1463
      %1949 = vmatpush1.bf16.msra.mxu0 %v1462
      %1950 = vmatprep.subr.bf16.mxu0 %v1467
      %1951 = vmatpush1.bf16.msra.mxu0 %v1466
      %1952 = vmatprep.subr.bf16.mxu0 %v1471
      %1953 = vmatpush1.bf16.msra.mxu0 %v1470
      %1954 = vmatprep.mubr.bf16.mxu0 %v622
      %1955 = vmatmul.mubr.bf16.gmra.mrb[0].mxu0 %v608
      %v1956 = vpop.f32.mrb[0].mxu0
      %v1957 = vadd.f32 0.0, %v1956
      %v1958 = vpop.f32.mrb[0].mxu0
      %v1959 = vadd.f32 0.0, %v1958
      %v1960 = vpop.f32.mrb[0].mxu0
      %v1961 = vpop.f32.mrb[0].mxu0
      %1962 = vdwg.mxu0
      %1963 = vmatprep.subr.bf16.mxu0 %v1475
      %1964 = vmatpush1.bf16.msra.mxu0 %v1474
      %1965 = vmatprep.subr.bf16.mxu0 %v1479
      %1966 = vmatpush1.bf16.msra.mxu0 %v1478
      %1967 = vmatprep.subr.bf16.mxu0 %v1483
      %1968 = vmatpush1.bf16.msra.mxu0 %v1482
      %1969 = vmatprep.subr.bf16.mxu0 %v1487
      %1970 = vmatpush1.bf16.msra.mxu0 %v1486
      %1971 = vmatprep.subr.bf16.mxu0 %v1491
      %1972 = vmatpush1.bf16.msra.mxu0 %v1490
      %1973 = vmatprep.subr.bf16.mxu0 %v1495
      %1974 = vmatpush1.bf16.msra.mxu0 %v1494
      %1975 = vmatprep.subr.bf16.mxu0 %v1499
      %1976 = vmatpush1.bf16.msra.mxu0 %v1498
      %1977 = vmatprep.subr.bf16.mxu0 %v1503
      %1978 = vmatpush1.bf16.msra.mxu0 %v1502
      %1979 = vmatprep.subr.bf16.mxu0 %v1507
      %1980 = vmatpush1.bf16.msra.mxu0 %v1506
      %1981 = vmatprep.subr.bf16.mxu0 %v1511
      %1982 = vmatpush1.bf16.msra.mxu0 %v1510
      %1983 = vmatprep.subr.bf16.mxu0 %v1515
      %1984 = vmatpush1.bf16.msra.mxu0 %v1514
      %1985 = vmatprep.subr.bf16.mxu0 %v1519
      %1986 = vmatpush1.bf16.msra.mxu0 %v1518
      %1987 = vmatprep.subr.bf16.mxu0 %v1523
      %1988 = vmatpush1.bf16.msra.mxu0 %v1522
      %1989 = vmatprep.subr.bf16.mxu0 %v1527
      %1990 = vmatpush1.bf16.msra.mxu0 %v1526
      %1991 = vmatprep.subr.bf16.mxu0 %v1531
      %1992 = vmatpush1.bf16.msra.mxu0 %v1530
      %1993 = vmatprep.subr.bf16.mxu0 %v1535
      %1994 = vmatpush1.bf16.msra.mxu0 %v1534
      %1995 = vmatprep.mubr.bf16.mxu0 %v632
      %1996 = vmatmul.mubr.bf16.gmra.mrb[0].mxu0 %v630
      %v1997 = vpop.f32.mrb[0].mxu0
      %v1998 = vadd.f32 %v1957, %v1997
      %v1999 = vpop.f32.mrb[0].mxu0
      %v2000 = vadd.f32 %v1959, %v1999
      %v2001 = vpop.f32.mrb[0].mxu0
      %v2002 = vpop.f32.mrb[0].mxu0
      %2003 = vdwg.mxu0
      %2004 = vmatprep.subr.bf16.mxu0 %v1539
      %2005 = vmatpush1.bf16.msra.mxu0 %v1538
      %2006 = vmatprep.subr.bf16.mxu0 %v1543
      %2007 = vmatpush1.bf16.msra.mxu0 %v1542
      %2008 = vmatprep.subr.bf16.mxu0 %v1547
      %2009 = vmatpush1.bf16.msra.mxu0 %v1546
      %2010 = vmatprep.subr.bf16.mxu0 %v1551
      %2011 = vmatpush1.bf16.msra.mxu0 %v1550
      %2012 = vmatprep.subr.bf16.mxu0 %v1555
      %2013 = vmatpush1.bf16.msra.mxu0 %v1554
      %2014 = vmatprep.subr.bf16.mxu0 %v1559
      %2015 = vmatpush1.bf16.msra.mxu0 %v1558
      %2016 = vmatprep.subr.bf16.mxu0 %v1563
      %2017 = vmatpush1.bf16.msra.mxu0 %v1562
      %2018 = vmatprep.subr.bf16.mxu0 %v1567
      %2019 = vmatpush1.bf16.msra.mxu0 %v1566
      %2020 = vmatprep.subr.bf16.mxu0 %v1571
      %2021 = vmatpush1.bf16.msra.mxu0 %v1570
      %2022 = vmatprep.subr.bf16.mxu0 %v1575
      %2023 = vmatpush1.bf16.msra.mxu0 %v1574
      %2024 = vmatprep.subr.bf16.mxu0 %v1579
      %2025 = vmatpush1.bf16.msra.mxu0 %v1578
      %2026 = vmatprep.subr.bf16.mxu0 %v1583
      %2027 = vmatpush1.bf16.msra.mxu0 %v1582
      %2028 = vmatprep.subr.bf16.mxu0 %v1587
      %2029 = vmatpush1.bf16.msra.mxu0 %v1586
      %2030 = vmatprep.subr.bf16.mxu0 %v1591
      %2031 = vmatpush1.bf16.msra.mxu0 %v1590
      %2032 = vmatprep.subr.bf16.mxu0 %v1595
      %2033 = vmatpush1.bf16.msra.mxu0 %v1594
      %2034 = vmatprep.subr.bf16.mxu0 %v1599
      %2035 = vmatpush1.bf16.msra.mxu0 %v1598
      %2036 = vmatprep.mubr.bf16.mxu0 %v629
      %2037 = vmatmul.mubr.bf16.gmra.mrb[0].mxu0 %v615
      %v2038 = vpop.f32.mrb[0].mxu0
      %v2039 = vadd.f32 %v1998, %v2038
      %v2040 = vpop.f32.mrb[0].mxu0
      %v2041 = vadd.f32 %v2000, %v2040
      %v2042 = vpop.f32.mrb[0].mxu0
      %v2043 = vpop.f32.mrb[0].mxu0
      %2044 = vdwg.mxu0
      %2045 = vmatprep.subr.bf16.mxu0 %v1603
      %2046 = vmatpush1.bf16.msra.mxu0 %v1602
      %2047 = vmatprep.subr.bf16.mxu0 %v1607
      %2048 = vmatpush1.bf16.msra.mxu0 %v1606
      %2049 = vmatprep.subr.bf16.mxu0 %v1611
      %2050 = vmatpush1.bf16.msra.mxu0 %v1610
      %2051 = vmatprep.subr.bf16.mxu0 %v1615
      %2052 = vmatpush1.bf16.msra.mxu0 %v1614
      %2053 = vmatprep.subr.bf16.mxu0 %v1619
      %2054 = vmatpush1.bf16.msra.mxu0 %v1618
      %2055 = vmatprep.subr.bf16.mxu0 %v1623
      %2056 = vmatpush1.bf16.msra.mxu0 %v1622
      %2057 = vmatprep.subr.bf16.mxu0 %v1627
      %2058 = vmatpush1.bf16.msra.mxu0 %v1626
      %2059 = vmatprep.subr.bf16.mxu0 %v1631
      %2060 = vmatpush1.bf16.msra.mxu0 %v1630
      %2061 = vmatprep.subr.bf16.mxu0 %v1635
      %2062 = vmatpush1.bf16.msra.mxu0 %v1634
      %2063 = vmatprep.subr.bf16.mxu0 %v1639
      %2064 = vmatpush1.bf16.msra.mxu0 %v1638
      %2065 = vmatprep.subr.bf16.mxu0 %v1643
      %2066 = vmatpush1.bf16.msra.mxu0 %v1642
      %2067 = vmatprep.subr.bf16.mxu0 %v1647
      %2068 = vmatpush1.bf16.msra.mxu0 %v1646
      %2069 = vmatprep.subr.bf16.mxu0 %v1651
      %2070 = vmatpush1.bf16.msra.mxu0 %v1650
      %2071 = vmatprep.subr.bf16.mxu0 %v1655
      %2072 = vmatpush1.bf16.msra.mxu0 %v1654
      %2073 = vmatprep.subr.bf16.mxu0 %v1659
      %2074 = vmatpush1.bf16.msra.mxu0 %v1658
      %2075 = vmatprep.subr.bf16.mxu0 %v1663
      %2076 = vmatpush1.bf16.msra.mxu0 %v1662
      %2077 = vmatprep.mubr.bf16.mxu0 %v633
      %2078 = vmatmul.mubr.bf16.gmra.mrb[0].mxu0 %v631
      %v2079 = vpop.f32.mrb[0].mxu0
      %v2080 = vadd.f32 %v2039, %v2079
      %v2081 = vpop.f32.mrb[0].mxu0
      %v2082 = vadd.f32 %v2041, %v2081
      %v2083 = vpop.f32.mrb[0].mxu0
      %v2084 = vpop.f32.mrb[0].mxu0
      %2085 = vdwg.mxu0
      %2086 = vmatprep.subr.bf16.mxu0 %v1413
      %2087 = vmatpush1.bf16.msra.mxu0 %v1412
      %2088 = vmatprep.subr.bf16.mxu0 %v1417
      %2089 = vmatpush1.bf16.msra.mxu0 %v1416
      %2090 = vmatprep.subr.bf16.mxu0 %v1421
      %2091 = vmatpush1.bf16.msra.mxu0 %v1420
      %2092 = vmatprep.subr.bf16.mxu0 %v1425
      %2093 = vmatpush1.bf16.msra.mxu0 %v1424
      %2094 = vmatprep.subr.bf16.mxu0 %v1429
      %2095 = vmatpush1.bf16.msra.mxu0 %v1428
      %2096 = vmatprep.subr.bf16.mxu0 %v1433
      %2097 = vmatpush1.bf16.msra.mxu0 %v1432
      %2098 = vmatprep.subr.bf16.mxu0 %v1437
      %2099 = vmatpush1.bf16.msra.mxu0 %v1436
      %2100 = vmatprep.subr.bf16.mxu0 %v1441
      %2101 = vmatpush1.bf16.msra.mxu0 %v1440
      %2102 = vmatprep.subr.bf16.mxu0 %v1445
      %2103 = vmatpush1.bf16.msra.mxu0 %v1444
      %2104 = vmatprep.subr.bf16.mxu0 %v1449
      %2105 = vmatpush1.bf16.msra.mxu0 %v1448
      %2106 = vmatprep.subr.bf16.mxu0 %v1453
      %2107 = vmatpush1.bf16.msra.mxu0 %v1452
      %2108 = vmatprep.subr.bf16.mxu0 %v1457
      %2109 = vmatpush1.bf16.msra.mxu0 %v1456
      %2110 = vmatprep.subr.bf16.mxu0 %v1461
      %2111 = vmatpush1.bf16.msra.mxu0 %v1460
      %2112 = vmatprep.subr.bf16.mxu0 %v1465
      %2113 = vmatpush1.bf16.msra.mxu0 %v1464
      %2114 = vmatprep.subr.bf16.mxu0 %v1469
      %2115 = vmatpush1.bf16.msra.mxu0 %v1468
      %2116 = vmatprep.subr.bf16.mxu0 %v1473
      %2117 = vmatpush1.bf16.msra.mxu0 %v1472
      %2118 = vmatprep.mubr.bf16.mxu0 %v622
      %2119 = vmatmul.mubr.bf16.gmra.mrb[0].mxu0 %v608
      %v2120 = vpop.f32.mrb[0].mxu0
      %v2121 = vadd.f32 0.0, %v2120
      %v2122 = vpop.f32.mrb[0].mxu0
      %v2123 = vadd.f32 0.0, %v2122
      %v2124 = vpop.f32.mrb[0].mxu0
      %v2125 = vpop.f32.mrb[0].mxu0
      %2126 = vdwg.mxu0
      %2127 = vmatprep.subr.bf16.mxu0 %v1477
      %2128 = vmatpush1.bf16.msra.mxu0 %v1476
      %2129 = vmatprep.subr.bf16.mxu0 %v1481
      %2130 = vmatpush1.bf16.msra.mxu0 %v1480
      %2131 = vmatprep.subr.bf16.mxu0 %v1485
      %2132 = vmatpush1.bf16.msra.mxu0 %v1484
      %2133 = vmatprep.subr.bf16.mxu0 %v1489
      %2134 = vmatpush1.bf16.msra.mxu0 %v1488
      %2135 = vmatprep.subr.bf16.mxu0 %v1493
      %2136 = vmatpush1.bf16.msra.mxu0 %v1492
      %2137 = vmatprep.subr.bf16.mxu0 %v1497
      %2138 = vmatpush1.bf16.msra.mxu0 %v1496
      %2139 = vmatprep.subr.bf16.mxu0 %v1501
      %2140 = vmatpush1.bf16.msra.mxu0 %v1500
      %2141 = vmatprep.subr.bf16.mxu0 %v1505
      %2142 = vmatpush1.bf16.msra.mxu0 %v1504
      %2143 = vmatprep.subr.bf16.mxu0 %v1509
      %2144 = vmatpush1.bf16.msra.mxu0 %v1508
      %2145 = vmatprep.subr.bf16.mxu0 %v1513
      %2146 = vmatpush1.bf16.msra.mxu0 %v1512
      %2147 = vmatprep.subr.bf16.mxu0 %v1517
      %2148 = vmatpush1.bf16.msra.mxu0 %v1516
      %2149 = vmatprep.subr.bf16.mxu0 %v1521
      %2150 = vmatpush1.bf16.msra.mxu0 %v1520
      %2151 = vmatprep.subr.bf16.mxu0 %v1525
      %2152 = vmatpush1.bf16.msra.mxu0 %v1524
      %2153 = vmatprep.subr.bf16.mxu0 %v1529
      %2154 = vmatpush1.bf16.msra.mxu0 %v1528
      %2155 = vmatprep.subr.bf16.mxu0 %v1533
      %2156 = vmatpush1.bf16.msra.mxu0 %v1532
      %2157 = vmatprep.subr.bf16.mxu0 %v1537
      %2158 = vmatpush1.bf16.msra.mxu0 %v1536
      %2159 = vmatprep.mubr.bf16.mxu0 %v632
      %2160 = vmatmul.mubr.bf16.gmra.mrb[0].mxu0 %v630
      %v2161 = vpop.f32.mrb[0].mxu0
      %v2162 = vadd.f32 %v2121, %v2161
      %v2163 = vpop.f32.mrb[0].mxu0
      %v2164 = vadd.f32 %v2123, %v2163
      %v2165 = vpop.f32.mrb[0].mxu0
      %v2166 = vpop.f32.mrb[0].mxu0
      %2167 = vdwg.mxu0
      %2168 = vmatprep.subr.bf16.mxu0 %v1541
      %2169 = vmatpush1.bf16.msra.mxu0 %v1540
      %2170 = vmatprep.subr.bf16.mxu0 %v1545
      %2171 = vmatpush1.bf16.msra.mxu0 %v1544
      %2172 = vmatprep.subr.bf16.mxu0 %v1549
      %2173 = vmatpush1.bf16.msra.mxu0 %v1548
      %2174 = vmatprep.subr.bf16.mxu0 %v1553
      %2175 = vmatpush1.bf16.msra.mxu0 %v1552
      %2176 = vmatprep.subr.bf16.mxu0 %v1557
      %2177 = vmatpush1.bf16.msra.mxu0 %v1556
      %2178 = vmatprep.subr.bf16.mxu0 %v1561
      %2179 = vmatpush1.bf16.msra.mxu0 %v1560
      %2180 = vmatprep.subr.bf16.mxu0 %v1565
      %2181 = vmatpush1.bf16.msra.mxu0 %v1564
      %2182 = vmatprep.subr.bf16.mxu0 %v1569
      %2183 = vmatpush1.bf16.msra.mxu0 %v1568
      %2184 = vmatprep.subr.bf16.mxu0 %v1573
      %2185 = vmatpush1.bf16.msra.mxu0 %v1572
      %2186 = vmatprep.subr.bf16.mxu0 %v1577
      %2187 = vmatpush1.bf16.msra.mxu0 %v1576
      %2188 = vmatprep.subr.bf16.mxu0 %v1581
      %2189 = vmatpush1.bf16.msra.mxu0 %v1580
      %2190 = vmatprep.subr.bf16.mxu0 %v1585
      %2191 = vmatpush1.bf16.msra.mxu0 %v1584
      %2192 = vmatprep.subr.bf16.mxu0 %v1589
      %2193 = vmatpush1.bf16.msra.mxu0 %v1588
      %2194 = vmatprep.subr.bf16.mxu0 %v1593
      %2195 = vmatpush1.bf16.msra.mxu0 %v1592
      %2196 = vmatprep.subr.bf16.mxu0 %v1597
      %2197 = vmatpush1.bf16.msra.mxu0 %v1596
      %2198 = vmatprep.subr.bf16.mxu0 %v1601
      %2199 = vmatpush1.bf16.msra.mxu0 %v1600
      %2200 = vmatprep.mubr.bf16.mxu0 %v629
      %2201 = vmatmul.mubr.bf16.gmra.mrb[0].mxu0 %v615
      %v2202 = vpop.f32.mrb[0].mxu0
      %v2203 = vadd.f32 %v2162, %v2202
      %v2204 = vpop.f32.mrb[0].mxu0
      %v2205 = vadd.f32 %v2164, %v2204
      %v2206 = vpop.f32.mrb[0].mxu0
      %v2207 = vpop.f32.mrb[0].mxu0
      %2208 = vdwg.mxu0
      %2209 = vmatprep.subr.bf16.mxu0 %v1605
      %2210 = vmatpush1.bf16.msra.mxu0 %v1604
      %2211 = vmatprep.subr.bf16.mxu0 %v1609
      %2212 = vmatpush1.bf16.msra.mxu0 %v1608
      %2213 = vmatprep.subr.bf16.mxu0 %v1613
      %2214 = vmatpush1.bf16.msra.mxu0 %v1612
      %2215 = vmatprep.subr.bf16.mxu0 %v1617
      %2216 = vmatpush1.bf16.msra.mxu0 %v1616
      %2217 = vmatprep.subr.bf16.mxu0 %v1621
      %2218 = vmatpush1.bf16.msra.mxu0 %v1620
      %2219 = vmatprep.subr.bf16.mxu0 %v1625
      %2220 = vmatpush1.bf16.msra.mxu0 %v1624
      %2221 = vmatprep.subr.bf16.mxu0 %v1629
      %2222 = vmatpush1.bf16.msra.mxu0 %v1628
      %2223 = vmatprep.subr.bf16.mxu0 %v1633
      %2224 = vmatpush1.bf16.msra.mxu0 %v1632
      %2225 = vmatprep.subr.bf16.mxu0 %v1637
      %2226 = vmatpush1.bf16.msra.mxu0 %v1636
      %2227 = vmatprep.subr.bf16.mxu0 %v1641
      %2228 = vmatpush1.bf16.msra.mxu0 %v1640
      %2229 = vmatprep.subr.bf16.mxu0 %v1645
      %2230 = vmatpush1.bf16.msra.mxu0 %v1644
      %2231 = vmatprep.subr.bf16.mxu0 %v1649
      %2232 = vmatpush1.bf16.msra.mxu0 %v1648
      %2233 = vmatprep.subr.bf16.mxu0 %v1653
      %2234 = vmatpush1.bf16.msra.mxu0 %v1652
      %2235 = vmatprep.subr.bf16.mxu0 %v1657
      %2236 = vmatpush1.bf16.msra.mxu0 %v1656
      %2237 = vmatprep.subr.bf16.mxu0 %v1661
      %2238 = vmatpush1.bf16.msra.mxu0 %v1660
      %2239 = vmatprep.subr.bf16.mxu0 %v1665
      %2240 = vmatpush1.bf16.msra.mxu0 %v1664
      %2241 = vmatprep.mubr.bf16.mxu0 %v633
      %2242 = vmatmul.mubr.bf16.gmra.mrb[0].mxu0 %v631
      %v2243 = vpop.f32.mrb[0].mxu0
      %v2244 = vadd.f32 %v2203, %v2243
      %v2245 = vpop.f32.mrb[0].mxu0
      %v2246 = vadd.f32 %v2205, %v2245
      %v2247 = vpop.f32.mrb[0].mxu0
      %v2248 = vpop.f32.mrb[0].mxu0
      %2249 = vdwg.mxu0
      %v2250 = vld [vmem:[%s2] sm:$0xff]
      %v2251 = vld [vmem:[%s2 + $0x8] sm:$0xff]
      %v2252 = vld [vmem:[%s2 + $0x10] sm:$0xff]
      %v2253 = vld [vmem:[%s2 + $0x18] sm:$0xff]
      %v2254 = vld [vmem:[%s2 + $0x20] sm:$0xff]
      %v2255 = vld [vmem:[%s2 + $0x28] sm:$0xff]
      %v2256 = vld [vmem:[%s2 + $0x30] sm:$0xff]
      %v2257 = vld [vmem:[%s2 + $0x38] sm:$0xff]
      %v2258 = vld [vmem:[%s2 + $0x40] sm:$0xff]
      %v2259 = vld [vmem:[%s2 + $0x48] sm:$0xff]
      %v2260 = vld [vmem:[%s2 + $0x50] sm:$0xff]
      %v2261 = vld [vmem:[%s2 + $0x58] sm:$0xff]
      %v2262 = vld [vmem:[%s2 + $0x60] sm:$0xff]
      %v2263 = vld [vmem:[%s2 + $0x68] sm:$0xff]
      %v2264 = vld [vmem:[%s2 + $0x70] sm:$0xff]
      %v2265 = vld [vmem:[%s2 + $0x78] sm:$0xff]
      %v2266 = vld [vmem:[%s2 + $0x80] sm:$0xff]
      %v2267 = vld [vmem:[%s2 + $0x88] sm:$0xff]
      %v2268 = vld [vmem:[%s2 + $0x90] sm:$0xff]
      %v2269 = vld [vmem:[%s2 + $0x98] sm:$0xff]
      %v2270 = vld [vmem:[%s2 + $0xa0] sm:$0xff]
      %v2271 = vld [vmem:[%s2 + $0xa8] sm:$0xff]
      %v2272 = vld [vmem:[%s2 + $0xb0] sm:$0xff]
      %v2273 = vld [vmem:[%s2 + $0xb8] sm:$0xff]
      %v2274 = vld [vmem:[%s2 + $0xc0] sm:$0xff]
      %v2275 = vld [vmem:[%s2 + $0xc8] sm:$0xff]
      %v2276 = vld [vmem:[%s2 + $0xd0] sm:$0xff]
      %v2277 = vld [vmem:[%s2 + $0xd8] sm:$0xff]
      %v2278 = vld [vmem:[%s2 + $0xe0] sm:$0xff]
      %v2279 = vld [vmem:[%s2 + $0xe8] sm:$0xff]
      %v2280 = vld [vmem:[%s2 + $0xf0] sm:$0xff]
      %v2281 = vld [vmem:[%s2 + $0xf8] sm:$0xff]
      %v2282 = vld [vmem:[%s2 + $0x100] sm:$0xff]
      %v2283 = vld [vmem:[%s2 + $0x108] sm:$0xff]
      %v2284 = vld [vmem:[%s2 + $0x110] sm:$0xff]
      %v2285 = vld [vmem:[%s2 + $0x118] sm:$0xff]
      %v2286 = vld [vmem:[%s2 + $0x120] sm:$0xff]
      %v2287 = vld [vmem:[%s2 + $0x128] sm:$0xff]
      %v2288 = vld [vmem:[%s2 + $0x130] sm:$0xff]
      %v2289 = vld [vmem:[%s2 + $0x138] sm:$0xff]
      %v2290 = vld [vmem:[%s2 + $0x140] sm:$0xff]
      %v2291 = vld [vmem:[%s2 + $0x148] sm:$0xff]
      %v2292 = vld [vmem:[%s2 + $0x150] sm:$0xff]
      %v2293 = vld [vmem:[%s2 + $0x158] sm:$0xff]
      %v2294 = vld [vmem:[%s2 + $0x160] sm:$0xff]
      %v2295 = vld [vmem:[%s2 + $0x168] sm:$0xff]
      %v2296 = vld [vmem:[%s2 + $0x170] sm:$0xff]
      %v2297 = vld [vmem:[%s2 + $0x178] sm:$0xff]
      %v2298 = vld [vmem:[%s2 + $0x180] sm:$0xff]
      %v2299 = vld [vmem:[%s2 + $0x188] sm:$0xff]
      %v2300 = vld [vmem:[%s2 + $0x190] sm:$0xff]
      %v2301 = vld [vmem:[%s2 + $0x198] sm:$0xff]
      %v2302 = vld [vmem:[%s2 + $0x1a0] sm:$0xff]
      %v2303 = vld [vmem:[%s2 + $0x1a8] sm:$0xff]
      %v2304 = vld [vmem:[%s2 + $0x1b0] sm:$0xff]
      %v2305 = vld [vmem:[%s2 + $0x1b8] sm:$0xff]
      %v2306 = vld [vmem:[%s2 + $0x1c0] sm:$0xff]
      %v2307 = vld [vmem:[%s2 + $0x1c8] sm:$0xff]
      %v2308 = vld [vmem:[%s2 + $0x1d0] sm:$0xff]
      %v2309 = vld [vmem:[%s2 + $0x1d8] sm:$0xff]
      %v2310 = vld [vmem:[%s2 + $0x1e0] sm:$0xff]
      %v2311 = vld [vmem:[%s2 + $0x1e8] sm:$0xff]
      %v2312 = vld [vmem:[%s2 + $0x1f0] sm:$0xff]
      %v2313 = vld [vmem:[%s2 + $0x1f8] sm:$0xff]
      %2314 = vmatprep.subr.mxu0 0.0
      %2315 = vmatpush1.msra.mxu0 %v2250
      %2316 = vmatprep.subr.mxu0 0.0
      %2317 = vmatpush1.msra.mxu0 %v2251
      %2318 = vmatprep.subr.mxu0 0.0
      %2319 = vmatpush1.msra.mxu0 %v2252
      %2320 = vmatprep.subr.mxu0 0.0
      %2321 = vmatpush1.msra.mxu0 %v2253
      %2322 = vmatprep.subr.mxu0 0.0
      %2323 = vmatpush1.msra.mxu0 %v2254
      %2324 = vmatprep.subr.mxu0 0.0
      %2325 = vmatpush1.msra.mxu0 %v2255
      %2326 = vmatprep.subr.mxu0 0.0
      %2327 = vmatpush1.msra.mxu0 %v2256
      %2328 = vmatprep.subr.mxu0 0.0
      %2329 = vmatpush1.msra.mxu0 %v2257
      %2330 = vmatprep.subr.mxu0 0.0
      %2331 = vmatpush1.msra.mxu0 %v2258
      %2332 = vmatprep.subr.mxu0 0.0
      %2333 = vmatpush1.msra.mxu0 %v2259
      %2334 = vmatprep.subr.mxu0 0.0
      %2335 = vmatpush1.msra.mxu0 %v2260
      %2336 = vmatprep.subr.mxu0 0.0
      %2337 = vmatpush1.msra.mxu0 %v2261
      %2338 = vmatprep.subr.mxu0 0.0
      %2339 = vmatpush1.msra.mxu0 %v2262
      %2340 = vmatprep.subr.mxu0 0.0
      %2341 = vmatpush1.msra.mxu0 %v2263
      %2342 = vmatprep.subr.mxu0 0.0
      %2343 = vmatpush1.msra.mxu0 %v2264
      %2344 = vmatprep.subr.mxu0 0.0
      %2345 = vmatpush1.msra.mxu0 %v2265
      %2346 = vmatprep.subr.mxu0 0.0
      %2347 = vmatpush1.msra.mxu0 %v2266
      %2348 = vmatprep.subr.mxu0 0.0
      %2349 = vmatpush1.msra.mxu0 %v2267
      %2350 = vmatprep.subr.mxu0 0.0
      %2351 = vmatpush1.msra.mxu0 %v2268
      %2352 = vmatprep.subr.mxu0 0.0
      %2353 = vmatpush1.msra.mxu0 %v2269
      %2354 = vmatprep.subr.mxu0 0.0
      %2355 = vmatpush1.msra.mxu0 %v2270
      %2356 = vmatprep.subr.mxu0 0.0
      %2357 = vmatpush1.msra.mxu0 %v2271
      %2358 = vmatprep.subr.mxu0 0.0
      %2359 = vmatpush1.msra.mxu0 %v2272
      %2360 = vmatprep.subr.mxu0 0.0
      %2361 = vmatpush1.msra.mxu0 %v2273
      %2362 = vmatprep.subr.mxu0 0.0
      %2363 = vmatpush1.msra.mxu0 %v2274
      %2364 = vmatprep.subr.mxu0 0.0
      %2365 = vmatpush1.msra.mxu0 %v2275
      %2366 = vmatprep.subr.mxu0 0.0
      %2367 = vmatpush1.msra.mxu0 %v2276
      %2368 = vmatprep.subr.mxu0 0.0
      %2369 = vmatpush1.msra.mxu0 %v2277
      %2370 = vmatprep.subr.mxu0 0.0
      %2371 = vmatpush1.msra.mxu0 %v2278
      %2372 = vmatprep.subr.mxu0 0.0
      %2373 = vmatpush1.msra.mxu0 %v2279
      %2374 = vmatprep.subr.mxu0 0.0
      %2375 = vmatpush1.msra.mxu0 %v2280
      %2376 = vmatprep.subr.mxu0 0.0
      %2377 = vmatpush1.msra.mxu0 %v2281
      %2378 = vmatprep.mubr.f32.mxu0 %v2082
      %2379 = vmatmul.mubr.f32.gmra.mrb[0].mxu0 %v2080
      %v2380 = vpop.f32.mrb[0].mxu0
      %v2381 = vadd.f32 0.0, %v2380
      %v2382 = vpop.f32.mrb[0].mxu0
      %2383 = vdwg.mxu0
      %2384 = vmatprep.subr.mxu0 0.0
      %2385 = vmatpush1.msra.mxu0 %v2282
      %2386 = vmatprep.subr.mxu0 0.0
      %2387 = vmatpush1.msra.mxu0 %v2283
      %2388 = vmatprep.subr.mxu0 0.0
      %2389 = vmatpush1.msra.mxu0 %v2284
      %2390 = vmatprep.subr.mxu0 0.0
      %2391 = vmatpush1.msra.mxu0 %v2285
      %2392 = vmatprep.subr.mxu0 0.0
      %2393 = vmatpush1.msra.mxu0 %v2286
      %2394 = vmatprep.subr.mxu0 0.0
      %2395 = vmatpush1.msra.mxu0 %v2287
      %2396 = vmatprep.subr.mxu0 0.0
      %2397 = vmatpush1.msra.mxu0 %v2288
      %2398 = vmatprep.subr.mxu0 0.0
      %2399 = vmatpush1.msra.mxu0 %v2289
      %2400 = vmatprep.subr.mxu0 0.0
      %2401 = vmatpush1.msra.mxu0 %v2290
      %2402 = vmatprep.subr.mxu0 0.0
      %2403 = vmatpush1.msra.mxu0 %v2291
      %2404 = vmatprep.subr.mxu0 0.0
      %2405 = vmatpush1.msra.mxu0 %v2292
      %2406 = vmatprep.subr.mxu0 0.0
      %2407 = vmatpush1.msra.mxu0 %v2293
      %2408 = vmatprep.subr.mxu0 0.0
      %2409 = vmatpush1.msra.mxu0 %v2294
      %2410 = vmatprep.subr.mxu0 0.0
      %2411 = vmatpush1.msra.mxu0 %v2295
      %2412 = vmatprep.subr.mxu0 0.0
      %2413 = vmatpush1.msra.mxu0 %v2296
      %2414 = vmatprep.subr.mxu0 0.0
      %2415 = vmatpush1.msra.mxu0 %v2297
      %2416 = vmatprep.subr.mxu0 0.0
      %2417 = vmatpush1.msra.mxu0 %v2298
      %2418 = vmatprep.subr.mxu0 0.0
      %2419 = vmatpush1.msra.mxu0 %v2299
      %2420 = vmatprep.subr.mxu0 0.0
      %2421 = vmatpush1.msra.mxu0 %v2300
      %2422 = vmatprep.subr.mxu0 0.0
      %2423 = vmatpush1.msra.mxu0 %v2301
      %2424 = vmatprep.subr.mxu0 0.0
      %2425 = vmatpush1.msra.mxu0 %v2302
      %2426 = vmatprep.subr.mxu0 0.0
      %2427 = vmatpush1.msra.mxu0 %v2303
      %2428 = vmatprep.subr.mxu0 0.0
      %2429 = vmatpush1.msra.mxu0 %v2304
      %2430 = vmatprep.subr.mxu0 0.0
      %2431 = vmatpush1.msra.mxu0 %v2305
      %2432 = vmatprep.subr.mxu0 0.0
      %2433 = vmatpush1.msra.mxu0 %v2306
      %2434 = vmatprep.subr.mxu0 0.0
      %2435 = vmatpush1.msra.mxu0 %v2307
      %2436 = vmatprep.subr.mxu0 0.0
      %2437 = vmatpush1.msra.mxu0 %v2308
      %2438 = vmatprep.subr.mxu0 0.0
      %2439 = vmatpush1.msra.mxu0 %v2309
      %2440 = vmatprep.subr.mxu0 0.0
      %2441 = vmatpush1.msra.mxu0 %v2310
      %2442 = vmatprep.subr.mxu0 0.0
      %2443 = vmatpush1.msra.mxu0 %v2311
      %2444 = vmatprep.subr.mxu0 0.0
      %2445 = vmatpush1.msra.mxu0 %v2312
      %2446 = vmatprep.subr.mxu0 0.0
      %2447 = vmatpush1.msra.mxu0 %v2313
      %2448 = vmatprep.mubr.f32.mxu0 %v2246
      %2449 = vmatmul.mubr.f32.gmra.mrb[0].mxu0 %v2244
      %v2450 = vpop.f32.mrb[0].mxu0
      %v2451 = vadd.f32 %v2381, %v2450
      %v2452 = vpop.f32.mrb[0].mxu0
      %2453 = vdwg.mxu0
      %v2454 = vld [vmem:[%s3] sm:$0xff]
      %v2455 = vld [vmem:[%s3 + $0x8] sm:$0xff]
      %v2456 = vld [vmem:[%s3 + $0x10] sm:$0xff]
      %v2457 = vld [vmem:[%s3 + $0x18] sm:$0xff]
      %vm2458 = vcmask 64512
      %v2460 = vsel %vm2458, %v2451, 0
      %2462 = vmatprep.subr.mxu0 %v2455
      %2463 = vmatpush1.msra.mxu0 %v2454
      %2464 = vmatprep.subr.mxu0 0.0
      %2465 = vmatpush1.msra.mxu0 0.0
      %2466 = vmatprep.subr.mxu0 0.0
      %2467 = vmatpush1.msra.mxu0 0.0
      %2468 = vmatprep.subr.mxu0 0.0
      %2469 = vmatpush1.msra.mxu0 0.0
      %2470 = vmatprep.subr.mxu0 0.0
      %2471 = vmatpush1.msra.mxu0 0.0
      %2472 = vmatprep.subr.mxu0 0.0
      %2473 = vmatpush1.msra.mxu0 0.0
      %2474 = vmatprep.subr.mxu0 0.0
      %2475 = vmatpush1.msra.mxu0 0.0
      %2476 = vmatprep.subr.mxu0 0.0
      %2477 = vmatpush1.msra.mxu0 0.0
      %2478 = vmatprep.subr.mxu0 0.0
      %2479 = vmatpush1.msra.mxu0 0.0
      %2480 = vmatprep.subr.mxu0 0.0
      %2481 = vmatpush1.msra.mxu0 0.0
      %2482 = vmatprep.subr.mxu0 0.0
      %2483 = vmatpush1.msra.mxu0 0.0
      %2484 = vmatprep.subr.mxu0 0.0
      %2485 = vmatpush1.msra.mxu0 0.0
      %2486 = vmatprep.subr.mxu0 0.0
      %2487 = vmatpush1.msra.mxu0 0.0
      %2488 = vmatprep.subr.mxu0 0.0
      %2489 = vmatpush1.msra.mxu0 0.0
      %2490 = vmatprep.subr.mxu0 0.0
      %2491 = vmatpush1.msra.mxu0 0.0
      %2492 = vmatprep.subr.mxu0 0.0
      %2493 = vmatpush1.msra.mxu0 0.0
      %2494 = vmatprep.subr.mxu0 0.0
      %2495 = vmatpush1.msra.mxu0 0.0
      %2496 = vmatprep.subr.mxu0 0.0
      %2497 = vmatpush1.msra.mxu0 0.0
      %2498 = vmatprep.subr.mxu0 0.0
      %2499 = vmatpush1.msra.mxu0 0.0
      %2500 = vmatprep.subr.mxu0 0.0
      %2501 = vmatpush1.msra.mxu0 0.0
      %2502 = vmatprep.subr.mxu0 0.0
      %2503 = vmatpush1.msra.mxu0 0.0
      %2504 = vmatprep.subr.mxu0 0.0
      %2505 = vmatpush1.msra.mxu0 0.0
      %2506 = vmatprep.subr.mxu0 0.0
      %2507 = vmatpush1.msra.mxu0 0.0
      %2508 = vmatprep.subr.mxu0 0.0
      %2509 = vmatpush1.msra.mxu0 0.0
      %2510 = vmatprep.subr.mxu0 0.0
      %2511 = vmatpush1.msra.mxu0 0.0
      %2512 = vmatprep.subr.mxu0 0.0
      %2513 = vmatpush1.msra.mxu0 0.0
      %2514 = vmatprep.subr.mxu0 0.0
      %2515 = vmatpush1.msra.mxu0 0.0
      %2516 = vmatprep.subr.mxu0 0.0
      %2517 = vmatpush1.msra.mxu0 0.0
      %2518 = vmatprep.subr.mxu0 0.0
      %2519 = vmatpush1.msra.mxu0 0.0
      %2520 = vmatprep.subr.mxu0 0.0
      %2521 = vmatpush1.msra.mxu0 0.0
      %2522 = vmatprep.subr.mxu0 0.0
      %2523 = vmatpush1.msra.mxu0 0.0
      %2524 = vmatprep.subr.mxu0 0.0
      %2525 = vmatpush1.msra.mxu0 0.0
      %2526 = vmatprep.mubr.f32.mxu0 0.0
      %2527 = vmatmul.mubr.f32.gmra.mrb[0].mxu0 %v2460
      %v2528 = vpop.f32.mrb[0].mxu0
      %v2529 = vadd.f32 0.0, %v2528
      %v2530 = vpop.f32.mrb[0].mxu0
      %v2531 = vadd.f32 0.0, %v2530
      %2532 = vdwg.mxu0
      %2533 = vmatprep.subr.mxu0 %v2457
      %2534 = vmatpush1.msra.mxu0 %v2456
      %2535 = vmatprep.subr.mxu0 0.0
      %2536 = vmatpush1.msra.mxu0 0.0
      %2537 = vmatprep.subr.mxu0 0.0
      %2538 = vmatpush1.msra.mxu0 0.0
      %2539 = vmatprep.subr.mxu0 0.0
      %2540 = vmatpush1.msra.mxu0 0.0
      %2541 = vmatprep.subr.mxu0 0.0
      %2542 = vmatpush1.msra.mxu0 0.0
      %2543 = vmatprep.subr.mxu0 0.0
      %2544 = vmatpush1.msra.mxu0 0.0
      %2545 = vmatprep.subr.mxu0 0.0
      %2546 = vmatpush1.msra.mxu0 0.0
      %2547 = vmatprep.subr.mxu0 0.0
      %2548 = vmatpush1.msra.mxu0 0.0
      %2549 = vmatprep.subr.mxu0 0.0
      %2550 = vmatpush1.msra.mxu0 0.0
      %2551 = vmatprep.subr.mxu0 0.0
      %2552 = vmatpush1.msra.mxu0 0.0
      %2553 = vmatprep.subr.mxu0 0.0
      %2554 = vmatpush1.msra.mxu0 0.0
      %2555 = vmatprep.subr.mxu0 0.0
      %2556 = vmatpush1.msra.mxu0 0.0
      %2557 = vmatprep.subr.mxu0 0.0
      %2558 = vmatpush1.msra.mxu0 0.0
      %2559 = vmatprep.subr.mxu0 0.0
      %2560 = vmatpush1.msra.mxu0 0.0
      %2561 = vmatprep.subr.mxu0 0.0
      %2562 = vmatpush1.msra.mxu0 0.0
      %2563 = vmatprep.subr.mxu0 0.0
      %2564 = vmatpush1.msra.mxu0 0.0
      %2565 = vmatprep.subr.mxu0 0.0
      %2566 = vmatpush1.msra.mxu0 0.0
      %2567 = vmatprep.subr.mxu0 0.0
      %2568 = vmatpush1.msra.mxu0 0.0
      %2569 = vmatprep.subr.mxu0 0.0
      %2570 = vmatpush1.msra.mxu0 0.0
      %2571 = vmatprep.subr.mxu0 0.0
      %2572 = vmatpush1.msra.mxu0 0.0
      %2573 = vmatprep.subr.mxu0 0.0
      %2574 = vmatpush1.msra.mxu0 0.0
      %2575 = vmatprep.subr.mxu0 0.0
      %2576 = vmatpush1.msra.mxu0 0.0
      %2577 = vmatprep.subr.mxu0 0.0
      %2578 = vmatpush1.msra.mxu0 0.0
      %2579 = vmatprep.subr.mxu0 0.0
      %2580 = vmatpush1.msra.mxu0 0.0
      %2581 = vmatprep.subr.mxu0 0.0
      %2582 = vmatpush1.msra.mxu0 0.0
      %2583 = vmatprep.subr.mxu0 0.0
      %2584 = vmatpush1.msra.mxu0 0.0
      %2585 = vmatprep.subr.mxu0 0.0
      %2586 = vmatpush1.msra.mxu0 0.0
      %2587 = vmatprep.subr.mxu0 0.0
      %2588 = vmatpush1.msra.mxu0 0.0
      %2589 = vmatprep.subr.mxu0 0.0
      %2590 = vmatpush1.msra.mxu0 0.0
      %2591 = vmatprep.subr.mxu0 0.0
      %2592 = vmatpush1.msra.mxu0 0.0
      %2593 = vmatprep.subr.mxu0 0.0
      %2594 = vmatpush1.msra.mxu0 0.0
      %2595 = vmatprep.subr.mxu0 0.0
      %2596 = vmatpush1.msra.mxu0 0.0
      %2597 = vmatprep.mubr.f32.mxu0 0.0
      %2598 = vmatmul.mubr.f32.gmra.mrb[0].mxu0 %v2460
      %v2599 = vpop.f32.mrb[0].mxu0
      %v2600 = vadd.f32 0.0, %v2599
      %v2601 = vpop.f32.mrb[0].mxu0
      %v2602 = vadd.f32 0.0, %v2601
      %2603 = vdwg.mxu0
      %v2604 = vsub.f32 %v2080, %v2529
      %v2605 = vsub.f32 %v2082, %v2531
      %v2606 = vsub.f32 %v2244, %v2600
      %v2607 = vsub.f32 %v2246, %v2602
      %v2608 = vmul.f32 %v2604, %v2604
      %v2609 = vmul.f32 %v2605, %v2605
      %v2610 = vmul.f32 %v2606, %v2606
      %v2611 = vmul.f32 %v2607, %v2607
      %2612 = vmatprep.subr.mxu0 0.0
      %2613 = vmatpush1.msra.mxu0 %v2250
      %2614 = vmatprep.subr.mxu0 0.0
      %2615 = vmatpush1.msra.mxu0 %v2251
      %2616 = vmatprep.subr.mxu0 0.0
      %2617 = vmatpush1.msra.mxu0 %v2252
      %2618 = vmatprep.subr.mxu0 0.0
      %2619 = vmatpush1.msra.mxu0 %v2253
      %2620 = vmatprep.subr.mxu0 0.0
      %2621 = vmatpush1.msra.mxu0 %v2254
      %2622 = vmatprep.subr.mxu0 0.0
      %2623 = vmatpush1.msra.mxu0 %v2255
      %2624 = vmatprep.subr.mxu0 0.0
      %2625 = vmatpush1.msra.mxu0 %v2256
      %2626 = vmatprep.subr.mxu0 0.0
      %2627 = vmatpush1.msra.mxu0 %v2257
      %2628 = vmatprep.subr.mxu0 0.0
      %2629 = vmatpush1.msra.mxu0 %v2258
      %2630 = vmatprep.subr.mxu0 0.0
      %2631 = vmatpush1.msra.mxu0 %v2259
      %2632 = vmatprep.subr.mxu0 0.0
      %2633 = vmatpush1.msra.mxu0 %v2260
      %2634 = vmatprep.subr.mxu0 0.0
      %2635 = vmatpush1.msra.mxu0 %v2261
      %2636 = vmatprep.subr.mxu0 0.0
      %2637 = vmatpush1.msra.mxu0 %v2262
      %2638 = vmatprep.subr.mxu0 0.0
      %2639 = vmatpush1.msra.mxu0 %v2263
      %2640 = vmatprep.subr.mxu0 0.0
      %2641 = vmatpush1.msra.mxu0 %v2264
      %2642 = vmatprep.subr.mxu0 0.0
      %2643 = vmatpush1.msra.mxu0 %v2265
      %2644 = vmatprep.subr.mxu0 0.0
      %2645 = vmatpush1.msra.mxu0 %v2266
      %2646 = vmatprep.subr.mxu0 0.0
      %2647 = vmatpush1.msra.mxu0 %v2267
      %2648 = vmatprep.subr.mxu0 0.0
      %2649 = vmatpush1.msra.mxu0 %v2268
      %2650 = vmatprep.subr.mxu0 0.0
      %2651 = vmatpush1.msra.mxu0 %v2269
      %2652 = vmatprep.subr.mxu0 0.0
      %2653 = vmatpush1.msra.mxu0 %v2270
      %2654 = vmatprep.subr.mxu0 0.0
      %2655 = vmatpush1.msra.mxu0 %v2271
      %2656 = vmatprep.subr.mxu0 0.0
      %2657 = vmatpush1.msra.mxu0 %v2272
      %2658 = vmatprep.subr.mxu0 0.0
      %2659 = vmatpush1.msra.mxu0 %v2273
      %2660 = vmatprep.subr.mxu0 0.0
      %2661 = vmatpush1.msra.mxu0 %v2274
      %2662 = vmatprep.subr.mxu0 0.0
      %2663 = vmatpush1.msra.mxu0 %v2275
      %2664 = vmatprep.subr.mxu0 0.0
      %2665 = vmatpush1.msra.mxu0 %v2276
      %2666 = vmatprep.subr.mxu0 0.0
      %2667 = vmatpush1.msra.mxu0 %v2277
      %2668 = vmatprep.subr.mxu0 0.0
      %2669 = vmatpush1.msra.mxu0 %v2278
      %2670 = vmatprep.subr.mxu0 0.0
      %2671 = vmatpush1.msra.mxu0 %v2279
      %2672 = vmatprep.subr.mxu0 0.0
      %2673 = vmatpush1.msra.mxu0 %v2280
      %2674 = vmatprep.subr.mxu0 0.0
      %2675 = vmatpush1.msra.mxu0 %v2281
      %2676 = vmatprep.mubr.f32.mxu0 %v2609
      %2677 = vmatmul.mubr.f32.gmra.mrb[0].mxu0 %v2608
      %v2678 = vpop.f32.mrb[0].mxu0
      %v2679 = vadd.f32 1e-05, %v2678
      %v2680 = vpop.f32.mrb[0].mxu0
      %2681 = vdwg.mxu0
      %2682 = vmatprep.subr.mxu0 0.0
      %2683 = vmatpush1.msra.mxu0 %v2282
      %2684 = vmatprep.subr.mxu0 0.0
      %2685 = vmatpush1.msra.mxu0 %v2283
      %2686 = vmatprep.subr.mxu0 0.0
      %2687 = vmatpush1.msra.mxu0 %v2284
      %2688 = vmatprep.subr.mxu0 0.0
      %2689 = vmatpush1.msra.mxu0 %v2285
      %2690 = vmatprep.subr.mxu0 0.0
      %2691 = vmatpush1.msra.mxu0 %v2286
      %2692 = vmatprep.subr.mxu0 0.0
      %2693 = vmatpush1.msra.mxu0 %v2287
      %2694 = vmatprep.subr.mxu0 0.0
      %2695 = vmatpush1.msra.mxu0 %v2288
      %2696 = vmatprep.subr.mxu0 0.0
      %2697 = vmatpush1.msra.mxu0 %v2289
      %2698 = vmatprep.subr.mxu0 0.0
      %2699 = vmatpush1.msra.mxu0 %v2290
      %2700 = vmatprep.subr.mxu0 0.0
      %2701 = vmatpush1.msra.mxu0 %v2291
      %2702 = vmatprep.subr.mxu0 0.0
      %2703 = vmatpush1.msra.mxu0 %v2292
      %2704 = vmatprep.subr.mxu0 0.0
      %2705 = vmatpush1.msra.mxu0 %v2293
      %2706 = vmatprep.subr.mxu0 0.0
      %2707 = vmatpush1.msra.mxu0 %v2294
      %2708 = vmatprep.subr.mxu0 0.0
      %2709 = vmatpush1.msra.mxu0 %v2295
      %2710 = vmatprep.subr.mxu0 0.0
      %2711 = vmatpush1.msra.mxu0 %v2296
      %2712 = vmatprep.subr.mxu0 0.0
      %2713 = vmatpush1.msra.mxu0 %v2297
      %2714 = vmatprep.subr.mxu0 0.0
      %2715 = vmatpush1.msra.mxu0 %v2298
      %2716 = vmatprep.subr.mxu0 0.0
      %2717 = vmatpush1.msra.mxu0 %v2299
      %2718 = vmatprep.subr.mxu0 0.0
      %2719 = vmatpush1.msra.mxu0 %v2300
      %2720 = vmatprep.subr.mxu0 0.0
      %2721 = vmatpush1.msra.mxu0 %v2301
      %2722 = vmatprep.subr.mxu0 0.0
      %2723 = vmatpush1.msra.mxu0 %v2302
      %2724 = vmatprep.subr.mxu0 0.0
      %2725 = vmatpush1.msra.mxu0 %v2303
      %2726 = vmatprep.subr.mxu0 0.0
      %2727 = vmatpush1.msra.mxu0 %v2304
      %2728 = vmatprep.subr.mxu0 0.0
      %2729 = vmatpush1.msra.mxu0 %v2305
      %2730 = vmatprep.subr.mxu0 0.0
      %2731 = vmatpush1.msra.mxu0 %v2306
      %2732 = vmatprep.subr.mxu0 0.0
      %2733 = vmatpush1.msra.mxu0 %v2307
      %2734 = vmatprep.subr.mxu0 0.0
      %2735 = vmatpush1.msra.mxu0 %v2308
      %2736 = vmatprep.subr.mxu0 0.0
      %2737 = vmatpush1.msra.mxu0 %v2309
      %2738 = vmatprep.subr.mxu0 0.0
      %2739 = vmatpush1.msra.mxu0 %v2310
      %2740 = vmatprep.subr.mxu0 0.0
      %2741 = vmatpush1.msra.mxu0 %v2311
      %2742 = vmatprep.subr.mxu0 0.0
      %2743 = vmatpush1.msra.mxu0 %v2312
      %2744 = vmatprep.subr.mxu0 0.0
      %2745 = vmatpush1.msra.mxu0 %v2313
      %2746 = vmatprep.mubr.f32.mxu0 %v2611
      %2747 = vmatmul.mubr.f32.gmra.mrb[0].mxu0 %v2610
      %v2748 = vpop.f32.mrb[0].mxu0
      %v2749 = vadd.f32 %v2679, %v2748
      %v2750 = vpop.f32.mrb[0].mxu0
      %2751 = vdwg.mxu0
      %v2752 = vrsqrt.pop %v2749
      %v2754 = vsel %vm2458, %v2752, 0
      %2756 = vmatprep.subr.mxu0 %v2455
      %2757 = vmatpush1.msra.mxu0 %v2454
      %2758 = vmatprep.subr.mxu0 0.0
      %2759 = vmatpush1.msra.mxu0 0.0
      %2760 = vmatprep.subr.mxu0 0.0
      %2761 = vmatpush1.msra.mxu0 0.0
      %2762 = vmatprep.subr.mxu0 0.0
      %2763 = vmatpush1.msra.mxu0 0.0
      %2764 = vmatprep.subr.mxu0 0.0
      %2765 = vmatpush1.msra.mxu0 0.0
      %2766 = vmatprep.subr.mxu0 0.0
      %2767 = vmatpush1.msra.mxu0 0.0
      %2768 = vmatprep.subr.mxu0 0.0
      %2769 = vmatpush1.msra.mxu0 0.0
      %2770 = vmatprep.subr.mxu0 0.0
      %2771 = vmatpush1.msra.mxu0 0.0
      %2772 = vmatprep.subr.mxu0 0.0
      %2773 = vmatpush1.msra.mxu0 0.0
      %2774 = vmatprep.subr.mxu0 0.0
      %2775 = vmatpush1.msra.mxu0 0.0
      %2776 = vmatprep.subr.mxu0 0.0
      %2777 = vmatpush1.msra.mxu0 0.0
      %2778 = vmatprep.subr.mxu0 0.0
      %2779 = vmatpush1.msra.mxu0 0.0
      %2780 = vmatprep.subr.mxu0 0.0
      %2781 = vmatpush1.msra.mxu0 0.0
      %2782 = vmatprep.subr.mxu0 0.0
      %2783 = vmatpush1.msra.mxu0 0.0
      %2784 = vmatprep.subr.mxu0 0.0
      %2785 = vmatpush1.msra.mxu0 0.0
      %2786 = vmatprep.subr.mxu0 0.0
      %2787 = vmatpush1.msra.mxu0 0.0
      %2788 = vmatprep.subr.mxu0 0.0
      %2789 = vmatpush1.msra.mxu0 0.0
      %2790 = vmatprep.subr.mxu0 0.0
      %2791 = vmatpush1.msra.mxu0 0.0
      %2792 = vmatprep.subr.mxu0 0.0
      %2793 = vmatpush1.msra.mxu0 0.0
      %2794 = vmatprep.subr.mxu0 0.0
      %2795 = vmatpush1.msra.mxu0 0.0
      %2796 = vmatprep.subr.mxu0 0.0
      %2797 = vmatpush1.msra.mxu0 0.0
      %2798 = vmatprep.subr.mxu0 0.0
      %2799 = vmatpush1.msra.mxu0 0.0
      %2800 = vmatprep.subr.mxu0 0.0
      %2801 = vmatpush1.msra.mxu0 0.0
      %2802 = vmatprep.subr.mxu0 0.0
      %2803 = vmatpush1.msra.mxu0 0.0
      %2804 = vmatprep.subr.mxu0 0.0
      %2805 = vmatpush1.msra.mxu0 0.0
      %2806 = vmatprep.subr.mxu0 0.0
      %2807 = vmatpush1.msra.mxu0 0.0
      %2808 = vmatprep.subr.mxu0 0.0
      %2809 = vmatpush1.msra.mxu0 0.0
      %2810 = vmatprep.subr.mxu0 0.0
      %2811 = vmatpush1.msra.mxu0 0.0
      %2812 = vmatprep.subr.mxu0 0.0
      %2813 = vmatpush1.msra.mxu0 0.0
      %2814 = vmatprep.subr.mxu0 0.0
      %2815 = vmatpush1.msra.mxu0 0.0
      %2816 = vmatprep.subr.mxu0 0.0
      %2817 = vmatpush1.msra.mxu0 0.0
      %2818 = vmatprep.subr.mxu0 0.0
      %2819 = vmatpush1.msra.mxu0 0.0
      %2820 = vmatprep.mubr.f32.mxu0 0.0
      %2821 = vmatmul.mubr.f32.gmra.mrb[0].mxu0 %v2754
      %v2822 = vpop.f32.mrb[0].mxu0
      %v2823 = vadd.f32 0.0, %v2822
      %v2824 = vpop.f32.mrb[0].mxu0
      %v2825 = vadd.f32 0.0, %v2824
      %2826 = vdwg.mxu0
      %2827 = vmatprep.subr.mxu0 %v2457
      %2828 = vmatpush1.msra.mxu0 %v2456
      %2829 = vmatprep.subr.mxu0 0.0
      %2830 = vmatpush1.msra.mxu0 0.0
      %2831 = vmatprep.subr.mxu0 0.0
      %2832 = vmatpush1.msra.mxu0 0.0
      %2833 = vmatprep.subr.mxu0 0.0
      %2834 = vmatpush1.msra.mxu0 0.0
      %2835 = vmatprep.subr.mxu0 0.0
      %2836 = vmatpush1.msra.mxu0 0.0
      %2837 = vmatprep.subr.mxu0 0.0
      %2838 = vmatpush1.msra.mxu0 0.0
      %2839 = vmatprep.subr.mxu0 0.0
      %2840 = vmatpush1.msra.mxu0 0.0
      %2841 = vmatprep.subr.mxu0 0.0
      %2842 = vmatpush1.msra.mxu0 0.0
      %2843 = vmatprep.subr.mxu0 0.0
      %2844 = vmatpush1.msra.mxu0 0.0
      %2845 = vmatprep.subr.mxu0 0.0
      %2846 = vmatpush1.msra.mxu0 0.0
      %2847 = vmatprep.subr.mxu0 0.0
      %2848 = vmatpush1.msra.mxu0 0.0
      %2849 = vmatprep.subr.mxu0 0.0
      %2850 = vmatpush1.msra.mxu0 0.0
      %2851 = vmatprep.subr.mxu0 0.0
      %2852 = vmatpush1.msra.mxu0 0.0
      %2853 = vmatprep.subr.mxu0 0.0
      %2854 = vmatpush1.msra.mxu0 0.0
      %2855 = vmatprep.subr.mxu0 0.0
      %2856 = vmatpush1.msra.mxu0 0.0
      %2857 = vmatprep.subr.mxu0 0.0
      %2858 = vmatpush1.msra.mxu0 0.0
      %2859 = vmatprep.subr.mxu0 0.0
      %2860 = vmatpush1.msra.mxu0 0.0
      %2861 = vmatprep.subr.mxu0 0.0
      %2862 = vmatpush1.msra.mxu0 0.0
      %2863 = vmatprep.subr.mxu0 0.0
      %2864 = vmatpush1.msra.mxu0 0.0
      %2865 = vmatprep.subr.mxu0 0.0
      %2866 = vmatpush1.msra.mxu0 0.0
      %2867 = vmatprep.subr.mxu0 0.0
      %2868 = vmatpush1.msra.mxu0 0.0
      %2869 = vmatprep.subr.mxu0 0.0
      %2870 = vmatpush1.msra.mxu0 0.0
      %2871 = vmatprep.subr.mxu0 0.0
      %2872 = vmatpush1.msra.mxu0 0.0
      %2873 = vmatprep.subr.mxu0 0.0
      %2874 = vmatpush1.msra.mxu0 0.0
      %2875 = vmatprep.subr.mxu0 0.0
      %2876 = vmatpush1.msra.mxu0 0.0
      %2877 = vmatprep.subr.mxu0 0.0
      %2878 = vmatpush1.msra.mxu0 0.0
      %2879 = vmatprep.subr.mxu0 0.0
      %2880 = vmatpush1.msra.mxu0 0.0
      %2881 = vmatprep.subr.mxu0 0.0
      %2882 = vmatpush1.msra.mxu0 0.0
      %2883 = vmatprep.subr.mxu0 0.0
      %2884 = vmatpush1.msra.mxu0 0.0
      %2885 = vmatprep.subr.mxu0 0.0
      %2886 = vmatpush1.msra.mxu0 0.0
      %2887 = vmatprep.subr.mxu0 0.0
      %2888 = vmatpush1.msra.mxu0 0.0
      %2889 = vmatprep.subr.mxu0 0.0
      %2890 = vmatpush1.msra.mxu0 0.0
      %2891 = vmatprep.mubr.f32.mxu0 0.0
      %2892 = vmatmul.mubr.f32.gmra.mrb[0].mxu0 %v2754
      %v2893 = vpop.f32.mrb[0].mxu0
      %v2894 = vadd.f32 0.0, %v2893
      %v2895 = vpop.f32.mrb[0].mxu0
      %v2896 = vadd.f32 0.0, %v2895
      %2897 = vdwg.mxu0
      %v2898 = vmul.f32 %v2604, %v2823
      %v2899 = vmul.f32 %v2605, %v2825
      %v2900 = vmul.f32 %v2606, %v2894
      %v2901 = vmul.f32 %v2607, %v2896
      %vm2902 = vcmp.ge.f32.partialorder %v2898, 0.0
      %vm2903 = vcmp.ge.f32.partialorder %v2899, 0.0
      %vm2904 = vcmp.ge.f32.partialorder %v2900, 0.0
      %vm2905 = vcmp.ge.f32.partialorder %v2901, 0.0
      %v2906 = vmul.f32 %v2898, 0.01
      %v2907 = vmul.f32 %v2899, 0.01
      %v2908 = vmul.f32 %v2900, 0.01
      %v2909 = vmul.f32 %v2901, 0.01
      %v2910 = vsel %vm2902, %v2898, %v2906
      %v2911 = vsel %vm2903, %v2899, %v2907
      %v2912 = vsel %vm2904, %v2900, %v2908
      %v2913 = vsel %vm2905, %v2901, %v2909
      %v2914 = vpack.c.bf16 %v2910, %v2910
      %v2915 = vpack.c.bf16 %v2911, %v2911
      %v2916 = vpack.c.bf16 %v2912, %v2912
      %v2917 = vpack.c.bf16 %v2913, %v2913
      %v2918 = vld [vmem:[%s4] sm:$0xff]
      %v2919 = vld [vmem:[%s4 + $0x8] sm:$0xff]
      %v2920 = vld [vmem:[%s4 + $0x10] sm:$0xff]
      %v2921 = vld [vmem:[%s4 + $0x18] sm:$0xff]
      %v2922 = vld [vmem:[%s4 + $0x20] sm:$0xff]
      %v2923 = vld [vmem:[%s4 + $0x28] sm:$0xff]
      %v2924 = vld [vmem:[%s4 + $0x30] sm:$0xff]
      %v2925 = vld [vmem:[%s4 + $0x38] sm:$0xff]
      %v2926 = vld [vmem:[%s4 + $0x40] sm:$0xff]
      %v2927 = vld [vmem:[%s4 + $0x48] sm:$0xff]
      %v2928 = vld [vmem:[%s4 + $0x50] sm:$0xff]
      %v2929 = vld [vmem:[%s4 + $0x58] sm:$0xff]
      %v2930 = vld [vmem:[%s4 + $0x60] sm:$0xff]
      %v2931 = vld [vmem:[%s4 + $0x68] sm:$0xff]
      %v2932 = vld [vmem:[%s4 + $0x70] sm:$0xff]
      %v2933 = vld [vmem:[%s4 + $0x78] sm:$0xff]
      %v2934 = vld [vmem:[%s4 + $0x80] sm:$0xff]
      %v2935 = vld [vmem:[%s4 + $0x88] sm:$0xff]
      %v2936 = vld [vmem:[%s4 + $0x90] sm:$0xff]
      %v2937 = vld [vmem:[%s4 + $0x98] sm:$0xff]
      %v2938 = vld [vmem:[%s4 + $0xa0] sm:$0xff]
      %v2939 = vld [vmem:[%s4 + $0xa8] sm:$0xff]
      %v2940 = vld [vmem:[%s4 + $0xb0] sm:$0xff]
      %v2941 = vld [vmem:[%s4 + $0xb8] sm:$0xff]
      %v2942 = vld [vmem:[%s4 + $0xc0] sm:$0xff]
      %v2943 = vld [vmem:[%s4 + $0xc8] sm:$0xff]
      %v2944 = vld [vmem:[%s4 + $0xd0] sm:$0xff]
      %v2945 = vld [vmem:[%s4 + $0xd8] sm:$0xff]
      %v2946 = vld [vmem:[%s4 + $0xe0] sm:$0xff]
      %v2947 = vld [vmem:[%s4 + $0xe8] sm:$0xff]
      %v2948 = vld [vmem:[%s4 + $0xf0] sm:$0xff]
      %v2949 = vld [vmem:[%s4 + $0xf8] sm:$0xff]
      %v2950 = vld [vmem:[%s4 + $0x100] sm:$0xff]
      %v2951 = vld [vmem:[%s4 + $0x108] sm:$0xff]
      %v2952 = vld [vmem:[%s4 + $0x110] sm:$0xff]
      %v2953 = vld [vmem:[%s4 + $0x118] sm:$0xff]
      %v2954 = vld [vmem:[%s4 + $0x120] sm:$0xff]
      %v2955 = vld [vmem:[%s4 + $0x128] sm:$0xff]
      %v2956 = vld [vmem:[%s4 + $0x130] sm:$0xff]
      %v2957 = vld [vmem:[%s4 + $0x138] sm:$0xff]
      %v2958 = vld [vmem:[%s4 + $0x140] sm:$0xff]
      %v2959 = vld [vmem:[%s4 + $0x148] sm:$0xff]
      %v2960 = vld [vmem:[%s4 + $0x150] sm:$0xff]
      %v2961 = vld [vmem:[%s4 + $0x158] sm:$0xff]
      %v2962 = vld [vmem:[%s4 + $0x160] sm:$0xff]
      %v2963 = vld [vmem:[%s4 + $0x168] sm:$0xff]
      %v2964 = vld [vmem:[%s4 + $0x170] sm:$0xff]
      %v2965 = vld [vmem:[%s4 + $0x178] sm:$0xff]
      %v2966 = vld [vmem:[%s4 + $0x180] sm:$0xff]
      %v2967 = vld [vmem:[%s4 + $0x188] sm:$0xff]
      %v2968 = vld [vmem:[%s4 + $0x190] sm:$0xff]
      %v2969 = vld [vmem:[%s4 + $0x198] sm:$0xff]
      %v2970 = vld [vmem:[%s4 + $0x1a0] sm:$0xff]
      %v2971 = vld [vmem:[%s4 + $0x1a8] sm:$0xff]
      %v2972 = vld [vmem:[%s4 + $0x1b0] sm:$0xff]
      %v2973 = vld [vmem:[%s4 + $0x1b8] sm:$0xff]
      %v2974 = vld [vmem:[%s4 + $0x1c0] sm:$0xff]
      %v2975 = vld [vmem:[%s4 + $0x1c8] sm:$0xff]
      %v2976 = vld [vmem:[%s4 + $0x1d0] sm:$0xff]
      %v2977 = vld [vmem:[%s4 + $0x1d8] sm:$0xff]
      %v2978 = vld [vmem:[%s4 + $0x1e0] sm:$0xff]
      %v2979 = vld [vmem:[%s4 + $0x1e8] sm:$0xff]
      %v2980 = vld [vmem:[%s4 + $0x1f0] sm:$0xff]
      %v2981 = vld [vmem:[%s4 + $0x1f8] sm:$0xff]
      %v3046 = vunpack.c.l.b16 %v2918
      %v3047 = vunpack.c.h.b16 %v2918
      %v3048 = vunpack.c.l.b16 %v2919
      %v3049 = vunpack.c.h.b16 %v2919
      %v3050 = vunpack.c.l.b16 %v2920
      %v3051 = vunpack.c.h.b16 %v2920
      %v3052 = vunpack.c.l.b16 %v2921
      %v3053 = vunpack.c.h.b16 %v2921
      %v3054 = vunpack.c.l.b16 %v2922
      %v3055 = vunpack.c.h.b16 %v2922
      %v3056 = vunpack.c.l.b16 %v2923
      %v3057 = vunpack.c.h.b16 %v2923
      %v3058 = vunpack.c.l.b16 %v2924
      %v3059 = vunpack.c.h.b16 %v2924
      %v3060 = vunpack.c.l.b16 %v2925
      %v3061 = vunpack.c.h.b16 %v2925
      %v3062 = vunpack.c.l.b16 %v2926
      %v3063 = vunpack.c.h.b16 %v2926
      %v3064 = vunpack.c.l.b16 %v2927
      %v3065 = vunpack.c.h.b16 %v2927
      %v3066 = vunpack.c.l.b16 %v2928
      %v3067 = vunpack.c.h.b16 %v2928
      %v3068 = vunpack.c.l.b16 %v2929
      %v3069 = vunpack.c.h.b16 %v2929
      %v3070 = vunpack.c.l.b16 %v2930
      %v3071 = vunpack.c.h.b16 %v2930
      %v3072 = vunpack.c.l.b16 %v2931
      %v3073 = vunpack.c.h.b16 %v2931
      %v3074 = vunpack.c.l.b16 %v2932
      %v3075 = vunpack.c.h.b16 %v2932
      %v3076 = vunpack.c.l.b16 %v2933
      %v3077 = vunpack.c.h.b16 %v2933
      %v3078 = vunpack.c.l.b16 %v2934
      %v3079 = vunpack.c.h.b16 %v2934
      %v3080 = vunpack.c.l.b16 %v2935
      %v3081 = vunpack.c.h.b16 %v2935
      %v3082 = vunpack.c.l.b16 %v2936
      %v3083 = vunpack.c.h.b16 %v2936
      %v3084 = vunpack.c.l.b16 %v2937
      %v3085 = vunpack.c.h.b16 %v2937
      %v3086 = vunpack.c.l.b16 %v2938
      %v3087 = vunpack.c.h.b16 %v2938
      %v3088 = vunpack.c.l.b16 %v2939
      %v3089 = vunpack.c.h.b16 %v2939
      %v3090 = vunpack.c.l.b16 %v2940
      %v3091 = vunpack.c.h.b16 %v2940
      %v3092 = vunpack.c.l.b16 %v2941
      %v3093 = vunpack.c.h.b16 %v2941
      %v3094 = vunpack.c.l.b16 %v2942
      %v3095 = vunpack.c.h.b16 %v2942
      %v3096 = vunpack.c.l.b16 %v2943
      %v3097 = vunpack.c.h.b16 %v2943
      %v3098 = vunpack.c.l.b16 %v2944
      %v3099 = vunpack.c.h.b16 %v2944
      %v3100 = vunpack.c.l.b16 %v2945
      %v3101 = vunpack.c.h.b16 %v2945
      %v3102 = vunpack.c.l.b16 %v2946
      %v3103 = vunpack.c.h.b16 %v2946
      %v3104 = vunpack.c.l.b16 %v2947
      %v3105 = vunpack.c.h.b16 %v2947
      %v3106 = vunpack.c.l.b16 %v2948
      %v3107 = vunpack.c.h.b16 %v2948
      %v3108 = vunpack.c.l.b16 %v2949
      %v3109 = vunpack.c.h.b16 %v2949
      %v3110 = vunpack.c.l.b16 %v2950
      %v3111 = vunpack.c.h.b16 %v2950
      %v3112 = vunpack.c.l.b16 %v2951
      %v3113 = vunpack.c.h.b16 %v2951
      %v3114 = vunpack.c.l.b16 %v2952
      %v3115 = vunpack.c.h.b16 %v2952
      %v3116 = vunpack.c.l.b16 %v2953
      %v3117 = vunpack.c.h.b16 %v2953
      %v3118 = vunpack.c.l.b16 %v2954
      %v3119 = vunpack.c.h.b16 %v2954
      %v3120 = vunpack.c.l.b16 %v2955
      %v3121 = vunpack.c.h.b16 %v2955
      %v3122 = vunpack.c.l.b16 %v2956
      %v3123 = vunpack.c.h.b16 %v2956
      %v3124 = vunpack.c.l.b16 %v2957
      %v3125 = vunpack.c.h.b16 %v2957
      %v3126 = vunpack.c.l.b16 %v2958
      %v3127 = vunpack.c.h.b16 %v2958
      %v3128 = vunpack.c.l.b16 %v2959
      %v3129 = vunpack.c.h.b16 %v2959
      %v3130 = vunpack.c.l.b16 %v2960
      %v3131 = vunpack.c.h.b16 %v2960
      %v3132 = vunpack.c.l.b16 %v2961
      %v3133 = vunpack.c.h.b16 %v2961
      %v3134 = vunpack.c.l.b16 %v2962
      %v3135 = vunpack.c.h.b16 %v2962
      %v3136 = vunpack.c.l.b16 %v2963
      %v3137 = vunpack.c.h.b16 %v2963
      %v3138 = vunpack.c.l.b16 %v2964
      %v3139 = vunpack.c.h.b16 %v2964
      %v3140 = vunpack.c.l.b16 %v2965
      %v3141 = vunpack.c.h.b16 %v2965
      %v3142 = vunpack.c.l.b16 %v2966
      %v3143 = vunpack.c.h.b16 %v2966
      %v3144 = vunpack.c.l.b16 %v2967
      %v3145 = vunpack.c.h.b16 %v2967
      %v3146 = vunpack.c.l.b16 %v2968
      %v3147 = vunpack.c.h.b16 %v2968
      %v3148 = vunpack.c.l.b16 %v2969
      %v3149 = vunpack.c.h.b16 %v2969
      %v3150 = vunpack.c.l.b16 %v2970
      %v3151 = vunpack.c.h.b16 %v2970
      %v3152 = vunpack.c.l.b16 %v2971
      %v3153 = vunpack.c.h.b16 %v2971
      %v3154 = vunpack.c.l.b16 %v2972
      %v3155 = vunpack.c.h.b16 %v2972
      %v3156 = vunpack.c.l.b16 %v2973
      %v3157 = vunpack.c.h.b16 %v2973
      %v3158 = vunpack.c.l.b16 %v2974
      %v3159 = vunpack.c.h.b16 %v2974
      %v3160 = vunpack.c.l.b16 %v2975
      %v3161 = vunpack.c.h.b16 %v2975
      %v3162 = vunpack.c.l.b16 %v2976
      %v3163 = vunpack.c.h.b16 %v2976
      %v3164 = vunpack.c.l.b16 %v2977
      %v3165 = vunpack.c.h.b16 %v2977
      %v3166 = vunpack.c.l.b16 %v2978
      %v3167 = vunpack.c.h.b16 %v2978
      %v3168 = vunpack.c.l.b16 %v2979
      %v3169 = vunpack.c.h.b16 %v2979
      %v3170 = vunpack.c.l.b16 %v2980
      %v3171 = vunpack.c.h.b16 %v2980
      %v3172 = vunpack.c.l.b16 %v2981
      %v3173 = vunpack.c.h.b16 %v2981
      %v3174 = vpack.c.b16 %v3048, %v3046
      %v3175 = vpack.c.b16 %v3049, %v3047
      %v3176 = vpack.c.b16 %v3052, %v3050
      %v3177 = vpack.c.b16 %v3053, %v3051
      %v3178 = vpack.c.b16 %v3056, %v3054
      %v3179 = vpack.c.b16 %v3057, %v3055
      %v3180 = vpack.c.b16 %v3060, %v3058
      %v3181 = vpack.c.b16 %v3061, %v3059
      %v3182 = vpack.c.b16 %v3064, %v3062
      %v3183 = vpack.c.b16 %v3065, %v3063
      %v3184 = vpack.c.b16 %v3068, %v3066
      %v3185 = vpack.c.b16 %v3069, %v3067
      %v3186 = vpack.c.b16 %v3072, %v3070
      %v3187 = vpack.c.b16 %v3073, %v3071
      %v3188 = vpack.c.b16 %v3076, %v3074
      %v3189 = vpack.c.b16 %v3077, %v3075
      %v3190 = vpack.c.b16 %v3080, %v3078
      %v3191 = vpack.c.b16 %v3081, %v3079
      %v3192 = vpack.c.b16 %v3084, %v3082
      %v3193 = vpack.c.b16 %v3085, %v3083
      %v3194 = vpack.c.b16 %v3088, %v3086
      %v3195 = vpack.c.b16 %v3089, %v3087
      %v3196 = vpack.c.b16 %v3092, %v3090
      %v3197 = vpack.c.b16 %v3093, %v3091
      %v3198 = vpack.c.b16 %v3096, %v3094
      %v3199 = vpack.c.b16 %v3097, %v3095
      %v3200 = vpack.c.b16 %v3100, %v3098
      %v3201 = vpack.c.b16 %v3101, %v3099
      %v3202 = vpack.c.b16 %v3104, %v3102
      %v3203 = vpack.c.b16 %v3105, %v3103
      %v3204 = vpack.c.b16 %v3108, %v3106
      %v3205 = vpack.c.b16 %v3109, %v3107
      %v3206 = vpack.c.b16 %v3112, %v3110
      %v3207 = vpack.c.b16 %v3113, %v3111
      %v3208 = vpack.c.b16 %v3116, %v3114
      %v3209 = vpack.c.b16 %v3117, %v3115
      %v3210 = vpack.c.b16 %v3120, %v3118
      %v3211 = vpack.c.b16 %v3121, %v3119
      %v3212 = vpack.c.b16 %v3124, %v3122
      %v3213 = vpack.c.b16 %v3125, %v3123
      %v3214 = vpack.c.b16 %v3128, %v3126
      %v3215 = vpack.c.b16 %v3129, %v3127
      %v3216 = vpack.c.b16 %v3132, %v3130
      %v3217 = vpack.c.b16 %v3133, %v3131
      %v3218 = vpack.c.b16 %v3136, %v3134
      %v3219 = vpack.c.b16 %v3137, %v3135
      %v3220 = vpack.c.b16 %v3140, %v3138
      %v3221 = vpack.c.b16 %v3141, %v3139
      %v3222 = vpack.c.b16 %v3144, %v3142
      %v3223 = vpack.c.b16 %v3145, %v3143
      %v3224 = vpack.c.b16 %v3148, %v3146
      %v3225 = vpack.c.b16 %v3149, %v3147
      %v3226 = vpack.c.b16 %v3152, %v3150
      %v3227 = vpack.c.b16 %v3153, %v3151
      %v3228 = vpack.c.b16 %v3156, %v3154
      %v3229 = vpack.c.b16 %v3157, %v3155
      %v3230 = vpack.c.b16 %v3160, %v3158
      %v3231 = vpack.c.b16 %v3161, %v3159
      %v3232 = vpack.c.b16 %v3164, %v3162
      %v3233 = vpack.c.b16 %v3165, %v3163
      %v3234 = vpack.c.b16 %v3168, %v3166
      %v3235 = vpack.c.b16 %v3169, %v3167
      %v3236 = vpack.c.b16 %v3172, %v3170
      %v3237 = vpack.c.b16 %v3173, %v3171
      %3302 = vmatprep.subr.bf16.mxu0 %v3175
      %3303 = vmatpush1.bf16.msra.mxu0 %v3174
      %3304 = vmatprep.subr.bf16.mxu0 %v3177
      %3305 = vmatpush1.bf16.msra.mxu0 %v3176
      %3306 = vmatprep.subr.bf16.mxu0 %v3179
      %3307 = vmatpush1.bf16.msra.mxu0 %v3178
      %3308 = vmatprep.subr.bf16.mxu0 %v3181
      %3309 = vmatpush1.bf16.msra.mxu0 %v3180
      %3310 = vmatprep.subr.bf16.mxu0 %v3183
      %3311 = vmatpush1.bf16.msra.mxu0 %v3182
      %3312 = vmatprep.subr.bf16.mxu0 %v3185
      %3313 = vmatpush1.bf16.msra.mxu0 %v3184
      %3314 = vmatprep.subr.bf16.mxu0 %v3187
      %3315 = vmatpush1.bf16.msra.mxu0 %v3186
      %3316 = vmatprep.subr.bf16.mxu0 %v3189
      %3317 = vmatpush1.bf16.msra.mxu0 %v3188
      %3318 = vmatprep.subr.bf16.mxu0 %v3191
      %3319 = vmatpush1.bf16.msra.mxu0 %v3190
      %3320 = vmatprep.subr.bf16.mxu0 %v3193
      %3321 = vmatpush1.bf16.msra.mxu0 %v3192
      %3322 = vmatprep.subr.bf16.mxu0 %v3195
      %3323 = vmatpush1.bf16.msra.mxu0 %v3194
      %3324 = vmatprep.subr.bf16.mxu0 %v3197
      %3325 = vmatpush1.bf16.msra.mxu0 %v3196
      %3326 = vmatprep.subr.bf16.mxu0 %v3199
      %3327 = vmatpush1.bf16.msra.mxu0 %v3198
      %3328 = vmatprep.subr.bf16.mxu0 %v3201
      %3329 = vmatpush1.bf16.msra.mxu0 %v3200
      %3330 = vmatprep.subr.bf16.mxu0 %v3203
      %3331 = vmatpush1.bf16.msra.mxu0 %v3202
      %3332 = vmatprep.subr.bf16.mxu0 %v3205
      %3333 = vmatpush1.bf16.msra.mxu0 %v3204
      %3334 = vmatprep.mubr.bf16.mxu0 %v2915
      %3335 = vmatmul.mubr.bf16.gmra.mrb[0].mxu0 %v2914
      %v3336 = vpop.f32.mrb[0].mxu0
      %v3337 = vadd.f32 0.0, %v3336
      %v3338 = vpop.f32.mrb[0].mxu0
      %v3339 = vadd.f32 0.0, %v3338
      %v3340 = vpop.f32.mrb[0].mxu0
      %v3341 = vpop.f32.mrb[0].mxu0
      %3342 = vdwg.mxu0
      %3343 = vmatprep.subr.bf16.mxu0 %v3207
      %3344 = vmatpush1.bf16.msra.mxu0 %v3206
      %3345 = vmatprep.subr.bf16.mxu0 %v3209
      %3346 = vmatpush1.bf16.msra.mxu0 %v3208
      %3347 = vmatprep.subr.bf16.mxu0 %v3211
      %3348 = vmatpush1.bf16.msra.mxu0 %v3210
      %3349 = vmatprep.subr.bf16.mxu0 %v3213
      %3350 = vmatpush1.bf16.msra.mxu0 %v3212
      %3351 = vmatprep.subr.bf16.mxu0 %v3215
      %3352 = vmatpush1.bf16.msra.mxu0 %v3214
      %3353 = vmatprep.subr.bf16.mxu0 %v3217
      %3354 = vmatpush1.bf16.msra.mxu0 %v3216
      %3355 = vmatprep.subr.bf16.mxu0 %v3219
      %3356 = vmatpush1.bf16.msra.mxu0 %v3218
      %3357 = vmatprep.subr.bf16.mxu0 %v3221
      %3358 = vmatpush1.bf16.msra.mxu0 %v3220
      %3359 = vmatprep.subr.bf16.mxu0 %v3223
      %3360 = vmatpush1.bf16.msra.mxu0 %v3222
      %3361 = vmatprep.subr.bf16.mxu0 %v3225
      %3362 = vmatpush1.bf16.msra.mxu0 %v3224
      %3363 = vmatprep.subr.bf16.mxu0 %v3227
      %3364 = vmatpush1.bf16.msra.mxu0 %v3226
      %3365 = vmatprep.subr.bf16.mxu0 %v3229
      %3366 = vmatpush1.bf16.msra.mxu0 %v3228
      %3367 = vmatprep.subr.bf16.mxu0 %v3231
      %3368 = vmatpush1.bf16.msra.mxu0 %v3230
      %3369 = vmatprep.subr.bf16.mxu0 %v3233
      %3370 = vmatpush1.bf16.msra.mxu0 %v3232
      %3371 = vmatprep.subr.bf16.mxu0 %v3235
      %3372 = vmatpush1.bf16.msra.mxu0 %v3234
      %3373 = vmatprep.subr.bf16.mxu0 %v3237
      %3374 = vmatpush1.bf16.msra.mxu0 %v3236
      %3375 = vmatprep.mubr.bf16.mxu0 %v2917
      %3376 = vmatmul.mubr.bf16.gmra.mrb[0].mxu0 %v2916
      %v3377 = vpop.f32.mrb[0].mxu0
      %v3378 = vadd.f32 %v3337, %v3377
      %v3379 = vpop.f32.mrb[0].mxu0
      %v3380 = vadd.f32 %v3339, %v3379
      %v3381 = vpop.f32.mrb[0].mxu0
      %v3382 = vpop.f32.mrb[0].mxu0
      %3383 = vdwg.mxu0
      %v3384 = vld [vmem:[%s5] sm:$0xff]
      %v3385 = vld [vmem:[%s5 + $0x8] sm:$0xff]
      %v3386 = vld [vmem:[%s5 + $0x10] sm:$0xff]
      %v3387 = vld [vmem:[%s5 + $0x18] sm:$0xff]
      %v3388 = vld [vmem:[%s5 + $0x20] sm:$0xff]
      %v3389 = vld [vmem:[%s5 + $0x28] sm:$0xff]
      %v3390 = vld [vmem:[%s5 + $0x30] sm:$0xff]
      %v3391 = vld [vmem:[%s5 + $0x38] sm:$0xff]
      %v3392 = vld [vmem:[%s5 + $0x40] sm:$0xff]
      %v3393 = vld [vmem:[%s5 + $0x48] sm:$0xff]
      %v3394 = vld [vmem:[%s5 + $0x50] sm:$0xff]
      %v3395 = vld [vmem:[%s5 + $0x58] sm:$0xff]
      %v3396 = vld [vmem:[%s5 + $0x60] sm:$0xff]
      %v3397 = vld [vmem:[%s5 + $0x68] sm:$0xff]
      %v3398 = vld [vmem:[%s5 + $0x70] sm:$0xff]
      %v3399 = vld [vmem:[%s5 + $0x78] sm:$0xff]
      %v3400 = vld [vmem:[%s5 + $0x80] sm:$0xff]
      %v3401 = vld [vmem:[%s5 + $0x88] sm:$0xff]
      %v3402 = vld [vmem:[%s5 + $0x90] sm:$0xff]
      %v3403 = vld [vmem:[%s5 + $0x98] sm:$0xff]
      %v3404 = vld [vmem:[%s5 + $0xa0] sm:$0xff]
      %v3405 = vld [vmem:[%s5 + $0xa8] sm:$0xff]
      %v3406 = vld [vmem:[%s5 + $0xb0] sm:$0xff]
      %v3407 = vld [vmem:[%s5 + $0xb8] sm:$0xff]
      %v3408 = vld [vmem:[%s5 + $0xc0] sm:$0xff]
      %v3409 = vld [vmem:[%s5 + $0xc8] sm:$0xff]
      %v3410 = vld [vmem:[%s5 + $0xd0] sm:$0xff]
      %v3411 = vld [vmem:[%s5 + $0xd8] sm:$0xff]
      %v3412 = vld [vmem:[%s5 + $0xe0] sm:$0xff]
      %v3413 = vld [vmem:[%s5 + $0xe8] sm:$0xff]
      %v3414 = vld [vmem:[%s5 + $0xf0] sm:$0xff]
      %v3415 = vld [vmem:[%s5 + $0xf8] sm:$0xff]
      %3416 = vmatprep.subr.mxu0 0.0
      %3417 = vmatpush1.msra.mxu0 %v3384
      %3418 = vmatprep.subr.mxu0 0.0
      %3419 = vmatpush1.msra.mxu0 %v3385
      %3420 = vmatprep.subr.mxu0 0.0
      %3421 = vmatpush1.msra.mxu0 %v3386
      %3422 = vmatprep.subr.mxu0 0.0
      %3423 = vmatpush1.msra.mxu0 %v3387
      %3424 = vmatprep.subr.mxu0 0.0
      %3425 = vmatpush1.msra.mxu0 %v3388
      %3426 = vmatprep.subr.mxu0 0.0
      %3427 = vmatpush1.msra.mxu0 %v3389
      %3428 = vmatprep.subr.mxu0 0.0
      %3429 = vmatpush1.msra.mxu0 %v3390
      %3430 = vmatprep.subr.mxu0 0.0
      %3431 = vmatpush1.msra.mxu0 %v3391
      %3432 = vmatprep.subr.mxu0 0.0
      %3433 = vmatpush1.msra.mxu0 %v3392
      %3434 = vmatprep.subr.mxu0 0.0
      %3435 = vmatpush1.msra.mxu0 %v3393
      %3436 = vmatprep.subr.mxu0 0.0
      %3437 = vmatpush1.msra.mxu0 %v3394
      %3438 = vmatprep.subr.mxu0 0.0
      %3439 = vmatpush1.msra.mxu0 %v3395
      %3440 = vmatprep.subr.mxu0 0.0
      %3441 = vmatpush1.msra.mxu0 %v3396
      %3442 = vmatprep.subr.mxu0 0.0
      %3443 = vmatpush1.msra.mxu0 %v3397
      %3444 = vmatprep.subr.mxu0 0.0
      %3445 = vmatpush1.msra.mxu0 %v3398
      %3446 = vmatprep.subr.mxu0 0.0
      %3447 = vmatpush1.msra.mxu0 %v3399
      %3448 = vmatprep.subr.mxu0 0.0
      %3449 = vmatpush1.msra.mxu0 %v3400
      %3450 = vmatprep.subr.mxu0 0.0
      %3451 = vmatpush1.msra.mxu0 %v3401
      %3452 = vmatprep.subr.mxu0 0.0
      %3453 = vmatpush1.msra.mxu0 %v3402
      %3454 = vmatprep.subr.mxu0 0.0
      %3455 = vmatpush1.msra.mxu0 %v3403
      %3456 = vmatprep.subr.mxu0 0.0
      %3457 = vmatpush1.msra.mxu0 %v3404
      %3458 = vmatprep.subr.mxu0 0.0
      %3459 = vmatpush1.msra.mxu0 %v3405
      %3460 = vmatprep.subr.mxu0 0.0
      %3461 = vmatpush1.msra.mxu0 %v3406
      %3462 = vmatprep.subr.mxu0 0.0
      %3463 = vmatpush1.msra.mxu0 %v3407
      %3464 = vmatprep.subr.mxu0 0.0
      %3465 = vmatpush1.msra.mxu0 %v3408
      %3466 = vmatprep.subr.mxu0 0.0
      %3467 = vmatpush1.msra.mxu0 %v3409
      %3468 = vmatprep.subr.mxu0 0.0
      %3469 = vmatpush1.msra.mxu0 %v3410
      %3470 = vmatprep.subr.mxu0 0.0
      %3471 = vmatpush1.msra.mxu0 %v3411
      %3472 = vmatprep.subr.mxu0 0.0
      %3473 = vmatpush1.msra.mxu0 %v3412
      %3474 = vmatprep.subr.mxu0 0.0
      %3475 = vmatpush1.msra.mxu0 %v3413
      %3476 = vmatprep.subr.mxu0 0.0
      %3477 = vmatpush1.msra.mxu0 %v3414
      %3478 = vmatprep.subr.mxu0 0.0
      %3479 = vmatpush1.msra.mxu0 %v3415
      %3480 = vmatprep.mubr.f32.mxu0 %v3380
      %3481 = vmatmul.mubr.f32.gmra.mrb[0].mxu0 %v3378
      %v3482 = vpop.f32.mrb[0].mxu0
      %v3483 = vadd.f32 0.0, %v3482
      %v3484 = vpop.f32.mrb[0].mxu0
      %3485 = vdwg.mxu0
      %v3486 = vld [vmem:[%s6] sm:$0xff]
      %v3487 = vld [vmem:[%s6 + $0x8] sm:$0xff]
      %v3488 = vld [vmem:[%s6 + $0x10] sm:$0xff]
      %v3489 = vld [vmem:[%s6 + $0x18] sm:$0xff]
      %vm3490 = vcmask 130048
      %v3492 = vsel %vm3490, %v3483, 0
      %3494 = vmatprep.subr.mxu0 %v3487
      %3495 = vmatpush1.msra.mxu0 %v3486
      %3496 = vmatprep.subr.mxu0 %v3489
      %3497 = vmatpush1.msra.mxu0 %v3488
      %3498 = vmatprep.subr.mxu0 0.0
      %3499 = vmatpush1.msra.mxu0 0.0
      %3500 = vmatprep.subr.mxu0 0.0
      %3501 = vmatpush1.msra.mxu0 0.0
      %3502 = vmatprep.subr.mxu0 0.0
      %3503 = vmatpush1.msra.mxu0 0.0
      %3504 = vmatprep.subr.mxu0 0.0
      %3505 = vmatpush1.msra.mxu0 0.0
      %3506 = vmatprep.subr.mxu0 0.0
      %3507 = vmatpush1.msra.mxu0 0.0
      %3508 = vmatprep.subr.mxu0 0.0
      %3509 = vmatpush1.msra.mxu0 0.0
      %3510 = vmatprep.subr.mxu0 0.0
      %3511 = vmatpush1.msra.mxu0 0.0
      %3512 = vmatprep.subr.mxu0 0.0
      %3513 = vmatpush1.msra.mxu0 0.0
      %3514 = vmatprep.subr.mxu0 0.0
      %3515 = vmatpush1.msra.mxu0 0.0
      %3516 = vmatprep.subr.mxu0 0.0
      %3517 = vmatpush1.msra.mxu0 0.0
      %3518 = vmatprep.subr.mxu0 0.0
      %3519 = vmatpush1.msra.mxu0 0.0
      %3520 = vmatprep.subr.mxu0 0.0
      %3521 = vmatpush1.msra.mxu0 0.0
      %3522 = vmatprep.subr.mxu0 0.0
      %3523 = vmatpush1.msra.mxu0 0.0
      %3524 = vmatprep.subr.mxu0 0.0
      %3525 = vmatpush1.msra.mxu0 0.0
      %3526 = vmatprep.subr.mxu0 0.0
      %3527 = vmatpush1.msra.mxu0 0.0
      %3528 = vmatprep.subr.mxu0 0.0
      %3529 = vmatpush1.msra.mxu0 0.0
      %3530 = vmatprep.subr.mxu0 0.0
      %3531 = vmatpush1.msra.mxu0 0.0
      %3532 = vmatprep.subr.mxu0 0.0
      %3533 = vmatpush1.msra.mxu0 0.0
      %3534 = vmatprep.subr.mxu0 0.0
      %3535 = vmatpush1.msra.mxu0 0.0
      %3536 = vmatprep.subr.mxu0 0.0
      %3537 = vmatpush1.msra.mxu0 0.0
      %3538 = vmatprep.subr.mxu0 0.0
      %3539 = vmatpush1.msra.mxu0 0.0
      %3540 = vmatprep.subr.mxu0 0.0
      %3541 = vmatpush1.msra.mxu0 0.0
      %3542 = vmatprep.subr.mxu0 0.0
      %3543 = vmatpush1.msra.mxu0 0.0
      %3544 = vmatprep.subr.mxu0 0.0
      %3545 = vmatpush1.msra.mxu0 0.0
      %3546 = vmatprep.subr.mxu0 0.0
      %3547 = vmatpush1.msra.mxu0 0.0
      %3548 = vmatprep.subr.mxu0 0.0
      %3549 = vmatpush1.msra.mxu0 0.0
      %3550 = vmatprep.subr.mxu0 0.0
      %3551 = vmatpush1.msra.mxu0 0.0
      %3552 = vmatprep.subr.mxu0 0.0
      %3553 = vmatpush1.msra.mxu0 0.0
      %3554 = vmatprep.subr.mxu0 0.0
      %3555 = vmatpush1.msra.mxu0 0.0
      %3556 = vmatprep.subr.mxu0 0.0
      %3557 = vmatpush1.msra.mxu0 0.0
      %3558 = vmatprep.mubr.f32.mxu0 0.0
      %3559 = vmatmul.mubr.f32.gmra.mrb[0].mxu0 %v3492
      %v3560 = vpop.f32.mrb[0].mxu0
      %v3561 = vadd.f32 0.0, %v3560
      %v3562 = vpop.f32.mrb[0].mxu0
      %v3563 = vadd.f32 0.0, %v3562
      %3564 = vdwg.mxu0
      %v3565 = vsub.f32 %v3378, %v3561
      %v3566 = vsub.f32 %v3380, %v3563
      %v3567 = vmul.f32 %v3565, %v3565
      %v3568 = vmul.f32 %v3566, %v3566
      %3569 = vmatprep.subr.mxu0 0.0
      %3570 = vmatpush1.msra.mxu0 %v3384
      %3571 = vmatprep.subr.mxu0 0.0
      %3572 = vmatpush1.msra.mxu0 %v3385
      %3573 = vmatprep.subr.mxu0 0.0
      %3574 = vmatpush1.msra.mxu0 %v3386
      %3575 = vmatprep.subr.mxu0 0.0
      %3576 = vmatpush1.msra.mxu0 %v3387
      %3577 = vmatprep.subr.mxu0 0.0
      %3578 = vmatpush1.msra.mxu0 %v3388
      %3579 = vmatprep.subr.mxu0 0.0
      %3580 = vmatpush1.msra.mxu0 %v3389
      %3581 = vmatprep.subr.mxu0 0.0
      %3582 = vmatpush1.msra.mxu0 %v3390
      %3583 = vmatprep.subr.mxu0 0.0
      %3584 = vmatpush1.msra.mxu0 %v3391
      %3585 = vmatprep.subr.mxu0 0.0
      %3586 = vmatpush1.msra.mxu0 %v3392
      %3587 = vmatprep.subr.mxu0 0.0
      %3588 = vmatpush1.msra.mxu0 %v3393
      %3589 = vmatprep.subr.mxu0 0.0
      %3590 = vmatpush1.msra.mxu0 %v3394
      %3591 = vmatprep.subr.mxu0 0.0
      %3592 = vmatpush1.msra.mxu0 %v3395
      %3593 = vmatprep.subr.mxu0 0.0
      %3594 = vmatpush1.msra.mxu0 %v3396
      %3595 = vmatprep.subr.mxu0 0.0
      %3596 = vmatpush1.msra.mxu0 %v3397
      %3597 = vmatprep.subr.mxu0 0.0
      %3598 = vmatpush1.msra.mxu0 %v3398
      %3599 = vmatprep.subr.mxu0 0.0
      %3600 = vmatpush1.msra.mxu0 %v3399
      %3601 = vmatprep.subr.mxu0 0.0
      %3602 = vmatpush1.msra.mxu0 %v3400
      %3603 = vmatprep.subr.mxu0 0.0
      %3604 = vmatpush1.msra.mxu0 %v3401
      %3605 = vmatprep.subr.mxu0 0.0
      %3606 = vmatpush1.msra.mxu0 %v3402
      %3607 = vmatprep.subr.mxu0 0.0
      %3608 = vmatpush1.msra.mxu0 %v3403
      %3609 = vmatprep.subr.mxu0 0.0
      %3610 = vmatpush1.msra.mxu0 %v3404
      %3611 = vmatprep.subr.mxu0 0.0
      %3612 = vmatpush1.msra.mxu0 %v3405
      %3613 = vmatprep.subr.mxu0 0.0
      %3614 = vmatpush1.msra.mxu0 %v3406
      %3615 = vmatprep.subr.mxu0 0.0
      %3616 = vmatpush1.msra.mxu0 %v3407
      %3617 = vmatprep.subr.mxu0 0.0
      %3618 = vmatpush1.msra.mxu0 %v3408
      %3619 = vmatprep.subr.mxu0 0.0
      %3620 = vmatpush1.msra.mxu0 %v3409
      %3621 = vmatprep.subr.mxu0 0.0
      %3622 = vmatpush1.msra.mxu0 %v3410
      %3623 = vmatprep.subr.mxu0 0.0
      %3624 = vmatpush1.msra.mxu0 %v3411
      %3625 = vmatprep.subr.mxu0 0.0
      %3626 = vmatpush1.msra.mxu0 %v3412
      %3627 = vmatprep.subr.mxu0 0.0
      %3628 = vmatpush1.msra.mxu0 %v3413
      %3629 = vmatprep.subr.mxu0 0.0
      %3630 = vmatpush1.msra.mxu0 %v3414
      %3631 = vmatprep.subr.mxu0 0.0
      %3632 = vmatpush1.msra.mxu0 %v3415
      %3633 = vmatprep.mubr.f32.mxu0 %v3568
      %3634 = vmatmul.mubr.f32.gmra.mrb[0].mxu0 %v3567
      %v3635 = vpop.f32.mrb[0].mxu0
      %v3636 = vadd.f32 1e-05, %v3635
      %v3637 = vpop.f32.mrb[0].mxu0
      %3638 = vdwg.mxu0
      %v3639 = vrsqrt.pop %v3636
      %v3641 = vsel %vm3490, %v3639, 0
      %3643 = vmatprep.subr.mxu0 %v3487
      %3644 = vmatpush1.msra.mxu0 %v3486
      %3645 = vmatprep.subr.mxu0 %v3489
      %3646 = vmatpush1.msra.mxu0 %v3488
      %3647 = vmatprep.subr.mxu0 0.0
      %3648 = vmatpush1.msra.mxu0 0.0
      %3649 = vmatprep.subr.mxu0 0.0
      %3650 = vmatpush1.msra.mxu0 0.0
      %3651 = vmatprep.subr.mxu0 0.0
      %3652 = vmatpush1.msra.mxu0 0.0
      %3653 = vmatprep.subr.mxu0 0.0
      %3654 = vmatpush1.msra.mxu0 0.0
      %3655 = vmatprep.subr.mxu0 0.0
      %3656 = vmatpush1.msra.mxu0 0.0
      %3657 = vmatprep.subr.mxu0 0.0
      %3658 = vmatpush1.msra.mxu0 0.0
      %3659 = vmatprep.subr.mxu0 0.0
      %3660 = vmatpush1.msra.mxu0 0.0
      %3661 = vmatprep.subr.mxu0 0.0
      %3662 = vmatpush1.msra.mxu0 0.0
      %3663 = vmatprep.subr.mxu0 0.0
      %3664 = vmatpush1.msra.mxu0 0.0
      %3665 = vmatprep.subr.mxu0 0.0
      %3666 = vmatpush1.msra.mxu0 0.0
      %3667 = vmatprep.subr.mxu0 0.0
      %3668 = vmatpush1.msra.mxu0 0.0
      %3669 = vmatprep.subr.mxu0 0.0
      %3670 = vmatpush1.msra.mxu0 0.0
      %3671 = vmatprep.subr.mxu0 0.0
      %3672 = vmatpush1.msra.mxu0 0.0
      %3673 = vmatprep.subr.mxu0 0.0
      %3674 = vmatpush1.msra.mxu0 0.0
      %3675 = vmatprep.subr.mxu0 0.0
      %3676 = vmatpush1.msra.mxu0 0.0
      %3677 = vmatprep.subr.mxu0 0.0
      %3678 = vmatpush1.msra.mxu0 0.0
      %3679 = vmatprep.subr.mxu0 0.0
      %3680 = vmatpush1.msra.mxu0 0.0
      %3681 = vmatprep.subr.mxu0 0.0
      %3682 = vmatpush1.msra.mxu0 0.0
      %3683 = vmatprep.subr.mxu0 0.0
      %3684 = vmatpush1.msra.mxu0 0.0
      %3685 = vmatprep.subr.mxu0 0.0
      %3686 = vmatpush1.msra.mxu0 0.0
      %3687 = vmatprep.subr.mxu0 0.0
      %3688 = vmatpush1.msra.mxu0 0.0
      %3689 = vmatprep.subr.mxu0 0.0
      %3690 = vmatpush1.msra.mxu0 0.0
      %3691 = vmatprep.subr.mxu0 0.0
      %3692 = vmatpush1.msra.mxu0 0.0
      %3693 = vmatprep.subr.mxu0 0.0
      %3694 = vmatpush1.msra.mxu0 0.0
      %3695 = vmatprep.subr.mxu0 0.0
      %3696 = vmatpush1.msra.mxu0 0.0
      %3697 = vmatprep.subr.mxu0 0.0
      %3698 = vmatpush1.msra.mxu0 0.0
      %3699 = vmatprep.subr.mxu0 0.0
      %3700 = vmatpush1.msra.mxu0 0.0
      %3701 = vmatprep.subr.mxu0 0.0
      %3702 = vmatpush1.msra.mxu0 0.0
      %3703 = vmatprep.subr.mxu0 0.0
      %3704 = vmatpush1.msra.mxu0 0.0
      %3705 = vmatprep.subr.mxu0 0.0
      %3706 = vmatpush1.msra.mxu0 0.0
      %3707 = vmatprep.mubr.f32.mxu0 0.0
      %3708 = vmatmul.mubr.f32.gmra.mrb[0].mxu0 %v3641
      %v3709 = vpop.f32.mrb[0].mxu0
      %v3710 = vadd.f32 0.0, %v3709
      %v3711 = vpop.f32.mrb[0].mxu0
      %v3712 = vadd.f32 0.0, %v3711
      %3713 = vdwg.mxu0
      %v3714 = vmul.f32 %v3565, %v3710
      %v3715 = vmul.f32 %v3566, %v3712
      %vm3716 = vcmp.ge.f32.partialorder %v3714, 0.0
      %vm3717 = vcmp.ge.f32.partialorder %v3715, 0.0
      %v3718 = vmul.f32 %v3714, 0.01
      %v3719 = vmul.f32 %v3715, 0.01
      %v3720 = vsel %vm3716, %v3714, %v3718
      %v3721 = vsel %vm3717, %v3715, %v3719
      %v3722 = vpack.c.bf16 %v3720, %v3720
      %v3723 = vpack.c.bf16 %v3721, %v3721
      %v3724 = vld [vmem:[%s7] sm:$0xf]
      %v3725 = vld [vmem:[%s7 + $0x4] sm:$0xf]
      %v3726 = vld [vmem:[%s7 + $0x8] sm:$0xf]
      %v3727 = vld [vmem:[%s7 + $0xc] sm:$0xf]
      %v3728 = vld [vmem:[%s7 + $0x10] sm:$0xf]
      %v3729 = vld [vmem:[%s7 + $0x14] sm:$0xf]
      %v3730 = vld [vmem:[%s7 + $0x18] sm:$0xf]
      %v3731 = vld [vmem:[%s7 + $0x1c] sm:$0xf]
      %v3732 = vld [vmem:[%s7 + $0x20] sm:$0xf]
      %v3733 = vld [vmem:[%s7 + $0x24] sm:$0xf]
      %v3734 = vld [vmem:[%s7 + $0x28] sm:$0xf]
      %v3735 = vld [vmem:[%s7 + $0x2c] sm:$0xf]
      %v3736 = vld [vmem:[%s7 + $0x30] sm:$0xf]
      %v3737 = vld [vmem:[%s7 + $0x34] sm:$0xf]
      %v3738 = vld [vmem:[%s7 + $0x38] sm:$0xf]
      %v3739 = vld [vmem:[%s7 + $0x3c] sm:$0xf]
      %v3740 = vld [vmem:[%s7 + $0x40] sm:$0xf]
      %v3741 = vld [vmem:[%s7 + $0x44] sm:$0xf]
      %v3742 = vld [vmem:[%s7 + $0x48] sm:$0xf]
      %v3743 = vld [vmem:[%s7 + $0x4c] sm:$0xf]
      %v3744 = vld [vmem:[%s7 + $0x50] sm:$0xf]
      %v3745 = vld [vmem:[%s7 + $0x54] sm:$0xf]
      %v3746 = vld [vmem:[%s7 + $0x58] sm:$0xf]
      %v3747 = vld [vmem:[%s7 + $0x5c] sm:$0xf]
      %v3748 = vld [vmem:[%s7 + $0x60] sm:$0xf]
      %v3749 = vld [vmem:[%s7 + $0x64] sm:$0xf]
      %v3750 = vld [vmem:[%s7 + $0x68] sm:$0xf]
      %v3751 = vld [vmem:[%s7 + $0x6c] sm:$0xf]
      %v3752 = vld [vmem:[%s7 + $0x70] sm:$0xf]
      %v3753 = vld [vmem:[%s7 + $0x74] sm:$0xf]
      %v3754 = vld [vmem:[%s7 + $0x78] sm:$0xf]
      %v3755 = vld [vmem:[%s7 + $0x7c] sm:$0xf]
      %v3756 = vld [vmem:[%s8] sm:$0x1]
      %v3789 = vunpack.c.l.b16 %v3724
      %v3790 = vunpack.c.l.b16 %v3725
      %v3791 = vunpack.c.l.b16 %v3726
      %v3792 = vunpack.c.l.b16 %v3727
      %v3793 = vunpack.c.l.b16 %v3728
      %v3794 = vunpack.c.l.b16 %v3729
      %v3795 = vunpack.c.l.b16 %v3730
      %v3796 = vunpack.c.l.b16 %v3731
      %v3797 = vunpack.c.l.b16 %v3732
      %v3798 = vunpack.c.l.b16 %v3733
      %v3799 = vunpack.c.l.b16 %v3734
      %v3800 = vunpack.c.l.b16 %v3735
      %v3801 = vunpack.c.l.b16 %v3736
      %v3802 = vunpack.c.l.b16 %v3737
      %v3803 = vunpack.c.l.b16 %v3738
      %v3804 = vunpack.c.l.b16 %v3739
      %v3805 = vunpack.c.l.b16 %v3740
      %v3806 = vunpack.c.l.b16 %v3741
      %v3807 = vunpack.c.l.b16 %v3742
      %v3808 = vunpack.c.l.b16 %v3743
      %v3809 = vunpack.c.l.b16 %v3744
      %v3810 = vunpack.c.l.b16 %v3745
      %v3811 = vunpack.c.l.b16 %v3746
      %v3812 = vunpack.c.l.b16 %v3747
      %v3813 = vunpack.c.l.b16 %v3748
      %v3814 = vunpack.c.l.b16 %v3749
      %v3815 = vunpack.c.l.b16 %v3750
      %v3816 = vunpack.c.l.b16 %v3751
      %v3817 = vunpack.c.l.b16 %v3752
      %v3818 = vunpack.c.l.b16 %v3753
      %v3819 = vunpack.c.l.b16 %v3754
      %v3820 = vunpack.c.l.b16 %v3755
      %v3821 = vpack.c.b16 %v3790, %v3789
      %v3822 = vpack.c.b16 %v3792, %v3791
      %v3823 = vpack.c.b16 %v3794, %v3793
      %v3824 = vpack.c.b16 %v3796, %v3795
      %v3825 = vpack.c.b16 %v3798, %v3797
      %v3826 = vpack.c.b16 %v3800, %v3799
      %v3827 = vpack.c.b16 %v3802, %v3801
      %v3828 = vpack.c.b16 %v3804, %v3803
      %v3829 = vpack.c.b16 %v3806, %v3805
      %v3830 = vpack.c.b16 %v3808, %v3807
      %v3831 = vpack.c.b16 %v3810, %v3809
      %v3832 = vpack.c.b16 %v3812, %v3811
      %v3833 = vpack.c.b16 %v3814, %v3813
      %v3834 = vpack.c.b16 %v3816, %v3815
      %v3835 = vpack.c.b16 %v3818, %v3817
      %v3836 = vpack.c.b16 %v3820, %v3819
      %3853 = vmatprep.subr.bf16.mxu0 0
      %3854 = vmatpush1.bf16.msra.mxu0 %v3821
      %3855 = vmatprep.subr.bf16.mxu0 0
      %3856 = vmatpush1.bf16.msra.mxu0 %v3822
      %3857 = vmatprep.subr.bf16.mxu0 0
      %3858 = vmatpush1.bf16.msra.mxu0 %v3823
      %3859 = vmatprep.subr.bf16.mxu0 0
      %3860 = vmatpush1.bf16.msra.mxu0 %v3824
      %3861 = vmatprep.subr.bf16.mxu0 0
      %3862 = vmatpush1.bf16.msra.mxu0 %v3825
      %3863 = vmatprep.subr.bf16.mxu0 0
      %3864 = vmatpush1.bf16.msra.mxu0 %v3826
      %3865 = vmatprep.subr.bf16.mxu0 0
      %3866 = vmatpush1.bf16.msra.mxu0 %v3827
      %3867 = vmatprep.subr.bf16.mxu0 0
      %3868 = vmatpush1.bf16.msra.mxu0 %v3828
      %3869 = vmatprep.subr.bf16.mxu0 0
      %3870 = vmatpush1.bf16.msra.mxu0 %v3829
      %3871 = vmatprep.subr.bf16.mxu0 0
      %3872 = vmatpush1.bf16.msra.mxu0 %v3830
      %3873 = vmatprep.subr.bf16.mxu0 0
      %3874 = vmatpush1.bf16.msra.mxu0 %v3831
      %3875 = vmatprep.subr.bf16.mxu0 0
      %3876 = vmatpush1.bf16.msra.mxu0 %v3832
      %3877 = vmatprep.subr.bf16.mxu0 0
      %3878 = vmatpush1.bf16.msra.mxu0 %v3833
      %3879 = vmatprep.subr.bf16.mxu0 0
      %3880 = vmatpush1.bf16.msra.mxu0 %v3834
      %3881 = vmatprep.subr.bf16.mxu0 0
      %3882 = vmatpush1.bf16.msra.mxu0 %v3835
      %3883 = vmatprep.subr.bf16.mxu0 0
      %3884 = vmatpush1.bf16.msra.mxu0 %v3836
      %3885 = vmatprep.mubr.bf16.mxu0 %v3723
      %3886 = vmatmul.mubr.bf16.gmra.mrb[0].mxu0 %v3722
      %v3887 = vpop.f32.mrb[0].mxu0
      %v3888 = vadd.f32 %v3756, %v3887
      %v3889 = vpop.f32.mrb[0].mxu0
      %v3890 = vpop.f32.mrb[0].mxu0
      %v3891 = vpop.f32.mrb[0].mxu0
      %3892 = vdwg.mxu0
      %v3893 = vmax.f32 %v3888, 0.0
      %vm3894 = vcmask 253952
      %v3895 = vsel %vm3894, %v3893, 0.0
      %3896 = vadd.xlane.f32.xlu0 %v3895
      %v3897 = vpop.xlane.xlu0 %3896
      %v3898 = vrcp.pop 32.0
      %v3899 = vmul.f32 %v3897, %v3898
      %vm3900 = vcmask 0
      %3901 = vst.msk [vmem:[%s325] sm:$0x1] %vm3900, %v3899
      %p3902 = scmp.lt.s32.totalorder %s20, 1
      %s3903 = scalar_select %p3902, %s20, 1
      %s3904 = scalar_lea.vmem %s9, %s3903
      // Predicated region
      $region57: #{_lambda_.1} parent=55 // pred_check
        %p3905 = pneg %p232
      $region58: #{_lambda_.1} parent=55 // pred_check_branch
        %3907 = sbr.rel (%p3905) target = $region60
      $region59: #{_lambda_.1} parent=55 // pred_region
        _
      $region60: #{_lambda_.1} parent=55 // pred_fallthru
        _
    $region56: #{_lambda_.1} parent=5 // pred_fallthru
      _
    %p3908 = scmp.le.s32.totalorder 2, %s15
    // Predicated region
    $region61: #{_lambda_.1} parent=5 // pred_check
      %p3909 = pneg %p3908
    $region62: #{_lambda_.1} parent=5 // pred_check_branch
      %3911 = sbr.rel (%p3909) target = $region64
    $region63: #{_lambda_.1} parent=5 // pred_region
      %s3912 = ssub.s32 %s15, 2
      // Predicated region
      $region65: #{_lambda_.1} parent=63 // pred_check
        %p3913 = pneg %p238
      $region66: #{_lambda_.1} parent=63 // pred_check_branch
        %3915 = sbr.rel (%p3913) target = $region68
      $region67: #{_lambda_.1} parent=63 // pred_region
        %p3916 = scmp.lt.s32.totalorder %s21, 1
        %s3917 = scalar_select %p3916, %s21, 1
        %s3918 = scalar_lea.vmem %s9, %s3917
      $region68: #{_lambda_.1} parent=63 // pred_fallthru
        _
    $region64: #{_lambda_.1} parent=5 // pred_fallthru
      _
  $region6: #{_lambda_.1} parent=0 // loop_footer
    %s19 = sadd.s32 1, %s15
  $region7: #{_lambda_.1} parent=0 // loop_footer_branch
    %14 = sbr.rel target = $region3
  $region8: #{_lambda_.1} parent=0 // loop_exit
    _

</llo_original>
